<compile_context>
chip_gen: v5e
topology: v5e:2x2
jax: 0.10.0
libtpu: 0.0.40
codegen_flags: <defaults>
</compile_context>

<pallas_src>
import functools

import jax
import jax.numpy as jnp
from jax.experimental import pallas as pl
from jax.experimental.pallas import tpu as pltpu


def _hetero_conv_kernel(ecnt_ref, aidx_ref,                    # scalar prefetch (SMEM): [R] i32 each
                        adj_ref, x_ref, wm_ref, bm_ref,        # relation conv ("mods") operands
                        w1_ref, b1_ref, w2_ref,                # attention head params
                        out_ref, attn_ref,                     # outputs
                        xw_sc, m_sc, l_sc, acc_sc, sco_sc):    # VMEM scratch
    """grid = (Nd tiles, relations). Per relation: conv + score, folded into an online softmax."""
    r = pl.program_id(1)
    num_rel = pl.num_programs(1)
    dv = acc_sc.shape[-1]

    @pl.when(r == 0)
    def _init():
        m_sc[...] = jnp.full(m_sc.shape, -jnp.inf, m_sc.dtype)
        l_sc[...] = jnp.zeros_like(l_sc)
        acc_sc[...] = jnp.zeros_like(acc_sc)
        # Batched X @ Wm across ALL relations: one (Ns, F_in) x (F_in, R*Dv) matmul keeps the
        # 256-wide MXU dense on v6e/v7x and amortizes a single f32->bf16 cast.
        # (Recomputed once per Nd tile so it stays correct when the Nd axis is sharded across cores.)
        xw_sc[...] = jnp.dot(x_ref[...], wm_ref[...],
                             preferred_element_type=jnp.float32).astype(jnp.bfloat16)

    has_edges = ecnt_ref[r] > 0

    @pl.when(has_edges)
    def _compute():
        # GraphConv-style "mod", reassociated:  dst = A_norm @ (X @ Wm) + bm
        xw_r = xw_sc[:, pl.ds(pl.multiple_of(r * dv, dv), dv)]                    # (Ns, Dv) bf16
        d = jnp.dot(adj_ref[...], xw_r,
                    preferred_element_type=jnp.float32) + bm_ref[r]               # (T_nd, Dv) f32
        # attention score head: Linear(Dv, Dq) -> Tanh -> Linear(Dq, 1, bias=False)
        q = jnp.tanh(jnp.dot(d.astype(jnp.bfloat16), w1_ref[r],
                             preferred_element_type=jnp.float32) + b1_ref[r])     # (T_nd, Dq) f32
        # N=1 "matmul" on the VPU + XLU lane reduce instead of wasting an MXU push/drain.
        s = jnp.sum(q * w2_ref[r], axis=-1, keepdims=True)                        # (T_nd, 1) f32

        # Online softmax update over the relation axis.
        m_new = jnp.maximum(m_sc[...], s)
        alpha = jnp.exp(m_sc[...] - m_new)
        p = jnp.exp(s - m_new)
        l_sc[...] = alpha * l_sc[...] + p
        acc_sc[...] = alpha * acc_sc[...] + p * d
        m_sc[...] = m_new
        sco_sc[r] = s

    @pl.when(jnp.logical_not(has_edges))
    def _empty():
        # Zero-edge relation contributes dstdata = 0 and score = 0 (matches the module), but it
        # still participates in the relation softmax -> fold s = 0, d = 0 into the running state.
        m_new = jnp.maximum(m_sc[...], 0.0)
        alpha = jnp.exp(m_sc[...] - m_new)
        p = jnp.exp(0.0 - m_new)
        l_sc[...] = alpha * l_sc[...] + p
        acc_sc[...] = alpha * acc_sc[...]
        m_sc[...] = m_new
        sco_sc[r] = jnp.zeros(sco_sc.shape[1:], sco_sc.dtype)

    @pl.when(r == num_rel - 1)
    def _finalize():
        # Exact divide: attn is a user-visible output, its rows must sum to 1.
        inv_l = 1.0 / l_sc[...]                                                   # (T_nd, 1)
        out_ref[...] = (acc_sc[...] * inv_l).astype(out_ref.dtype)                # (T_nd, Dv)
        attn_ref[...] = jnp.exp(sco_sc[...] - m_sc[...][None]) * inv_l[None]      # (R, T_nd, 1)


def _prev_nonempty_map(edge_counts):
    """Adjacency-fetch remap: empty relations repeat the previous non-empty relation's block
    index, so consecutive identical block indices let Pallas elide their adjacency DMA."""
    ids = jnp.arange(edge_counts.shape[0], dtype=jnp.int32)

    def body(carry, xs):
        i, nonempty = xs
        new = jnp.where(nonempty, i, carry)
        return new, new

    _, filled = jax.lax.scan(body, jnp.int32(0), (ids, edge_counts > 0))
    return filled


def _vmem_limit_bytes(R, t_nd, Ns, F_in, Dv, Dq):
    """Rough scoped-VMEM budget for the chosen tile sizes (2x margin, 8 MiB floor, 100 MiB cap)."""
    bf16, f32, lane = 2, 4, 128
    adj_io = 2 * t_nd * Ns * bf16                                        # double-buffered adj tile
    resident = 2 * (Ns * F_in * bf16 + F_in * R * Dv * bf16              # x, Wm_all
                    + R * max(Dv, lane) * f32 + R * Dv * Dq * bf16       # bm, W1
                    + 2 * R * max(Dq, lane) * f32)                       # b1, W2
    outs = 2 * (t_nd * Dv * f32 + R * t_nd * lane * f32)
    scratch = (Ns * R * Dv * bf16 + 2 * t_nd * lane * f32
               + t_nd * Dv * f32 + R * t_nd * lane * f32)
    total = adj_io + resident + outs + scratch
    return int(min(100 * 2 ** 20, max(8 * 2 ** 20, 2 * total)))


@functools.partial(jax.jit, static_argnames=("nd_tile",))
def hetero_graph_conv(adj, edge_counts, x, wm, bm, w1, b1, w2, *, nd_tile=None):
    """adj: [R, N_dst, N_src] (row-normalized), x: [N_src, F_in].
    Returns (out_embs [N_dst, Dv], attn [R, N_dst, 1]) — matching the PyTorch forward."""
    R, Nd, Ns = adj.shape
    F_in = x.shape[1]
    Dv = wm.shape[2]
    Dq = w1.shape[2]

    if nd_tile is None:
        nd_tile = Nd if Nd <= 256 else 256        # per-generation tuning knob (smaller on v7x)
    assert Nd % nd_tile == 0, "N_dst must be a multiple of the Nd tile size"
    num_nd_tiles = Nd // nd_tile

    # bf16 operands for the MXU (accumulation stays f32 in-kernel); biases / VPU operands stay f32.
    adj_b = adj.astype(jnp.bfloat16)
    x_b = x.astype(jnp.bfloat16)
    wm_all = jnp.transpose(wm, (1, 0, 2)).reshape(F_in, R * Dv).astype(jnp.bfloat16)
    w1_b = w1.astype(jnp.bfloat16)
    w2_t = jnp.transpose(w2, (0, 2, 1))           # (R, 1, Dq) f32 — broadcast row for the VPU score

    ecnt = edge_counts.astype(jnp.int32)
    adj_idx = _prev_nonempty_map(ecnt)            # DMA-elision remap for empty relations

    out_embs, attn = pl.pallas_call(
        _hetero_conv_kernel,
        out_shape=(
            jax.ShapeDtypeStruct((Nd, Dv), jnp.float32),
            jax.ShapeDtypeStruct((R, Nd, 1), jnp.float32),
        ),
        grid_spec=pltpu.PrefetchScalarGridSpec(
            num_scalar_prefetch=2,
            grid=(num_nd_tiles, R),
            in_specs=[
                # adjacency: one (T_nd, Ns) strip per step; empty relations repeat the previous
                # non-empty block index so their DMA is elided.
                pl.BlockSpec((pl.Squeezed(), nd_tile, Ns),
                             lambda i, r, ec, ai: (ai[r], i, 0)),
                # node features + all per-relation weights: single resident blocks (constant index)
                pl.BlockSpec((Ns, F_in), lambda i, r, ec, ai: (0, 0)),
                pl.BlockSpec((F_in, R * Dv), lambda i, r, ec, ai: (0, 0)),
                pl.BlockSpec((R, 1, Dv), lambda i, r, ec, ai: (0, 0, 0)),
                pl.BlockSpec((R, Dv, Dq), lambda i, r, ec, ai: (0, 0, 0)),
                pl.BlockSpec((R, 1, Dq), lambda i, r, ec, ai: (0, 0, 0)),
                pl.BlockSpec((R, 1, Dq), lambda i, r, ec, ai: (0, 0, 0)),
            ],
            out_specs=[
                # outputs revisited across the relation axis; written once at r == R-1
                pl.BlockSpec((nd_tile, Dv), lambda i, r, ec, ai: (i, 0)),
                pl.BlockSpec((R, nd_tile, 1), lambda i, r, ec, ai: (0, i, 0)),
            ],
            scratch_shapes=[
                pltpu.VMEM((Ns, R * Dv), jnp.bfloat16),    # batched X @ Wm (all relations)
                pltpu.VMEM((nd_tile, 1), jnp.float32),     # online-softmax running max
                pltpu.VMEM((nd_tile, 1), jnp.float32),     # online-softmax running denom
                pltpu.VMEM((nd_tile, Dv), jnp.float32),    # attention-weighted accumulator
                pltpu.VMEM((R, nd_tile, 1), jnp.float32),  # per-relation scores (for attn output)
            ],
        ),
        compiler_params=pltpu.CompilerParams(
            # Nd tiles are independent ("parallel", shardable across v7x's 2 TensorCores);
            # the relation axis carries the online-softmax state -> "arbitrary".
            dimension_semantics=("parallel", "arbitrary"),
            vmem_limit_bytes=_vmem_limit_bytes(R, nd_tile, Ns, F_in, Dv, Dq),
        ),
    )(ecnt, adj_idx, adj_b, x_b, wm_all, bm, w1_b, b1, w2_t)
    return out_embs, attn


def _reference(adj, edge_counts, x, wm, bm, w1, b1, w2):
    """Pure-JAX reference replicating the PyTorch forward (agg_type='attn') with the same
    bf16-in / f32-accumulate matmul precision and f32 VPU score math the kernel uses."""
    adj_b = adj.astype(jnp.bfloat16)
    x_b = x.astype(jnp.bfloat16)
    wm_b = wm.astype(jnp.bfloat16)
    w1_b = w1.astype(jnp.bfloat16)

    mask = (edge_counts > 0).astype(jnp.float32)[:, None, None]
    xw = jnp.einsum("sf,rfv->rsv", x_b, wm_b,
                    preferred_element_type=jnp.float32).astype(jnp.bfloat16)
    d = jnp.einsum("rds,rsv->rdv", adj_b, xw, preferred_element_type=jnp.float32) + bm
    d = d * mask
    q = jnp.tanh(jnp.einsum("rdv,rvq->rdq", d.astype(jnp.bfloat16), w1_b,
                            preferred_element_type=jnp.float32) + b1)
    s = jnp.sum(q * jnp.transpose(w2, (0, 2, 1)), axis=-1, keepdims=True)   # f32, matches kernel
    s = s * mask
    attn = jax.nn.softmax(s, axis=0)
    return jnp.sum(attn * d, axis=0), attn


if __name__ == "__main__":
    R, N_src, N_dst = 3, 128, 128       # 3 canonical edge types
    # Feature dims chosen as multiples of 128 so MXU / lane utilization is dense.
    F_in, Dv, Dq = 128, 128, 128        # src feat dim, dim_values, dim_query

    key = jax.random.PRNGKey(0)
    k_adj, k_x, k_wm, k_bm, k_w1, k_b1, k_w2 = jax.random.split(key, 7)

    # Dense per-relation adjacency; relation 2 has zero edges (exercises the zero-edge branch
    # and the adjacency-DMA elision remap).
    adj_raw = (jax.random.uniform(k_adj, (R, N_dst, N_src)) < 0.3).astype(jnp.float32)
    adj_raw = adj_raw.at[2].set(0.0)
    edge_counts = jnp.sum(adj_raw, axis=(1, 2)).astype(jnp.int32)          # [R]
    deg = jnp.sum(adj_raw, axis=-1, keepdims=True)
    adj = adj_raw / jnp.maximum(deg, 1.0)                                  # mean aggregation

    x = jax.random.normal(k_x, (N_src, F_in), jnp.float32)

    # Deterministic parameter init (shapes per module __init__).
    wm = 0.1 * jax.random.normal(k_wm, (R, F_in, Dv), jnp.float32)   # per-etype "mod" weight
    bm = 0.1 * jax.random.normal(k_bm, (R, 1, Dv), jnp.float32)      # per-etype "mod" bias
    w1 = 0.1 * jax.random.normal(k_w1, (R, Dv, Dq), jnp.float32)     # attention Linear(Dv, Dq)
    b1 = 0.1 * jax.random.normal(k_b1, (R, 1, Dq), jnp.float32)
    w2 = 0.1 * jax.random.normal(k_w2, (R, Dq, 1), jnp.float32)      # attention Linear(Dq, 1, no bias)

    out_embs, attn = hetero_graph_conv(adj, edge_counts, x, wm, bm, w1, b1, w2)
    jax.block_until_ready((out_embs, attn))

    ref_out, ref_attn = _reference(adj, edge_counts, x, wm, bm, w1, b1, w2)
    assert out_embs.shape == (N_dst, Dv) and attn.shape == (R, N_dst, 1)
    # Tolerance covers tanh/exp implementation differences and accumulation-order differences;
    # matmul rounding is shared since both paths use identical bf16 operands with f32 accumulation,
    # and the softmax denominator is now an exact divide.
    assert jnp.allclose(out_embs, ref_out, atol=5e-3, rtol=5e-3), \
        float(jnp.max(jnp.abs(out_embs - ref_out)))
    assert jnp.allclose(attn, ref_attn, atol=5e-3, rtol=5e-3), \
        float(jnp.max(jnp.abs(attn - ref_attn)))

    print("KERNEL_OK")
</pallas_src>

<mosaic_0001>
module attributes {stable_mosaic.version = 11 : i64} {
  func.func @_hetero_conv_kernel(%arg0: i32, %arg1: i32, %arg2: memref<3xi32, #tpu.memory_space<smem>>, %arg3: memref<3xi32, #tpu.memory_space<smem>>, %arg4: memref<1x128x128xbf16, #tpu.memory_space<vmem>>, %arg5: memref<128x128xbf16, #tpu.memory_space<vmem>>, %arg6: memref<128x384xbf16, #tpu.memory_space<vmem>>, %arg7: memref<3x1x128xf32, #tpu.memory_space<vmem>>, %arg8: memref<3x128x128xbf16, #tpu.memory_space<vmem>>, %arg9: memref<3x1x128xf32, #tpu.memory_space<vmem>>, %arg10: memref<3x1x128xf32, #tpu.memory_space<vmem>>, %arg11: memref<128x128xf32, #tpu.memory_space<vmem>>, %arg12: memref<3x128x1xf32, #tpu.memory_space<vmem>>, %arg13: memref<128x384xbf16, #tpu.memory_space<vmem>>, %arg14: memref<128x1xf32, #tpu.memory_space<vmem>>, %arg15: memref<128x1xf32, #tpu.memory_space<vmem>>, %arg16: memref<128x128xf32, #tpu.memory_space<vmem>>, %arg17: memref<3x128x1xf32, #tpu.memory_space<vmem>>) attributes {dimension_semantics = [#tpu.dimension_semantics<parallel>, #tpu.dimension_semantics<arbitrary>], iteration_bounds = array<i64: 1, 3>, scalar_prefetch = 2 : i64, scratch_operands = 5 : i64, tpu.core_type = #tpu.core_type<tc>, window_params = [{transform_indices = @transform_0, window_bounds = array<i64: 1, 128, 128>}, {pipeline_mode = #tpu.pipeline_mode<synchronous>, transform_indices = @transform_1, window_bounds = array<i64: 128, 128>}, {pipeline_mode = #tpu.pipeline_mode<synchronous>, transform_indices = @transform_2, window_bounds = array<i64: 128, 384>}, {pipeline_mode = #tpu.pipeline_mode<synchronous>, transform_indices = @transform_3, window_bounds = array<i64: 3, 1, 128>}, {pipeline_mode = #tpu.pipeline_mode<synchronous>, transform_indices = @transform_4, window_bounds = array<i64: 3, 128, 128>}, {pipeline_mode = #tpu.pipeline_mode<synchronous>, transform_indices = @transform_5, window_bounds = array<i64: 3, 1, 128>}, {pipeline_mode = #tpu.pipeline_mode<synchronous>, transform_indices = @transform_6, window_bounds = array<i64: 3, 1, 128>}, {transform_indices = @transform_7, window_bounds = array<i64: 128, 128>}, {transform_indices = @transform_8, window_bounds = array<i64: 3, 128, 1>}]} {
    %c0_i32 = arith.constant 0 : i32
    %0 = arith.cmpi eq, %arg1, %c0_i32 : i32
    %1 = arith.extui %0 : i1 to i32
    %c0_i32_0 = arith.constant 0 : i32
    %2 = arith.cmpi ne, %1, %c0_i32_0 : i32
    scf.if %2 {
      %cst = arith.constant 0xFF800000 : f32
      %14 = vector.broadcast %cst : f32 to vector<128x1xf32>
      %c0 = arith.constant 0 : index
      %c0_5 = arith.constant 0 : index
      %15 = vector.load %arg14[%c0, %c0_5] : memref<128x1xf32, #tpu.memory_space<vmem>>, vector<128x1xf32>
      tpu.vector_store %arg14[%c0, %c0_5], %14 {strides = array<i32>} : memref<128x1xf32, #tpu.memory_space<vmem>>, vector<128x1xf32>,
      %cst_6 = arith.constant 0.000000e+00 : f32
      %16 = vector.broadcast %cst_6 : f32 to vector<128x1xf32>
      %c0_7 = arith.constant 0 : index
      %c0_8 = arith.constant 0 : index
      %17 = vector.load %arg15[%c0_7, %c0_8] : memref<128x1xf32, #tpu.memory_space<vmem>>, vector<128x1xf32>
      tpu.vector_store %arg15[%c0_7, %c0_8], %16 {strides = array<i32>} : memref<128x1xf32, #tpu.memory_space<vmem>>, vector<128x1xf32>,
      %cst_9 = arith.constant 0.000000e+00 : f32
      %18 = vector.broadcast %cst_9 : f32 to vector<128x128xf32>
      %c0_10 = arith.constant 0 : index
      %c0_11 = arith.constant 0 : index
      %19 = vector.load %arg16[%c0_10, %c0_11] : memref<128x128xf32, #tpu.memory_space<vmem>>, vector<128x128xf32>
      tpu.vector_store %arg16[%c0_10, %c0_11], %18 {strides = array<i32>} : memref<128x128xf32, #tpu.memory_space<vmem>>, vector<128x128xf32>,
      %c0_12 = arith.constant 0 : index
      %c0_13 = arith.constant 0 : index
      %20 = vector.load %arg5[%c0_12, %c0_13] : memref<128x128xbf16, #tpu.memory_space<vmem>>, vector<128x128xbf16>
      %c0_14 = arith.constant 0 : index
      %c0_15 = arith.constant 0 : index
      %21 = vector.load %arg6[%c0_14, %c0_15] : memref<128x384xbf16, #tpu.memory_space<vmem>>, vector<128x384xbf16>
      %cst_16 = arith.constant dense<0.000000e+00> : vector<128x384xf32>
      %22 = tpu.matmul %20, %21, %cst_16 {dimension_numbers = #tpu.dot_dimension_numbers<[1], [0], [0], [1], [0, 0, 1, 1], [], []>} : vector<128x128xbf16>, vector<128x384xbf16>, vector<128x384xf32> -> vector<128x384xf32>
      %23 = arith.truncf %22 : vector<128x384xf32> to vector<128x384xbf16>
      %c0_17 = arith.constant 0 : index
      %c0_18 = arith.constant 0 : index
      %24 = vector.load %arg13[%c0_17, %c0_18] : memref<128x384xbf16, #tpu.memory_space<vmem>>, vector<128x384xbf16>
      tpu.vector_store %arg13[%c0_17, %c0_18], %23 {strides = array<i32>} : memref<128x384xbf16, #tpu.memory_space<vmem>>, vector<128x384xbf16>,
    } else {
    }
    %3 = arith.index_cast %arg1 : i32 to index
    %4 = memref.load %arg2[%3] : memref<3xi32, #tpu.memory_space<smem>>
    %c0_i32_1 = arith.constant 0 : i32
    %5 = arith.cmpi sgt, %4, %c0_i32_1 : i32
    %6 = arith.extui %5 : i1 to i32
    %c0_i32_2 = arith.constant 0 : i32
    %7 = arith.cmpi ne, %6, %c0_i32_2 : i32
    scf.if %7 {
      %c128_i32 = arith.constant 128 : i32
      %14 = arith.muli %arg1, %c128_i32 : i32
      %15 = tpu.assume_multiple %14, 128 : i32
      %c0 = arith.constant 0 : index
      %16 = arith.index_cast %15 : i32 to index
      %17 = vector.load %arg13[%c0, %16] : memref<128x384xbf16, #tpu.memory_space<vmem>>, vector<128x128xbf16>
      %c0_5 = arith.constant 0 : index
      %c0_6 = arith.constant 0 : index
      %c0_7 = arith.constant 0 : index
      %18 = vector.load %arg4[%c0_5, %c0_6, %c0_7] : memref<1x128x128xbf16, #tpu.memory_space<vmem>>, vector<1x128x128xbf16>
      %19 = vector.shape_cast %18 : vector<1x128x128xbf16> to vector<128x128xbf16>
      %cst = arith.constant dense<0.000000e+00> : vector<128x128xf32>
      %20 = tpu.matmul %19, %17, %cst {dimension_numbers = #tpu.dot_dimension_numbers<[1], [0], [0], [1], [0, 0, 1, 1], [], []>} : vector<128x128xbf16>, vector<128x128xbf16>, vector<128x128xf32> -> vector<128x128xf32>
      %21 = arith.index_cast %arg1 : i32 to index
      %c0_8 = arith.constant 0 : index
      %c0_9 = arith.constant 0 : index
      %22 = vector.load %arg7[%21, %c0_8, %c0_9] : memref<3x1x128xf32, #tpu.memory_space<vmem>>, vector<1x1x128xf32>
      %23 = vector.shape_cast %22 : vector<1x1x128xf32> to vector<1x128xf32>
      %24 = vector.broadcast %23 : vector<1x128xf32> to vector<128x128xf32>
      %25 = arith.addf %20, %24 : vector<128x128xf32>
      %26 = arith.truncf %25 : vector<128x128xf32> to vector<128x128xbf16>
      %27 = arith.index_cast %arg1 : i32 to index
      %c0_10 = arith.constant 0 : index
      %c0_11 = arith.constant 0 : index
      %28 = vector.load %arg8[%27, %c0_10, %c0_11] : memref<3x128x128xbf16, #tpu.memory_space<vmem>>, vector<1x128x128xbf16>
      %29 = vector.shape_cast %28 : vector<1x128x128xbf16> to vector<128x128xbf16>
      %cst_12 = arith.constant dense<0.000000e+00> : vector<128x128xf32>
      %30 = tpu.matmul %26, %29, %cst_12 {dimension_numbers = #tpu.dot_dimension_numbers<[1], [0], [0], [1], [0, 0, 1, 1], [], []>} : vector<128x128xbf16>, vector<128x128xbf16>, vector<128x128xf32> -> vector<128x128xf32>
      %31 = arith.index_cast %arg1 : i32 to index
      %c0_13 = arith.constant 0 : index
      %c0_14 = arith.constant 0 : index
      %32 = vector.load %arg9[%31, %c0_13, %c0_14] : memref<3x1x128xf32, #tpu.memory_space<vmem>>, vector<1x1x128xf32>
      %33 = vector.shape_cast %32 : vector<1x1x128xf32> to vector<1x128xf32>
      %34 = vector.broadcast %33 : vector<1x128xf32> to vector<128x128xf32>
      %35 = arith.addf %30, %34 : vector<128x128xf32>
      %36 = math.tanh %35 : vector<128x128xf32>
      %37 = arith.index_cast %arg1 : i32 to index
      %c0_15 = arith.constant 0 : index
      %c0_16 = arith.constant 0 : index
      %38 = vector.load %arg10[%37, %c0_15, %c0_16] : memref<3x1x128xf32, #tpu.memory_space<vmem>>, vector<1x1x128xf32>
      %39 = vector.shape_cast %38 : vector<1x1x128xf32> to vector<1x128xf32>
      %40 = vector.broadcast %39 : vector<1x128xf32> to vector<128x128xf32>
      %41 = arith.mulf %36, %40 : vector<128x128xf32>
      %cst_17 = arith.constant dense<0.000000e+00> : vector<128xf32>
      %42 = vector.multi_reduction <add>, %41, %cst_17 [1] : vector<128x128xf32> to vector<128xf32>
      %43 = vector.shape_cast %42 : vector<128xf32> to vector<128x1xf32>
      %c0_18 = arith.constant 0 : index
      %c0_19 = arith.constant 0 : index
      %44 = vector.load %arg14[%c0_18, %c0_19] : memref<128x1xf32, #tpu.memory_space<vmem>>, vector<128x1xf32>
      %45 = arith.maximumf %44, %43 : vector<128x1xf32>
      %c0_20 = arith.constant 0 : index
      %c0_21 = arith.constant 0 : index
      %46 = vector.load %arg14[%c0_20, %c0_21] : memref<128x1xf32, #tpu.memory_space<vmem>>, vector<128x1xf32>
      %47 = arith.subf %46, %45 : vector<128x1xf32>
      %48 = math.exp %47 : vector<128x1xf32>
      %49 = arith.subf %43, %45 : vector<128x1xf32>
      %50 = math.exp %49 : vector<128x1xf32>
      %c0_22 = arith.constant 0 : index
      %c0_23 = arith.constant 0 : index
      %51 = vector.load %arg15[%c0_22, %c0_23] : memref<128x1xf32, #tpu.memory_space<vmem>>, vector<128x1xf32>
      %52 = arith.mulf %48, %51 : vector<128x1xf32>
      %53 = arith.addf %52, %50 : vector<128x1xf32>
      %c0_24 = arith.constant 0 : index
      %c0_25 = arith.constant 0 : index
      %54 = vector.load %arg15[%c0_24, %c0_25] : memref<128x1xf32, #tpu.memory_space<vmem>>, vector<128x1xf32>
      tpu.vector_store %arg15[%c0_24, %c0_25], %53 {strides = array<i32>} : memref<128x1xf32, #tpu.memory_space<vmem>>, vector<128x1xf32>,
      %c0_26 = arith.constant 0 : index
      %c0_27 = arith.constant 0 : index
      %55 = vector.load %arg16[%c0_26, %c0_27] : memref<128x128xf32, #tpu.memory_space<vmem>>, vector<128x128xf32>
      %56 = vector.broadcast %48 : vector<128x1xf32> to vector<128x128xf32>
      %57 = arith.mulf %56, %55 : vector<128x128xf32>
      %58 = vector.broadcast %50 : vector<128x1xf32> to vector<128x128xf32>
      %59 = arith.mulf %58, %25 : vector<128x128xf32>
      %60 = arith.addf %57, %59 : vector<128x128xf32>
      %c0_28 = arith.constant 0 : index
      %c0_29 = arith.constant 0 : index
      %61 = vector.load %arg16[%c0_28, %c0_29] : memref<128x128xf32, #tpu.memory_space<vmem>>, vector<128x128xf32>
      tpu.vector_store %arg16[%c0_28, %c0_29], %60 {strides = array<i32>} : memref<128x128xf32, #tpu.memory_space<vmem>>, vector<128x128xf32>,
      %c0_30 = arith.constant 0 : index
      %c0_31 = arith.constant 0 : index
      %62 = vector.load %arg14[%c0_30, %c0_31] : memref<128x1xf32, #tpu.memory_space<vmem>>, vector<128x1xf32>
      tpu.vector_store %arg14[%c0_30, %c0_31], %45 {strides = array<i32>} : memref<128x1xf32, #tpu.memory_space<vmem>>, vector<128x1xf32>,
      %63 = arith.index_cast %arg1 : i32 to index
      %c0_32 = arith.constant 0 : index
      %c0_33 = arith.constant 0 : index
      %64 = vector.load %arg17[%63, %c0_32, %c0_33] : memref<3x128x1xf32, #tpu.memory_space<vmem>>, vector<1x128x1xf32>
      %65 = vector.shape_cast %64 : vector<1x128x1xf32> to vector<128x1xf32>
      %66 = vector.shape_cast %43 : vector<128x1xf32> to vector<1x128x1xf32>
      tpu.vector_store %arg17[%63, %c0_32, %c0_33], %66 {strides = array<i32>} : memref<3x128x1xf32, #tpu.memory_space<vmem>>, vector<1x128x1xf32>,
    } else {
    }
    %true = arith.constant true
    %8 = arith.xori %5, %true : i1
    %9 = arith.extui %8 : i1 to i32
    %c0_i32_3 = arith.constant 0 : i32
    %10 = arith.cmpi ne, %9, %c0_i32_3 : i32
    scf.if %10 {
      %c0 = arith.constant 0 : index
      %c0_5 = arith.constant 0 : index
      %14 = vector.load %arg14[%c0, %c0_5] : memref<128x1xf32, #tpu.memory_space<vmem>>, vector<128x1xf32>
      %cst = arith.constant 0.000000e+00 : f32
      %15 = vector.broadcast %cst : f32 to vector<128x1xf32>
      %16 = arith.maximumf %14, %15 : vector<128x1xf32>
      %c0_6 = arith.constant 0 : index
      %c0_7 = arith.constant 0 : index
      %17 = vector.load %arg14[%c0_6, %c0_7] : memref<128x1xf32, #tpu.memory_space<vmem>>, vector<128x1xf32>
      %18 = arith.subf %17, %16 : vector<128x1xf32>
      %19 = math.exp %18 : vector<128x1xf32>
      %cst_8 = arith.constant 0.000000e+00 : f32
      %20 = vector.broadcast %cst_8 : f32 to vector<128x1xf32>
      %21 = arith.subf %20, %16 : vector<128x1xf32>
      %22 = math.exp %21 : vector<128x1xf32>
      %c0_9 = arith.constant 0 : index
      %c0_10 = arith.constant 0 : index
      %23 = vector.load %arg15[%c0_9, %c0_10] : memref<128x1xf32, #tpu.memory_space<vmem>>, vector<128x1xf32>
      %24 = arith.mulf %19, %23 : vector<128x1xf32>
      %25 = arith.addf %24, %22 : vector<128x1xf32>
      %c0_11 = arith.constant 0 : index
      %c0_12 = arith.constant 0 : index
      %26 = vector.load %arg15[%c0_11, %c0_12] : memref<128x1xf32, #tpu.memory_space<vmem>>, vector<128x1xf32>
      tpu.vector_store %arg15[%c0_11, %c0_12], %25 {strides = array<i32>} : memref<128x1xf32, #tpu.memory_space<vmem>>, vector<128x1xf32>,
      %c0_13 = arith.constant 0 : index
      %c0_14 = arith.constant 0 : index
      %27 = vector.load %arg16[%c0_13, %c0_14] : memref<128x128xf32, #tpu.memory_space<vmem>>, vector<128x128xf32>
      %28 = vector.broadcast %19 : vector<128x1xf32> to vector<128x128xf32>
      %29 = arith.mulf %28, %27 : vector<128x128xf32>
      %c0_15 = arith.constant 0 : index
      %c0_16 = arith.constant 0 : index
      %30 = vector.load %arg16[%c0_15, %c0_16] : memref<128x128xf32, #tpu.memory_space<vmem>>, vector<128x128xf32>
      tpu.vector_store %arg16[%c0_15, %c0_16], %29 {strides = array<i32>} : memref<128x128xf32, #tpu.memory_space<vmem>>, vector<128x128xf32>,
      %c0_17 = arith.constant 0 : index
      %c0_18 = arith.constant 0 : index
      %31 = vector.load %arg14[%c0_17, %c0_18] : memref<128x1xf32, #tpu.memory_space<vmem>>, vector<128x1xf32>
      tpu.vector_store %arg14[%c0_17, %c0_18], %16 {strides = array<i32>} : memref<128x1xf32, #tpu.memory_space<vmem>>, vector<128x1xf32>,
      %cst_19 = arith.constant 0.000000e+00 : f32
      %32 = vector.broadcast %cst_19 : f32 to vector<128x1xf32>
      %33 = arith.index_cast %arg1 : i32 to index
      %c0_20 = arith.constant 0 : index
      %c0_21 = arith.constant 0 : index
      %34 = vector.load %arg17[%33, %c0_20, %c0_21] : memref<3x128x1xf32, #tpu.memory_space<vmem>>, vector<1x128x1xf32>
      %35 = vector.shape_cast %34 : vector<1x128x1xf32> to vector<128x1xf32>
      %36 = vector.shape_cast %32 : vector<128x1xf32> to vector<1x128x1xf32>
      tpu.vector_store %arg17[%33, %c0_20, %c0_21], %36 {strides = array<i32>} : memref<3x128x1xf32, #tpu.memory_space<vmem>>, vector<1x128x1xf32>,
    } else {
    }
    %c2_i32 = arith.constant 2 : i32
    %11 = arith.cmpi eq, %arg1, %c2_i32 : i32
    %12 = arith.extui %11 : i1 to i32
    %c0_i32_4 = arith.constant 0 : i32
    %13 = arith.cmpi ne, %12, %c0_i32_4 : i32
    scf.if %13 {
      %c0 = arith.constant 0 : index
      %c0_5 = arith.constant 0 : index
      %14 = vector.load %arg15[%c0, %c0_5] : memref<128x1xf32, #tpu.memory_space<vmem>>, vector<128x1xf32>
      %cst = arith.constant 1.000000e+00 : f32
      %15 = vector.broadcast %cst : f32 to vector<128x1xf32>
      %16 = arith.divf %15, %14 : vector<128x1xf32>
      %c0_6 = arith.constant 0 : index
      %c0_7 = arith.constant 0 : index
      %17 = vector.load %arg16[%c0_6, %c0_7] : memref<128x128xf32, #tpu.memory_space<vmem>>, vector<128x128xf32>
      %18 = vector.broadcast %16 : vector<128x1xf32> to vector<128x128xf32>
      %19 = arith.mulf %17, %18 : vector<128x128xf32>
      %c0_8 = arith.constant 0 : index
      %c0_9 = arith.constant 0 : index
      %20 = vector.load %arg11[%c0_8, %c0_9] : memref<128x128xf32, #tpu.memory_space<vmem>>, vector<128x128xf32>
      tpu.vector_store %arg11[%c0_8, %c0_9], %19 {strides = array<i32>} : memref<128x128xf32, #tpu.memory_space<vmem>>, vector<128x128xf32>,
      %c0_10 = arith.constant 0 : index
      %c0_11 = arith.constant 0 : index
      %c0_12 = arith.constant 0 : index
      %21 = vector.load %arg17[%c0_10, %c0_11, %c0_12] : memref<3x128x1xf32, #tpu.memory_space<vmem>>, vector<3x128x1xf32>
      %c0_13 = arith.constant 0 : index
      %c0_14 = arith.constant 0 : index
      %22 = vector.load %arg14[%c0_13, %c0_14] : memref<128x1xf32, #tpu.memory_space<vmem>>, vector<128x1xf32>
      %23 = vector.shape_cast %22 : vector<128x1xf32> to vector<1x128x1xf32>
      %24 = vector.broadcast %23 : vector<1x128x1xf32> to vector<3x128x1xf32>
      %25 = arith.subf %21, %24 : vector<3x128x1xf32>
      %26 = math.exp %25 : vector<3x128x1xf32>
      %27 = vector.shape_cast %16 : vector<128x1xf32> to vector<1x128x1xf32>
      %28 = vector.broadcast %27 : vector<1x128x1xf32> to vector<3x128x1xf32>
      %29 = arith.mulf %26, %28 : vector<3x128x1xf32>
      %c0_15 = arith.constant 0 : index
      %c0_16 = arith.constant 0 : index
      %c0_17 = arith.constant 0 : index
      %30 = vector.load %arg12[%c0_15, %c0_16, %c0_17] : memref<3x128x1xf32, #tpu.memory_space<vmem>>, vector<3x128x1xf32>
      tpu.vector_store %arg12[%c0_15, %c0_16, %c0_17], %29 {strides = array<i32>} : memref<3x128x1xf32, #tpu.memory_space<vmem>>, vector<3x128x1xf32>,
    } else {
    }
    return
  }
  func.func @transform_0(%arg0: i32, %arg1: i32, %arg2: memref<3xi32, #tpu.memory_space<smem>>, %arg3: memref<3xi32, #tpu.memory_space<smem>>) -> (i32, i32, i32) {
    %0 = arith.index_cast %arg1 : i32 to index
    %1 = memref.load %arg3[%0] : memref<3xi32, #tpu.memory_space<smem>>
    %c0_i32 = arith.constant 0 : i32
    %c0_i32_0 = arith.constant 0 : i32
    return %1, %arg0, %c0_i32 : i32, i32, i32
  }
  func.func @transform_1(%arg0: i32, %arg1: i32, %arg2: memref<3xi32, #tpu.memory_space<smem>>, %arg3: memref<3xi32, #tpu.memory_space<smem>>) -> (i32, i32) {
    %c0_i32 = arith.constant 0 : i32
    %c0_i32_0 = arith.constant 0 : i32
    %c0_i32_1 = arith.constant 0 : i32
    return %c0_i32, %c0_i32_0 : i32, i32
  }
  func.func @transform_2(%arg0: i32, %arg1: i32, %arg2: memref<3xi32, #tpu.memory_space<smem>>, %arg3: memref<3xi32, #tpu.memory_space<smem>>) -> (i32, i32) {
    %c0_i32 = arith.constant 0 : i32
    %c0_i32_0 = arith.constant 0 : i32
    %c0_i32_1 = arith.constant 0 : i32
    return %c0_i32, %c0_i32_0 : i32, i32
  }
  func.func @transform_3(%arg0: i32, %arg1: i32, %arg2: memref<3xi32, #tpu.memory_space<smem>>, %arg3: memref<3xi32, #tpu.memory_space<smem>>) -> (i32, i32, i32) {
    %c0_i32 = arith.constant 0 : i32
    %c0_i32_0 = arith.constant 0 : i32
    %c0_i32_1 = arith.constant 0 : i32
    %c0_i32_2 = arith.constant 0 : i32
    return %c0_i32, %c0_i32_0, %c0_i32_1 : i32, i32, i32
  }
  func.func @transform_4(%arg0: i32, %arg1: i32, %arg2: memref<3xi32, #tpu.memory_space<smem>>, %arg3: memref<3xi32, #tpu.memory_space<smem>>) -> (i32, i32, i32) {
    %c0_i32 = arith.constant 0 : i32
    %c0_i32_0 = arith.constant 0 : i32
    %c0_i32_1 = arith.constant 0 : i32
    %c0_i32_2 = arith.constant 0 : i32
    return %c0_i32, %c0_i32_0, %c0_i32_1 : i32, i32, i32
  }
  func.func @transform_5(%arg0: i32, %arg1: i32, %arg2: memref<3xi32, #tpu.memory_space<smem>>, %arg3: memref<3xi32, #tpu.memory_space<smem>>) -> (i32, i32, i32) {
    %c0_i32 = arith.constant 0 : i32
    %c0_i32_0 = arith.constant 0 : i32
    %c0_i32_1 = arith.constant 0 : i32
    %c0_i32_2 = arith.constant 0 : i32
    return %c0_i32, %c0_i32_0, %c0_i32_1 : i32, i32, i32
  }
  func.func @transform_6(%arg0: i32, %arg1: i32, %arg2: memref<3xi32, #tpu.memory_space<smem>>, %arg3: memref<3xi32, #tpu.memory_space<smem>>) -> (i32, i32, i32) {
    %c0_i32 = arith.constant 0 : i32
    %c0_i32_0 = arith.constant 0 : i32
    %c0_i32_1 = arith.constant 0 : i32
    %c0_i32_2 = arith.constant 0 : i32
    return %c0_i32, %c0_i32_0, %c0_i32_1 : i32, i32, i32
  }
  func.func @transform_7(%arg0: i32, %arg1: i32, %arg2: memref<3xi32, #tpu.memory_space<smem>>, %arg3: memref<3xi32, #tpu.memory_space<smem>>) -> (i32, i32) {
    %c0_i32 = arith.constant 0 : i32
    %c0_i32_0 = arith.constant 0 : i32
    return %arg0, %c0_i32 : i32, i32
  }
  func.func @transform_8(%arg0: i32, %arg1: i32, %arg2: memref<3xi32, #tpu.memory_space<smem>>, %arg3: memref<3xi32, #tpu.memory_space<smem>>) -> (i32, i32, i32) {
    %c0_i32 = arith.constant 0 : i32
    %c0_i32_0 = arith.constant 0 : i32
    %c0_i32_1 = arith.constant 0 : i32
    return %c0_i32, %arg0, %c0_i32_0 : i32, i32, i32
  }
}

</mosaic_0001>

<llo_original>
// kernel: custom-call
$region0: #{custom-call}
  %s0 = inlined_call_operand.vmem [shape: s32[3], index: 0, kind: output, shape index: {}]

// kernel: hetero_graph_conv.1
$region0: #{hetero_graph_conv.1}
  #allocation0 [shape = 'u32[]', space=smem, size = 0x4, offset = 0x4, fixed_abs, tag = 'smem constant byte address 0x4 - core index']
  #allocation1 [shape = 'u32[72,128]{1,0:T(1,128)}', space=vmem, size = 0x9000, scoped, tag = 'internal scratch']
  #allocation2 [shape = 'bf16[128,384]{1,0:T(8,128)(2,1)}', space=vmem, size = 0x18000, scoped, tag = 'scratch operand']
  #allocation3 [shape = 'f32[128,1]{1,0:T(8,128)}', space=vmem, size = 0x10000, scoped, tag = 'scratch operand']
  #allocation4 [shape = 'f32[128,1]{1,0:T(8,128)}', space=vmem, size = 0x10000, scoped, tag = 'scratch operand']
  #allocation5 [shape = 'f32[128,128]{1,0:T(8,128)}', space=vmem, size = 0x10000, scoped, tag = 'scratch operand']
  #allocation6 [shape = 'f32[3,128,1]{2,1,0:T(8,128)}', space=vmem, size = 0x30000, scoped, tag = 'scratch operand']
  #allocation7 [shape = 's32[1]{0}', space=sflag, size = 0x4, scoped, tag = 'scoped memory for hetero_graph_conv.1']
  #allocation8 [shape = 'u8[512]{0}', space=smem, size = 0x200, scoped, tag = 'prefetched SMEM operand 0']
  #allocation9 [shape = 'u8[512]{0}', space=smem, size = 0x200, scoped, tag = 'prefetched SMEM operand 1']
  %s0 = inlined_call_operand.vmem [shape: s32[3], index: 0, kind: input, shape index: {}]
  %s1 = inlined_call_operand.vmem [shape: s32[3], index: 1, kind: input, shape index: {}]
  %s2 = inlined_call_operand.vmem [shape: bf16[3,128,128], index: 2, kind: input, shape index: {}]
  %s3 = inlined_call_operand.vmem [shape: bf16[128,128], index: 3, kind: input, shape index: {}]
  %s4 = inlined_call_operand.vmem [shape: bf16[128,384], index: 4, kind: input, shape index: {}]
  %s5 = inlined_call_operand.vmem [shape: f32[3,1,128], index: 5, kind: input, shape index: {}]
  %s6 = inlined_call_operand.vmem [shape: bf16[3,128,128], index: 6, kind: input, shape index: {}]
  %s7 = inlined_call_operand.vmem [shape: f32[3,1,128], index: 7, kind: input, shape index: {}]
  %s8 = inlined_call_operand.vmem [shape: f32[3,1,128], index: 8, kind: input, shape index: {}]
  %s9 = inlined_call_operand.hbm [shape: f32[128,128], index: 9, kind: output, shape index: {0}]
  %s10 = inlined_call_operand.vmem [shape: f32[3,128,1], index: 10, kind: output, shape index: {1}]
  %11 = xla_tuple %s9, %s10
  %s12 = sld [smem:[#allocation0]]
  $region85: #{hetero_graph_conv.1} parent=0
    _
  %s14 = ssub.s32 1, %s12
  %s15 = scalar_select 0, %s14, %s12
  %s17 = sshll.u32 %s0, 4
  %s18 = int_to_ptr.vmem [resolvable:$true] %s17
  %20 = dma.vmem_to_smem %s18, 16, [#allocation8], [#allocation7]
  %s22 = sshll.u32 %s1, 4
  %s23 = int_to_ptr.vmem [resolvable:$true] %s22
  %25 = dma.vmem_to_smem %s23, 16, [#allocation9], [#allocation7]
  %27 = dma.done [#allocation7], 32
  %28 = sfence
  $region1: #{hetero_graph_conv.1} parent=0
    #allocation10 [shape = 'u8[65536]{0}', space=vmem, size = 0x10000, scoped, tag = 'output window, operand 0, single buffered']
    #allocation11 [shape = 's32[2]{0}', space=sflag, size = 0x8, scoped, tag = 'scoped memory for hetero_graph_conv.1']
    %29 = vsyncpa [#allocation11], 0
    loop: start=0, step=1, limit=5
    $region2: #{hetero_graph_conv.1} parent=1 // loop_pre_header
      _
    $region3: #{hetero_graph_conv.1} parent=1 // loop_header
      %s31 = sphi 0, %s35
      %p32 = scmp.ge.s32.totalorder %s31, 5
      %s38 = sphi 0, %s50
      %s39 = sphi 0, %s46
      %s40 = sphi 0, %s38
      %s41 = sphi 0, %s39
      %s42 = sphi 0, %s40
      %s43 = sphi 0, %s41
      %s57 = sphi 0, %s59
      %s60 = sphi 0, %s57
      %s61 = sphi 0, %s60
      %s77 = sphi 0, %s61
      %s81 = sphi 0, %s81
      %s83 = sphi 0, %s81
      %s84 = sphi 0, %s83
      %s98 = sphi 0, %s84
      %s102 = sphi 0, %s102
      %s104 = sphi 0, %s102
      %s105 = sphi 0, %s104
      %s119 = sphi 0, %s105
      %s123 = sphi 0, %s123
      %s125 = sphi 0, %s123
      %s126 = sphi 0, %s125
      %s140 = sphi 0, %s126
      %s144 = sphi 0, %s144
      %s146 = sphi 0, %s144
      %s147 = sphi 0, %s146
      %s161 = sphi 0, %s147
      %s165 = sphi 0, %s165
      %s167 = sphi 0, %s165
      %s168 = sphi 0, %s167
      %s182 = sphi 0, %s168
      %s186 = sphi 0, %s186
      %s188 = sphi 0, %s186
      %s189 = sphi 0, %s188
      %s203 = sphi 0, %s189
      %s209 = sphi 0, %s211
      %s212 = sphi 0, %s209
      %s213 = sphi 0, %s212
      %s229 = sphi 0, %s213
      %s235 = sphi 0, %s237
      %s238 = sphi 0, %s235
      %s239 = sphi 0, %s238
      %s255 = sphi 0, %s239
    $region4: #{hetero_graph_conv.1} parent=1 // loop_header_branch
      %34 = sbr.rel (%p32) target = $region8
    $region5: #{hetero_graph_conv.1} parent=1 // loop_body
      %s36 = ssub.s32 %s31, 1
      %s37 = ssub.s32 %s31, 2
      %s44 = sadd.s32 1, %s39
      %p45 = scmp.ge.s32.totalorder %s44, 3
      %s46 = scalar_select %p45, 0, %s44
      %s47 = sadd.s32 1, %s38
      %s48 = scalar_select %p45, %s47, %s38
      %p49 = scmp.ge.s32.totalorder %s48, 1
      %s50 = scalar_select %p49, 0, %s48
      %s51 = sld [smem:[#allocation9 + %s39]]
      %s52 = sld [smem:[#allocation9 + %s46]]
      %s53 = ssub.s32 %s51, %s52
      %s54 = ssub.s32 %s38, %s50
      %s55 = sor.u32 %s53, %s54
      %p56 = scmp.eq.s32.totalorder %s55, 0
      %s58 = sadd.s32 %s57, 1
      %s59 = scalar_select %p56, %s57, %s58
      %p62 = pneg %p56
      %p63 = scmp.eq.s32.totalorder %s31, 2
      %p64 = por %p62, %p63
      %p65 = scmp.ne.s32.totalorder %s57, %s60
      %p66 = scmp.eq.s32.totalorder %s31, 0
      %p67 = por %p65, %p66
      %p68 = scmp.ne.s32.totalorder %s57, %s60
      %p69 = scmp.eq.s32.totalorder %s36, 2
      %p70 = por %p68, %p69
      %p71 = scmp.ne.s32.totalorder %s60, %s61
      %p72 = scmp.eq.s32.totalorder %s36, 0
      %p73 = por %p71, %p72
      %p74 = scmp.ne.s32.totalorder %s60, %s61
      %p75 = scmp.eq.s32.totalorder %s37, 2
      %p76 = por %p74, %p75
      %p78 = scmp.ne.s32.totalorder %s61, %s77
      %p79 = scmp.eq.s32.totalorder %s37, 0
      %p80 = por %p78, %p79
      %s82 = sadd.s32 %s81, 1
      %p85 = scmp.eq.s32.totalorder %s31, 2
      %p86 = scmp.ne.s32.totalorder %s81, %s83
      %p87 = scmp.eq.s32.totalorder %s31, 0
      %p88 = por %p86, %p87
      %p89 = scmp.ne.s32.totalorder %s81, %s83
      %p90 = scmp.eq.s32.totalorder %s36, 2
      %p91 = por %p89, %p90
      %p92 = scmp.ne.s32.totalorder %s83, %s84
      %p93 = scmp.eq.s32.totalorder %s36, 0
      %p94 = por %p92, %p93
      %p95 = scmp.ne.s32.totalorder %s83, %s84
      %p96 = scmp.eq.s32.totalorder %s37, 2
      %p97 = por %p95, %p96
      %p99 = scmp.ne.s32.totalorder %s84, %s98
      %p100 = scmp.eq.s32.totalorder %s37, 0
      %p101 = por %p99, %p100
      %s103 = sadd.s32 %s102, 1
      %p106 = scmp.eq.s32.totalorder %s31, 2
      %p107 = scmp.ne.s32.totalorder %s102, %s104
      %p108 = scmp.eq.s32.totalorder %s31, 0
      %p109 = por %p107, %p108
      %p110 = scmp.ne.s32.totalorder %s102, %s104
      %p111 = scmp.eq.s32.totalorder %s36, 2
      %p112 = por %p110, %p111
      %p113 = scmp.ne.s32.totalorder %s104, %s105
      %p114 = scmp.eq.s32.totalorder %s36, 0
      %p115 = por %p113, %p114
      %p116 = scmp.ne.s32.totalorder %s104, %s105
      %p117 = scmp.eq.s32.totalorder %s37, 2
      %p118 = por %p116, %p117
      %p120 = scmp.ne.s32.totalorder %s105, %s119
      %p121 = scmp.eq.s32.totalorder %s37, 0
      %p122 = por %p120, %p121
      %s124 = sadd.s32 %s123, 1
      %p127 = scmp.eq.s32.totalorder %s31, 2
      %p128 = scmp.ne.s32.totalorder %s123, %s125
      %p129 = scmp.eq.s32.totalorder %s31, 0
      %p130 = por %p128, %p129
      %p131 = scmp.ne.s32.totalorder %s123, %s125
      %p132 = scmp.eq.s32.totalorder %s36, 2
      %p133 = por %p131, %p132
      %p134 = scmp.ne.s32.totalorder %s125, %s126
      %p135 = scmp.eq.s32.totalorder %s36, 0
      %p136 = por %p134, %p135
      %p137 = scmp.ne.s32.totalorder %s125, %s126
      %p138 = scmp.eq.s32.totalorder %s37, 2
      %p139 = por %p137, %p138
      %p141 = scmp.ne.s32.totalorder %s126, %s140
      %p142 = scmp.eq.s32.totalorder %s37, 0
      %p143 = por %p141, %p142
      %s145 = sadd.s32 %s144, 1
      %p148 = scmp.eq.s32.totalorder %s31, 2
      %p149 = scmp.ne.s32.totalorder %s144, %s146
      %p150 = scmp.eq.s32.totalorder %s31, 0
      %p151 = por %p149, %p150
      %p152 = scmp.ne.s32.totalorder %s144, %s146
      %p153 = scmp.eq.s32.totalorder %s36, 2
      %p154 = por %p152, %p153
      %p155 = scmp.ne.s32.totalorder %s146, %s147
      %p156 = scmp.eq.s32.totalorder %s36, 0
      %p157 = por %p155, %p156
      %p158 = scmp.ne.s32.totalorder %s146, %s147
      %p159 = scmp.eq.s32.totalorder %s37, 2
      %p160 = por %p158, %p159
      %p162 = scmp.ne.s32.totalorder %s147, %s161
      %p163 = scmp.eq.s32.totalorder %s37, 0
      %p164 = por %p162, %p163
      %s166 = sadd.s32 %s165, 1
      %p169 = scmp.eq.s32.totalorder %s31, 2
      %p170 = scmp.ne.s32.totalorder %s165, %s167
      %p171 = scmp.eq.s32.totalorder %s31, 0
      %p172 = por %p170, %p171
      %p173 = scmp.ne.s32.totalorder %s165, %s167
      %p174 = scmp.eq.s32.totalorder %s36, 2
      %p175 = por %p173, %p174
      %p176 = scmp.ne.s32.totalorder %s167, %s168
      %p177 = scmp.eq.s32.totalorder %s36, 0
      %p178 = por %p176, %p177
      %p179 = scmp.ne.s32.totalorder %s167, %s168
      %p180 = scmp.eq.s32.totalorder %s37, 2
      %p181 = por %p179, %p180
      %p183 = scmp.ne.s32.totalorder %s168, %s182
      %p184 = scmp.eq.s32.totalorder %s37, 0
      %p185 = por %p183, %p184
      %s187 = sadd.s32 %s186, 1
      %p190 = scmp.eq.s32.totalorder %s31, 2
      %p191 = scmp.ne.s32.totalorder %s186, %s188
      %p192 = scmp.eq.s32.totalorder %s31, 0
      %p193 = por %p191, %p192
      %p194 = scmp.ne.s32.totalorder %s186, %s188
      %p195 = scmp.eq.s32.totalorder %s36, 2
      %p196 = por %p194, %p195
      %p197 = scmp.ne.s32.totalorder %s188, %s189
      %p198 = scmp.eq.s32.totalorder %s36, 0
      %p199 = por %p197, %p198
      %p200 = scmp.ne.s32.totalorder %s188, %s189
      %p201 = scmp.eq.s32.totalorder %s37, 2
      %p202 = por %p200, %p201
      %p204 = scmp.ne.s32.totalorder %s189, %s203
      %p205 = scmp.eq.s32.totalorder %s37, 0
      %p206 = por %p204, %p205
      %s207 = ssub.s32 %s38, %s50
      %p208 = scmp.eq.s32.totalorder %s207, 0
      %s210 = sadd.s32 %s209, 1
      %s211 = scalar_select %p208, %s209, %s210
      %p214 = pneg %p208
      %p215 = scmp.eq.s32.totalorder %s31, 2
      %p216 = por %p214, %p215
      %p217 = scmp.ne.s32.totalorder %s209, %s212
      %p218 = scmp.eq.s32.totalorder %s31, 0
      %p219 = por %p217, %p218
      %p220 = scmp.ne.s32.totalorder %s209, %s212
      %p221 = scmp.eq.s32.totalorder %s36, 2
      %p222 = por %p220, %p221
      %p223 = scmp.ne.s32.totalorder %s212, %s213
      %p224 = scmp.eq.s32.totalorder %s36, 0
      %p225 = por %p223, %p224
      %p226 = scmp.ne.s32.totalorder %s212, %s213
      %p227 = scmp.eq.s32.totalorder %s37, 2
      %p228 = por %p226, %p227
      %p230 = scmp.ne.s32.totalorder %s213, %s229
      %p231 = scmp.eq.s32.totalorder %s37, 0
      %p232 = por %p230, %p231
      %s233 = ssub.s32 %s38, %s50
      %p234 = scmp.eq.s32.totalorder %s233, 0
      %s236 = sadd.s32 %s235, 1
      %s237 = scalar_select %p234, %s235, %s236
      %p240 = pneg %p234
      %p241 = scmp.eq.s32.totalorder %s31, 2
      %p242 = por %p240, %p241
      %p243 = scmp.ne.s32.totalorder %s235, %s238
      %p244 = scmp.eq.s32.totalorder %s31, 0
      %p245 = por %p243, %p244
      %p246 = scmp.ne.s32.totalorder %s235, %s238
      %p247 = scmp.eq.s32.totalorder %s36, 2
      %p248 = por %p246, %p247
      %p249 = scmp.ne.s32.totalorder %s238, %s239
      %p250 = scmp.eq.s32.totalorder %s36, 0
      %p251 = por %p249, %p250
      %p252 = scmp.ne.s32.totalorder %s238, %s239
      %p253 = scmp.eq.s32.totalorder %s37, 2
      %p254 = por %p252, %p253
      %p256 = scmp.ne.s32.totalorder %s239, %s255
      %p257 = scmp.eq.s32.totalorder %s37, 0
      %p258 = por %p256, %p257
      %p259 = scmp.le.s32.totalorder 1, %s31
      %p260 = scmp.lt.s32.totalorder %s31, 4
      %p261 = pnand %p259, %p260
      %p262 = pneg %p261
      // Predicated region
      $region9: #{hetero_graph_conv.1} parent=5 // pred_check
        _
      $region10: #{hetero_graph_conv.1} parent=5 // pred_check_branch
        %264 = sbr.rel (%p261) target = $region12
      $region11: #{hetero_graph_conv.1} parent=5 // pred_region
        %s265 = ssub.s32 %s31, 1
        // Predicated region
        $region13: #{hetero_graph_conv.1} parent=11 // pred_check
          %p266 = pneg %p94
        $region14: #{hetero_graph_conv.1} parent=11 // pred_check_branch
          %268 = sbr.rel (%p266) target = $region16
        $region15: #{hetero_graph_conv.1} parent=11 // pred_region
          _
        $region16: #{hetero_graph_conv.1} parent=11 // pred_fallthru
          _
        // Predicated region
        $region17: #{hetero_graph_conv.1} parent=11 // pred_check
          %p269 = pneg %p115
        $region18: #{hetero_graph_conv.1} parent=11 // pred_check_branch
          %271 = sbr.rel (%p269) target = $region20
        $region19: #{hetero_graph_conv.1} parent=11 // pred_region
          _
        $region20: #{hetero_graph_conv.1} parent=11 // pred_fallthru
          _
        // Predicated region
        $region21: #{hetero_graph_conv.1} parent=11 // pred_check
          %p272 = pneg %p136
        $region22: #{hetero_graph_conv.1} parent=11 // pred_check_branch
          %274 = sbr.rel (%p272) target = $region24
        $region23: #{hetero_graph_conv.1} parent=11 // pred_region
          _
        $region24: #{hetero_graph_conv.1} parent=11 // pred_fallthru
          _
        // Predicated region
        $region25: #{hetero_graph_conv.1} parent=11 // pred_check
          %p275 = pneg %p157
        $region26: #{hetero_graph_conv.1} parent=11 // pred_check_branch
          %277 = sbr.rel (%p275) target = $region28
        $region27: #{hetero_graph_conv.1} parent=11 // pred_region
          _
        $region28: #{hetero_graph_conv.1} parent=11 // pred_fallthru
          _
        // Predicated region
        $region29: #{hetero_graph_conv.1} parent=11 // pred_check
          %p278 = pneg %p178
        $region30: #{hetero_graph_conv.1} parent=11 // pred_check_branch
          %280 = sbr.rel (%p278) target = $region32
        $region31: #{hetero_graph_conv.1} parent=11 // pred_region
          _
        $region32: #{hetero_graph_conv.1} parent=11 // pred_fallthru
          _
        // Predicated region
        $region33: #{hetero_graph_conv.1} parent=11 // pred_check
          %p281 = pneg %p199
        $region34: #{hetero_graph_conv.1} parent=11 // pred_check_branch
          %283 = sbr.rel (%p281) target = $region36
        $region35: #{hetero_graph_conv.1} parent=11 // pred_region
          _
        $region36: #{hetero_graph_conv.1} parent=11 // pred_fallthru
          _
      $region12: #{hetero_graph_conv.1} parent=5 // pred_fallthru
        _
      %p284 = scmp.lt.s32.totalorder %s31, 3
      // Predicated region
      $region37: #{hetero_graph_conv.1} parent=5 // pred_check
        %p285 = pneg %p284
      $region38: #{hetero_graph_conv.1} parent=5 // pred_check_branch
        %287 = sbr.rel (%p285) target = $region40
      $region39: #{hetero_graph_conv.1} parent=5 // pred_region
        // Predicated region
        $region41: #{hetero_graph_conv.1} parent=39 // pred_check
          %p288 = pneg %p67
        $region42: #{hetero_graph_conv.1} parent=39 // pred_check_branch
          %290 = sbr.rel (%p288) target = $region44
        $region43: #{hetero_graph_conv.1} parent=39 // pred_region
          %s291 = sld [smem:[#allocation9 + %s39]]
          %s292 = smul.u32 16, %s38
          %p293 = scmp.lt.s32.totalorder %s291, 2
          %s294 = scalar_select %p293, %s291, 2
          %p295 = scmp.lt.s32.totalorder %s292, 15
          %s296 = scalar_select %p295, %s292, 15
          %s297 = smul.addr %s294, 16
          %s298 = sadd.s32 %s296, %s297
          %s299 = smul.addr %s298, 4
          %s300 = scalar_lea.vmem %s2, %s299
          %s301 = sld [smem:[#allocation9 + %s39]]
          %s302 = smul.u32 16, %s38
        $region44: #{hetero_graph_conv.1} parent=39 // pred_fallthru
          _
      $region40: #{hetero_graph_conv.1} parent=5 // pred_fallthru
        _
      %p303 = scmp.le.s32.totalorder 1, %s31
      %p304 = scmp.lt.s32.totalorder %s31, 4
      %p305 = pnand %p303, %p304
      %p306 = pneg %p305
      // Predicated region
      $region45: #{hetero_graph_conv.1} parent=5 // pred_check
        _
      $region46: #{hetero_graph_conv.1} parent=5 // pred_check_branch
        %308 = sbr.rel (%p305) target = $region48
      $region47: #{hetero_graph_conv.1} parent=5 // pred_region
        %s309 = ssub.s32 %s31, 1
        %s310 = sld [smem:[#allocation9 + %s41]]
        %s311 = smul.u32 16, %s40
        %p312 = scmp.lt.s32.totalorder %s310, 2
        %s313 = scalar_select %p312, %s310, 2
        %p314 = scmp.lt.s32.totalorder %s311, 15
        %s315 = scalar_select %p314, %s311, 15
        %s316 = smul.addr %s313, 16
        %s317 = sadd.s32 %s315, %s316
        %s318 = smul.addr %s317, 4
        %s319 = scalar_lea.vmem %s2, %s318
        %p320 = pneg %p73
        %p321 = pneg %p70
        %p322 = pneg %p94
        %p323 = pneg %p91
        %p324 = pneg %p115
        %p325 = pneg %p112
        %p326 = pneg %p136
        %p327 = pneg %p133
        %p328 = pneg %p157
        %p329 = pneg %p154
        %p330 = pneg %p178
        %p331 = pneg %p175
        %p332 = pneg %p199
        %p333 = pneg %p196
        %p334 = pneg %p225
        %p335 = pneg %p222
        %p336 = pneg %p251
        %p337 = pneg %p248
        %s338 = smul.u32 16, %s40
        %p339 = scmp.lt.s32.totalorder %s338, 15
        %s340 = scalar_select %p339, %s338, 15
        %s341 = smul.addr %s340, 8
        %s342 = scalar_lea.vmem %s10, %s341
        %s343 = sld [smem:[#allocation9 + %s41]]
        %s344 = smul.u32 16, %s40
        %p345 = scmp.lt.s32.totalorder %s343, 2
        %s346 = scalar_select %p345, %s343, 2
        %p347 = scmp.lt.s32.totalorder %s344, 15
        %s348 = scalar_select %p347, %s344, 15
        %s349 = smul.addr %s346, 16
        %s350 = sadd.s32 %s348, %s349
        %s351 = smul.addr %s350, 4
        %s352 = scalar_lea.vmem %s2, %s351
        %s353 = sld [smem:[#allocation9 + %s41]]
        %s354 = smul.u32 16, %s40
        %s355 = smul.u32 16, %s40
        %s356 = smul.u32 16, %s40
        %p357 = scmp.lt.s32.totalorder %s356, 15
        %s358 = scalar_select %p357, %s356, 15
        %s359 = smul.addr %s358, 8
        %s360 = scalar_lea.vmem %s10, %s359
        %s361 = smul.u32 16, %s40
        %p362 = scmp.eq.s32.totalorder %s41, 0
        // Predicated region
        $region49: #{hetero_graph_conv.1} parent=47 // pred_check
          %p363 = pneg %p362
        $region50: #{hetero_graph_conv.1} parent=47 // pred_check_branch
          %365 = sbr.rel (%p363) target = $region52
        $region51: #{hetero_graph_conv.1} parent=47 // pred_region
          %vm366 = vcmask 7168
          %367 = vst.msk [vmem:[#allocation3] sm:$0xff] %vm366, -inf
          %368 = vst.msk [vmem:[#allocation3 + $0x8] sm:$0xff] %vm366, -inf
          %369 = vst.msk [vmem:[#allocation3 + $0x10] sm:$0xff] %vm366, -inf
          %370 = vst.msk [vmem:[#allocation3 + $0x18] sm:$0xff] %vm366, -inf
          %371 = vst.msk [vmem:[#allocation3 + $0x20] sm:$0xff] %vm366, -inf
          %372 = vst.msk [vmem:[#allocation3 + $0x28] sm:$0xff] %vm366, -inf
          %373 = vst.msk [vmem:[#allocation3 + $0x30] sm:$0xff] %vm366, -inf
          %374 = vst.msk [vmem:[#allocation3 + $0x38] sm:$0xff] %vm366, -inf
          %375 = vst.msk [vmem:[#allocation3 + $0x40] sm:$0xff] %vm366, -inf
          %376 = vst.msk [vmem:[#allocation3 + $0x48] sm:$0xff] %vm366, -inf
          %377 = vst.msk [vmem:[#allocation3 + $0x50] sm:$0xff] %vm366, -inf
          %378 = vst.msk [vmem:[#allocation3 + $0x58] sm:$0xff] %vm366, -inf
          %379 = vst.msk [vmem:[#allocation3 + $0x60] sm:$0xff] %vm366, -inf
          %380 = vst.msk [vmem:[#allocation3 + $0x68] sm:$0xff] %vm366, -inf
          %381 = vst.msk [vmem:[#allocation3 + $0x70] sm:$0xff] %vm366, -inf
          %382 = vst.msk [vmem:[#allocation3 + $0x78] sm:$0xff] %vm366, -inf
          %383 = vst.msk [vmem:[#allocation4] sm:$0xff] %vm366, 0.0
          %384 = vst.msk [vmem:[#allocation4 + $0x8] sm:$0xff] %vm366, 0.0
          %385 = vst.msk [vmem:[#allocation4 + $0x10] sm:$0xff] %vm366, 0.0
          %386 = vst.msk [vmem:[#allocation4 + $0x18] sm:$0xff] %vm366, 0.0
          %387 = vst.msk [vmem:[#allocation4 + $0x20] sm:$0xff] %vm366, 0.0
          %388 = vst.msk [vmem:[#allocation4 + $0x28] sm:$0xff] %vm366, 0.0
          %389 = vst.msk [vmem:[#allocation4 + $0x30] sm:$0xff] %vm366, 0.0
          %390 = vst.msk [vmem:[#allocation4 + $0x38] sm:$0xff] %vm366, 0.0
          %391 = vst.msk [vmem:[#allocation4 + $0x40] sm:$0xff] %vm366, 0.0
          %392 = vst.msk [vmem:[#allocation4 + $0x48] sm:$0xff] %vm366, 0.0
          %393 = vst.msk [vmem:[#allocation4 + $0x50] sm:$0xff] %vm366, 0.0
          %394 = vst.msk [vmem:[#allocation4 + $0x58] sm:$0xff] %vm366, 0.0
          %395 = vst.msk [vmem:[#allocation4 + $0x60] sm:$0xff] %vm366, 0.0
          %396 = vst.msk [vmem:[#allocation4 + $0x68] sm:$0xff] %vm366, 0.0
          %397 = vst.msk [vmem:[#allocation4 + $0x70] sm:$0xff] %vm366, 0.0
          %398 = vst.msk [vmem:[#allocation4 + $0x78] sm:$0xff] %vm366, 0.0
          %399 = vst [vmem:[#allocation5] sm:$0xff] 0.0
          %400 = vst [vmem:[#allocation5 + $0x8] sm:$0xff] 0.0
          %401 = vst [vmem:[#allocation5 + $0x10] sm:$0xff] 0.0
          %402 = vst [vmem:[#allocation5 + $0x18] sm:$0xff] 0.0
          %403 = vst [vmem:[#allocation5 + $0x20] sm:$0xff] 0.0
          %404 = vst [vmem:[#allocation5 + $0x28] sm:$0xff] 0.0
          %405 = vst [vmem:[#allocation5 + $0x30] sm:$0xff] 0.0
          %406 = vst [vmem:[#allocation5 + $0x38] sm:$0xff] 0.0
          %407 = vst [vmem:[#allocation5 + $0x40] sm:$0xff] 0.0
          %408 = vst [vmem:[#allocation5 + $0x48] sm:$0xff] 0.0
          %409 = vst [vmem:[#allocation5 + $0x50] sm:$0xff] 0.0
          %410 = vst [vmem:[#allocation5 + $0x58] sm:$0xff] 0.0
          %411 = vst [vmem:[#allocation5 + $0x60] sm:$0xff] 0.0
          %412 = vst [vmem:[#allocation5 + $0x68] sm:$0xff] 0.0
          %413 = vst [vmem:[#allocation5 + $0x70] sm:$0xff] 0.0
          %414 = vst [vmem:[#allocation5 + $0x78] sm:$0xff] 0.0
          %v415 = vld [vmem:[%s3] sm:$0xf]
          %v416 = vld [vmem:[%s3 + $0x4] sm:$0xf]
          %v417 = vld [vmem:[%s3 + $0x8] sm:$0xf]
          %v418 = vld [vmem:[%s3 + $0xc] sm:$0xf]
          %v419 = vld [vmem:[%s3 + $0x10] sm:$0xf]
          %v420 = vld [vmem:[%s3 + $0x14] sm:$0xf]
          %v421 = vld [vmem:[%s3 + $0x18] sm:$0xf]
          %v422 = vld [vmem:[%s3 + $0x1c] sm:$0xf]
          %v423 = vld [vmem:[%s3 + $0x20] sm:$0xf]
          %v424 = vld [vmem:[%s3 + $0x24] sm:$0xf]
          %v425 = vld [vmem:[%s3 + $0x28] sm:$0xf]
          %v426 = vld [vmem:[%s3 + $0x2c] sm:$0xf]
          %v427 = vld [vmem:[%s3 + $0x30] sm:$0xf]
          %v428 = vld [vmem:[%s3 + $0x34] sm:$0xf]
          %v429 = vld [vmem:[%s3 + $0x38] sm:$0xf]
          %v430 = vld [vmem:[%s3 + $0x3c] sm:$0xf]
          %v431 = vld [vmem:[%s4] sm:$0xff]
          %v432 = vld [vmem:[%s4 + $0x8] sm:$0xf]
          %v433 = vld [vmem:[%s4 + $0xc] sm:$0xff]
          %v434 = vld [vmem:[%s4 + $0x14] sm:$0xf]
          %v435 = vld [vmem:[%s4 + $0x18] sm:$0xff]
          %v436 = vld [vmem:[%s4 + $0x20] sm:$0xf]
          %v437 = vld [vmem:[%s4 + $0x24] sm:$0xff]
          %v438 = vld [vmem:[%s4 + $0x2c] sm:$0xf]
          %v439 = vld [vmem:[%s4 + $0x30] sm:$0xff]
          %v440 = vld [vmem:[%s4 + $0x38] sm:$0xf]
          %v441 = vld [vmem:[%s4 + $0x3c] sm:$0xff]
          %v442 = vld [vmem:[%s4 + $0x44] sm:$0xf]
          %v443 = vld [vmem:[%s4 + $0x48] sm:$0xff]
          %v444 = vld [vmem:[%s4 + $0x50] sm:$0xf]
          %v445 = vld [vmem:[%s4 + $0x54] sm:$0xff]
          %v446 = vld [vmem:[%s4 + $0x5c] sm:$0xf]
          %v447 = vld [vmem:[%s4 + $0x60] sm:$0xff]
          %v448 = vld [vmem:[%s4 + $0x68] sm:$0xf]
          %v449 = vld [vmem:[%s4 + $0x6c] sm:$0xff]
          %v450 = vld [vmem:[%s4 + $0x74] sm:$0xf]
          %v451 = vld [vmem:[%s4 + $0x78] sm:$0xff]
          %v452 = vld [vmem:[%s4 + $0x80] sm:$0xf]
          %v453 = vld [vmem:[%s4 + $0x84] sm:$0xff]
          %v454 = vld [vmem:[%s4 + $0x8c] sm:$0xf]
          %v455 = vld [vmem:[%s4 + $0x90] sm:$0xff]
          %v456 = vld [vmem:[%s4 + $0x98] sm:$0xf]
          %v457 = vld [vmem:[%s4 + $0x9c] sm:$0xff]
          %v458 = vld [vmem:[%s4 + $0xa4] sm:$0xf]
          %v459 = vld [vmem:[%s4 + $0xa8] sm:$0xff]
          %v460 = vld [vmem:[%s4 + $0xb0] sm:$0xf]
          %v461 = vld [vmem:[%s4 + $0xb4] sm:$0xff]
          %v462 = vld [vmem:[%s4 + $0xbc] sm:$0xf]
          %v479 = vunpack.c.l.b16 %v415
          %v480 = vunpack.c.l.b16 %v416
          %v481 = vunpack.c.l.b16 %v417
          %v482 = vunpack.c.l.b16 %v418
          %v483 = vunpack.c.l.b16 %v419
          %v484 = vunpack.c.l.b16 %v420
          %v485 = vunpack.c.l.b16 %v421
          %v486 = vunpack.c.l.b16 %v422
          %v487 = vunpack.c.l.b16 %v423
          %v488 = vunpack.c.l.b16 %v424
          %v489 = vunpack.c.l.b16 %v425
          %v490 = vunpack.c.l.b16 %v426
          %v491 = vunpack.c.l.b16 %v427
          %v492 = vunpack.c.l.b16 %v428
          %v493 = vunpack.c.l.b16 %v429
          %v494 = vunpack.c.l.b16 %v430
          %v495 = vpack.c.b16 %v480, %v479
          %v496 = vpack.c.b16 %v482, %v481
          %v497 = vpack.c.b16 %v484, %v483
          %v498 = vpack.c.b16 %v486, %v485
          %v499 = vpack.c.b16 %v488, %v487
          %v500 = vpack.c.b16 %v490, %v489
          %v501 = vpack.c.b16 %v492, %v491
          %v502 = vpack.c.b16 %v494, %v493
          %v543 = vunpack.c.l.b16 %v431
          %v544 = vunpack.c.h.b16 %v431
          %v545 = vunpack.c.l.b16 %v432
          %v546 = vunpack.c.l.b16 %v433
          %v547 = vunpack.c.h.b16 %v433
          %v548 = vunpack.c.l.b16 %v434
          %v549 = vunpack.c.l.b16 %v435
          %v550 = vunpack.c.h.b16 %v435
          %v551 = vunpack.c.l.b16 %v436
          %v552 = vunpack.c.l.b16 %v437
          %v553 = vunpack.c.h.b16 %v437
          %v554 = vunpack.c.l.b16 %v438
          %v555 = vunpack.c.l.b16 %v439
          %v556 = vunpack.c.h.b16 %v439
          %v557 = vunpack.c.l.b16 %v440
          %v558 = vunpack.c.l.b16 %v441
          %v559 = vunpack.c.h.b16 %v441
          %v560 = vunpack.c.l.b16 %v442
          %v561 = vunpack.c.l.b16 %v443
          %v562 = vunpack.c.h.b16 %v443
          %v563 = vunpack.c.l.b16 %v444
          %v564 = vunpack.c.l.b16 %v445
          %v565 = vunpack.c.h.b16 %v445
          %v566 = vunpack.c.l.b16 %v446
          %v567 = vunpack.c.l.b16 %v447
          %v568 = vunpack.c.h.b16 %v447
          %v569 = vunpack.c.l.b16 %v448
          %v570 = vunpack.c.l.b16 %v449
          %v571 = vunpack.c.h.b16 %v449
          %v572 = vunpack.c.l.b16 %v450
          %v573 = vunpack.c.l.b16 %v451
          %v574 = vunpack.c.h.b16 %v451
          %v575 = vunpack.c.l.b16 %v452
          %v576 = vunpack.c.l.b16 %v453
          %v577 = vunpack.c.h.b16 %v453
          %v578 = vunpack.c.l.b16 %v454
          %v579 = vunpack.c.l.b16 %v455
          %v580 = vunpack.c.h.b16 %v455
          %v581 = vunpack.c.l.b16 %v456
          %v582 = vunpack.c.l.b16 %v457
          %v583 = vunpack.c.h.b16 %v457
          %v584 = vunpack.c.l.b16 %v458
          %v585 = vunpack.c.l.b16 %v459
          %v586 = vunpack.c.h.b16 %v459
          %v587 = vunpack.c.l.b16 %v460
          %v588 = vunpack.c.l.b16 %v461
          %v589 = vunpack.c.h.b16 %v461
          %v590 = vunpack.c.l.b16 %v462
          %v591 = vpack.c.b16 %v546, %v543
          %v592 = vpack.c.b16 %v547, %v544
          %v593 = vpack.c.b16 %v548, %v545
          %v594 = vpack.c.b16 %v552, %v549
          %v595 = vpack.c.b16 %v553, %v550
          %v596 = vpack.c.b16 %v554, %v551
          %v597 = vpack.c.b16 %v558, %v555
          %v598 = vpack.c.b16 %v559, %v556
          %v599 = vpack.c.b16 %v560, %v557
          %v600 = vpack.c.b16 %v564, %v561
          %v601 = vpack.c.b16 %v565, %v562
          %v602 = vpack.c.b16 %v566, %v563
          %v603 = vpack.c.b16 %v570, %v567
          %v604 = vpack.c.b16 %v571, %v568
          %v605 = vpack.c.b16 %v572, %v569
          %v606 = vpack.c.b16 %v576, %v573
          %v607 = vpack.c.b16 %v577, %v574
          %v608 = vpack.c.b16 %v578, %v575
          %v609 = vpack.c.b16 %v582, %v579
          %v610 = vpack.c.b16 %v583, %v580
          %v611 = vpack.c.b16 %v584, %v581
          %v612 = vpack.c.b16 %v588, %v585
          %v613 = vpack.c.b16 %v589, %v586
          %v614 = vpack.c.b16 %v590, %v587
          %639 = vmatpush.bf16.msra.mxu0 %v612
          %640 = vmatpush.bf16.msra.mxu0 %v609
          %641 = vmatpush.bf16.msra.mxu0 %v606
          %642 = vmatpush.bf16.msra.mxu0 %v603
          %643 = vmatpush.bf16.msra.mxu0 %v600
          %644 = vmatpush.bf16.msra.mxu0 %v597
          %645 = vmatpush.bf16.msra.mxu0 %v594
          %646 = vmatpush.bf16.msra.mxu0 %v591
          %647 = vmatmul.bf16.gmra.mxu0 %v495
          %v648 = vpop.f32.mrf.mxu0
          %v649 = vadd.f32 0.0, %v648
          %v650 = vpop.f32.mrf.mxu0
          %v651 = vadd.f32 0.0, %v650
          %652 = vmatmul.bf16.gmra.mxu0 %v496
          %v653 = vpop.f32.mrf.mxu0
          %v654 = vadd.f32 0.0, %v653
          %v655 = vpop.f32.mrf.mxu0
          %v656 = vadd.f32 0.0, %v655
          %657 = vmatmul.bf16.gmra.mxu0 %v497
          %v658 = vpop.f32.mrf.mxu0
          %v659 = vadd.f32 0.0, %v658
          %v660 = vpop.f32.mrf.mxu0
          %v661 = vadd.f32 0.0, %v660
          %662 = vmatmul.bf16.gmra.mxu0 %v498
          %v663 = vpop.f32.mrf.mxu0
          %v664 = vadd.f32 0.0, %v663
          %v665 = vpop.f32.mrf.mxu0
          %v666 = vadd.f32 0.0, %v665
          %667 = vmatmul.bf16.gmra.mxu0 %v499
          %v668 = vpop.f32.mrf.mxu0
          %v669 = vadd.f32 0.0, %v668
          %v670 = vpop.f32.mrf.mxu0
          %v671 = vadd.f32 0.0, %v670
          %672 = vmatmul.bf16.gmra.mxu0 %v500
          %v673 = vpop.f32.mrf.mxu0
          %v674 = vadd.f32 0.0, %v673
          %v675 = vpop.f32.mrf.mxu0
          %v676 = vadd.f32 0.0, %v675
          %677 = vmatmul.bf16.gmra.mxu0 %v501
          %v678 = vpop.f32.mrf.mxu0
          %v679 = vadd.f32 0.0, %v678
          %v680 = vpop.f32.mrf.mxu0
          %v681 = vadd.f32 0.0, %v680
          %682 = vmatmul.bf16.gmra.mxu0 %v502
          %v683 = vpop.f32.mrf.mxu0
          %v684 = vadd.f32 0.0, %v683
          %v685 = vpop.f32.mrf.mxu0
          %v686 = vadd.f32 0.0, %v685
          %687 = vdwg.mxu0
          %688 = vmatpush.bf16.msra.mxu0 %v613
          %689 = vmatpush.bf16.msra.mxu0 %v610
          %690 = vmatpush.bf16.msra.mxu0 %v607
          %691 = vmatpush.bf16.msra.mxu0 %v604
          %692 = vmatpush.bf16.msra.mxu0 %v601
          %693 = vmatpush.bf16.msra.mxu0 %v598
          %694 = vmatpush.bf16.msra.mxu0 %v595
          %695 = vmatpush.bf16.msra.mxu0 %v592
          %696 = vmatmul.bf16.gmra.mxu0 %v495
          %v697 = vpop.f32.mrf.mxu0
          %v698 = vadd.f32 0.0, %v697
          %v699 = vpop.f32.mrf.mxu0
          %v700 = vadd.f32 0.0, %v699
          %701 = vmatmul.bf16.gmra.mxu0 %v496
          %v702 = vpop.f32.mrf.mxu0
          %v703 = vadd.f32 0.0, %v702
          %v704 = vpop.f32.mrf.mxu0
          %v705 = vadd.f32 0.0, %v704
          %706 = vmatmul.bf16.gmra.mxu0 %v497
          %v707 = vpop.f32.mrf.mxu0
          %v708 = vadd.f32 0.0, %v707
          %v709 = vpop.f32.mrf.mxu0
          %v710 = vadd.f32 0.0, %v709
          %711 = vmatmul.bf16.gmra.mxu0 %v498
          %v712 = vpop.f32.mrf.mxu0
          %v713 = vadd.f32 0.0, %v712
          %v714 = vpop.f32.mrf.mxu0
          %v715 = vadd.f32 0.0, %v714
          %716 = vmatmul.bf16.gmra.mxu0 %v499
          %v717 = vpop.f32.mrf.mxu0
          %v718 = vadd.f32 0.0, %v717
          %v719 = vpop.f32.mrf.mxu0
          %v720 = vadd.f32 0.0, %v719
          %721 = vmatmul.bf16.gmra.mxu0 %v500
          %v722 = vpop.f32.mrf.mxu0
          %v723 = vadd.f32 0.0, %v722
          %v724 = vpop.f32.mrf.mxu0
          %v725 = vadd.f32 0.0, %v724
          %726 = vmatmul.bf16.gmra.mxu0 %v501
          %v727 = vpop.f32.mrf.mxu0
          %v728 = vadd.f32 0.0, %v727
          %v729 = vpop.f32.mrf.mxu0
          %v730 = vadd.f32 0.0, %v729
          %731 = vmatmul.bf16.gmra.mxu0 %v502
          %v732 = vpop.f32.mrf.mxu0
          %v733 = vadd.f32 0.0, %v732
          %v734 = vpop.f32.mrf.mxu0
          %v735 = vadd.f32 0.0, %v734
          %736 = vdwg.mxu0
          %737 = vmatpush.bf16.msra.mxu0 %v614
          %738 = vmatpush.bf16.msra.mxu0 %v611
          %739 = vmatpush.bf16.msra.mxu0 %v608
          %740 = vmatpush.bf16.msra.mxu0 %v605
          %741 = vmatpush.bf16.msra.mxu0 %v602
          %742 = vmatpush.bf16.msra.mxu0 %v599
          %743 = vmatpush.bf16.msra.mxu0 %v596
          %744 = vmatpush.bf16.msra.mxu0 %v593
          %745 = vmatmul.bf16.gmra.mxu0 %v495
          %v746 = vpop.f32.mrf.mxu0
          %v747 = vadd.f32 0.0, %v746
          %v748 = vpop.f32.mrf.mxu0
          %v749 = vadd.f32 0.0, %v748
          %750 = vmatmul.bf16.gmra.mxu0 %v496
          %v751 = vpop.f32.mrf.mxu0
          %v752 = vadd.f32 0.0, %v751
          %v753 = vpop.f32.mrf.mxu0
          %v754 = vadd.f32 0.0, %v753
          %755 = vmatmul.bf16.gmra.mxu0 %v497
          %v756 = vpop.f32.mrf.mxu0
          %v757 = vadd.f32 0.0, %v756
          %v758 = vpop.f32.mrf.mxu0
          %v759 = vadd.f32 0.0, %v758
          %760 = vmatmul.bf16.gmra.mxu0 %v498
          %v761 = vpop.f32.mrf.mxu0
          %v762 = vadd.f32 0.0, %v761
          %v763 = vpop.f32.mrf.mxu0
          %v764 = vadd.f32 0.0, %v763
          %765 = vmatmul.bf16.gmra.mxu0 %v499
          %v766 = vpop.f32.mrf.mxu0
          %v767 = vadd.f32 0.0, %v766
          %v768 = vpop.f32.mrf.mxu0
          %v769 = vadd.f32 0.0, %v768
          %770 = vmatmul.bf16.gmra.mxu0 %v500
          %v771 = vpop.f32.mrf.mxu0
          %v772 = vadd.f32 0.0, %v771
          %v773 = vpop.f32.mrf.mxu0
          %v774 = vadd.f32 0.0, %v773
          %775 = vmatmul.bf16.gmra.mxu0 %v501
          %v776 = vpop.f32.mrf.mxu0
          %v777 = vadd.f32 0.0, %v776
          %v778 = vpop.f32.mrf.mxu0
          %v779 = vadd.f32 0.0, %v778
          %780 = vmatmul.bf16.gmra.mxu0 %v502
          %v781 = vpop.f32.mrf.mxu0
          %v782 = vadd.f32 0.0, %v781
          %v783 = vpop.f32.mrf.mxu0
          %v784 = vadd.f32 0.0, %v783
          %785 = vdwg.mxu0
          %v786 = vpack.c.bf16 %v698, %v649
          %v787 = vpack.c.bf16 %v747, %v747
          %v788 = vpack.c.bf16 %v700, %v651
          %v789 = vpack.c.bf16 %v749, %v749
          %v790 = vpack.c.bf16 %v703, %v654
          %v791 = vpack.c.bf16 %v752, %v752
          %v792 = vpack.c.bf16 %v705, %v656
          %v793 = vpack.c.bf16 %v754, %v754
          %v794 = vpack.c.bf16 %v708, %v659
          %v795 = vpack.c.bf16 %v757, %v757
          %v796 = vpack.c.bf16 %v710, %v661
          %v797 = vpack.c.bf16 %v759, %v759
          %v798 = vpack.c.bf16 %v713, %v664
          %v799 = vpack.c.bf16 %v762, %v762
          %v800 = vpack.c.bf16 %v715, %v666
          %v801 = vpack.c.bf16 %v764, %v764
          %v802 = vpack.c.bf16 %v718, %v669
          %v803 = vpack.c.bf16 %v767, %v767
          %v804 = vpack.c.bf16 %v720, %v671
          %v805 = vpack.c.bf16 %v769, %v769
          %v806 = vpack.c.bf16 %v723, %v674
          %v807 = vpack.c.bf16 %v772, %v772
          %v808 = vpack.c.bf16 %v725, %v676
          %v809 = vpack.c.bf16 %v774, %v774
          %v810 = vpack.c.bf16 %v728, %v679
          %v811 = vpack.c.bf16 %v777, %v777
          %v812 = vpack.c.bf16 %v730, %v681
          %v813 = vpack.c.bf16 %v779, %v779
          %v814 = vpack.c.bf16 %v733, %v684
          %v815 = vpack.c.bf16 %v782, %v782
          %v816 = vpack.c.bf16 %v735, %v686
          %v817 = vpack.c.bf16 %v784, %v784
          %818 = vst [vmem:[#allocation2] sm:$0xff] %v786
          %819 = vst [vmem:[#allocation2 + $0x8] sm:$0xf] %v787
          %820 = vst [vmem:[#allocation2 + $0xc] sm:$0xff] %v788
          %821 = vst [vmem:[#allocation2 + $0x14] sm:$0xf] %v789
          %822 = vst [vmem:[#allocation2 + $0x18] sm:$0xff] %v790
          %823 = vst [vmem:[#allocation2 + $0x20] sm:$0xf] %v791
          %824 = vst [vmem:[#allocation2 + $0x24] sm:$0xff] %v792
          %825 = vst [vmem:[#allocation2 + $0x2c] sm:$0xf] %v793
          %826 = vst [vmem:[#allocation2 + $0x30] sm:$0xff] %v794
          %827 = vst [vmem:[#allocation2 + $0x38] sm:$0xf] %v795
          %828 = vst [vmem:[#allocation2 + $0x3c] sm:$0xff] %v796
          %829 = vst [vmem:[#allocation2 + $0x44] sm:$0xf] %v797
          %830 = vst [vmem:[#allocation2 + $0x48] sm:$0xff] %v798
          %831 = vst [vmem:[#allocation2 + $0x50] sm:$0xf] %v799
          %832 = vst [vmem:[#allocation2 + $0x54] sm:$0xff] %v800
          %833 = vst [vmem:[#allocation2 + $0x5c] sm:$0xf] %v801
          %834 = vst [vmem:[#allocation2 + $0x60] sm:$0xff] %v802
          %835 = vst [vmem:[#allocation2 + $0x68] sm:$0xf] %v803
          %836 = vst [vmem:[#allocation2 + $0x6c] sm:$0xff] %v804
          %837 = vst [vmem:[#allocation2 + $0x74] sm:$0xf] %v805
          %838 = vst [vmem:[#allocation2 + $0x78] sm:$0xff] %v806
          %839 = vst [vmem:[#allocation2 + $0x80] sm:$0xf] %v807
          %840 = vst [vmem:[#allocation2 + $0x84] sm:$0xff] %v808
          %841 = vst [vmem:[#allocation2 + $0x8c] sm:$0xf] %v809
          %842 = vst [vmem:[#allocation2 + $0x90] sm:$0xff] %v810
          %843 = vst [vmem:[#allocation2 + $0x98] sm:$0xf] %v811
          %844 = vst [vmem:[#allocation2 + $0x9c] sm:$0xff] %v812
          %845 = vst [vmem:[#allocation2 + $0xa4] sm:$0xf] %v813
          %846 = vst [vmem:[#allocation2 + $0xa8] sm:$0xff] %v814
          %847 = vst [vmem:[#allocation2 + $0xb0] sm:$0xf] %v815
          %848 = vst [vmem:[#allocation2 + $0xb4] sm:$0xff] %v816
          %849 = vst [vmem:[#allocation2 + $0xbc] sm:$0xf] %v817
        $region52: #{hetero_graph_conv.1} parent=47 // pred_fallthru
          _
        %s850 = sld [smem:[#allocation8 + %s41]]
        %p851 = scmp.gt.s32.totalorder %s850, 0
        // Predicated region
        $region53: #{hetero_graph_conv.1} parent=47 // pred_check
          %p852 = pneg %p851
        $region54: #{hetero_graph_conv.1} parent=47 // pred_check_branch
          %854 = sbr.rel (%p852) target = $region56
        $region55: #{hetero_graph_conv.1} parent=47 // pred_region
          %s855 = smul.u32 %s41, 128
          %s856 = sshra.s32 %s855, 7
          %s857 = sand.u32 %s855, 127
          %s858 = smul.addr %s856, 4
          %s859 = scalar_lea.vmem [#allocation2], %s858
          %v860 = vld [vmem:[%s859] sm:$0xf]
          %v861 = vld [vmem:[%s859 + $0xc] sm:$0xf]
          %v862 = vld [vmem:[%s859 + $0x18] sm:$0xf]
          %v863 = vld [vmem:[%s859 + $0x24] sm:$0xf]
          %v864 = vld [vmem:[%s859 + $0x30] sm:$0xf]
          %v865 = vld [vmem:[%s859 + $0x3c] sm:$0xf]
          %v866 = vld [vmem:[%s859 + $0x48] sm:$0xf]
          %v867 = vld [vmem:[%s859 + $0x54] sm:$0xf]
          %v868 = vld [vmem:[%s859 + $0x60] sm:$0xf]
          %v869 = vld [vmem:[%s859 + $0x6c] sm:$0xf]
          %v870 = vld [vmem:[%s859 + $0x78] sm:$0xf]
          %v871 = vld [vmem:[%s859 + $0x84] sm:$0xf]
          %v872 = vld [vmem:[%s859 + $0x90] sm:$0xf]
          %v873 = vld [vmem:[%s859 + $0x9c] sm:$0xf]
          %v874 = vld [vmem:[%s859 + $0xa8] sm:$0xf]
          %v875 = vld [vmem:[%s859 + $0xb4] sm:$0xf]
          %v876 = vld [vmem:[%s352] sm:$0xf]
          %v877 = vld [vmem:[%s352 + $0x4] sm:$0xf]
          %v878 = vld [vmem:[%s352 + $0x8] sm:$0xf]
          %v879 = vld [vmem:[%s352 + $0xc] sm:$0xf]
          %v880 = vld [vmem:[%s352 + $0x10] sm:$0xf]
          %v881 = vld [vmem:[%s352 + $0x14] sm:$0xf]
          %v882 = vld [vmem:[%s352 + $0x18] sm:$0xf]
          %v883 = vld [vmem:[%s352 + $0x1c] sm:$0xf]
          %v884 = vld [vmem:[%s352 + $0x20] sm:$0xf]
          %v885 = vld [vmem:[%s352 + $0x24] sm:$0xf]
          %v886 = vld [vmem:[%s352 + $0x28] sm:$0xf]
          %v887 = vld [vmem:[%s352 + $0x2c] sm:$0xf]
          %v888 = vld [vmem:[%s352 + $0x30] sm:$0xf]
          %v889 = vld [vmem:[%s352 + $0x34] sm:$0xf]
          %v890 = vld [vmem:[%s352 + $0x38] sm:$0xf]
          %v891 = vld [vmem:[%s352 + $0x3c] sm:$0xf]
          %s892 = scalar_lea.vmem %s5, %s41
          %v893 = vld [vmem:[%s892] sm:$0x1]
          %v895 = vperm.slane %v893, 0
          %v913 = vunpack.c.l.b16 %v876
          %v914 = vunpack.c.l.b16 %v877
          %v915 = vunpack.c.l.b16 %v878
          %v916 = vunpack.c.l.b16 %v879
          %v917 = vunpack.c.l.b16 %v880
          %v918 = vunpack.c.l.b16 %v881
          %v919 = vunpack.c.l.b16 %v882
          %v920 = vunpack.c.l.b16 %v883
          %v921 = vunpack.c.l.b16 %v884
          %v922 = vunpack.c.l.b16 %v885
          %v923 = vunpack.c.l.b16 %v886
          %v924 = vunpack.c.l.b16 %v887
          %v925 = vunpack.c.l.b16 %v888
          %v926 = vunpack.c.l.b16 %v889
          %v927 = vunpack.c.l.b16 %v890
          %v928 = vunpack.c.l.b16 %v891
          %v929 = vpack.c.b16 %v914, %v913
          %v930 = vpack.c.b16 %v916, %v915
          %v931 = vpack.c.b16 %v918, %v917
          %v932 = vpack.c.b16 %v920, %v919
          %v933 = vpack.c.b16 %v922, %v921
          %v934 = vpack.c.b16 %v924, %v923
          %v935 = vpack.c.b16 %v926, %v925
          %v936 = vpack.c.b16 %v928, %v927
          %v961 = vunpack.c.l.b16 %v860
          %v962 = vunpack.c.l.b16 %v861
          %v963 = vunpack.c.l.b16 %v862
          %v964 = vunpack.c.l.b16 %v863
          %v965 = vunpack.c.l.b16 %v864
          %v966 = vunpack.c.l.b16 %v865
          %v967 = vunpack.c.l.b16 %v866
          %v968 = vunpack.c.l.b16 %v867
          %v969 = vunpack.c.l.b16 %v868
          %v970 = vunpack.c.l.b16 %v869
          %v971 = vunpack.c.l.b16 %v870
          %v972 = vunpack.c.l.b16 %v871
          %v973 = vunpack.c.l.b16 %v872
          %v974 = vunpack.c.l.b16 %v873
          %v975 = vunpack.c.l.b16 %v874
          %v976 = vunpack.c.l.b16 %v875
          %v977 = vpack.c.b16 %v962, %v961
          %v978 = vpack.c.b16 %v964, %v963
          %v979 = vpack.c.b16 %v966, %v965
          %v980 = vpack.c.b16 %v968, %v967
          %v981 = vpack.c.b16 %v970, %v969
          %v982 = vpack.c.b16 %v972, %v971
          %v983 = vpack.c.b16 %v974, %v973
          %v984 = vpack.c.b16 %v976, %v975
          %993 = vmatpush.bf16.msra.mxu0 %v984
          %994 = vmatpush.bf16.msra.mxu0 %v983
          %995 = vmatpush.bf16.msra.mxu0 %v982
          %996 = vmatpush.bf16.msra.mxu0 %v981
          %997 = vmatpush.bf16.msra.mxu0 %v980
          %998 = vmatpush.bf16.msra.mxu0 %v979
          %999 = vmatpush.bf16.msra.mxu0 %v978
          %1000 = vmatpush.bf16.msra.mxu0 %v977
          %1001 = vmatmul.bf16.gmra.mxu0 %v929
          %v1002 = vpop.f32.mrf.mxu0
          %v1003 = vadd.f32 %v895, %v1002
          %v1004 = vpop.f32.mrf.mxu0
          %v1005 = vadd.f32 %v895, %v1004
          %1006 = vmatmul.bf16.gmra.mxu0 %v930
          %v1007 = vpop.f32.mrf.mxu0
          %v1008 = vadd.f32 %v895, %v1007
          %v1009 = vpop.f32.mrf.mxu0
          %v1010 = vadd.f32 %v895, %v1009
          %1011 = vmatmul.bf16.gmra.mxu0 %v931
          %v1012 = vpop.f32.mrf.mxu0
          %v1013 = vadd.f32 %v895, %v1012
          %v1014 = vpop.f32.mrf.mxu0
          %v1015 = vadd.f32 %v895, %v1014
          %1016 = vmatmul.bf16.gmra.mxu0 %v932
          %v1017 = vpop.f32.mrf.mxu0
          %v1018 = vadd.f32 %v895, %v1017
          %v1019 = vpop.f32.mrf.mxu0
          %v1020 = vadd.f32 %v895, %v1019
          %1021 = vmatmul.bf16.gmra.mxu0 %v933
          %v1022 = vpop.f32.mrf.mxu0
          %v1023 = vadd.f32 %v895, %v1022
          %v1024 = vpop.f32.mrf.mxu0
          %v1025 = vadd.f32 %v895, %v1024
          %1026 = vmatmul.bf16.gmra.mxu0 %v934
          %v1027 = vpop.f32.mrf.mxu0
          %v1028 = vadd.f32 %v895, %v1027
          %v1029 = vpop.f32.mrf.mxu0
          %v1030 = vadd.f32 %v895, %v1029
          %1031 = vmatmul.bf16.gmra.mxu0 %v935
          %v1032 = vpop.f32.mrf.mxu0
          %v1033 = vadd.f32 %v895, %v1032
          %v1034 = vpop.f32.mrf.mxu0
          %v1035 = vadd.f32 %v895, %v1034
          %1036 = vmatmul.bf16.gmra.mxu0 %v936
          %v1037 = vpop.f32.mrf.mxu0
          %v1038 = vadd.f32 %v895, %v1037
          %v1039 = vpop.f32.mrf.mxu0
          %v1040 = vadd.f32 %v895, %v1039
          %1041 = vdwg.mxu0
          %v1042 = vpack.c.bf16 %v1005, %v1003
          %v1043 = vpack.c.bf16 %v1010, %v1008
          %v1044 = vpack.c.bf16 %v1015, %v1013
          %v1045 = vpack.c.bf16 %v1020, %v1018
          %v1046 = vpack.c.bf16 %v1025, %v1023
          %v1047 = vpack.c.bf16 %v1030, %v1028
          %v1048 = vpack.c.bf16 %v1035, %v1033
          %v1049 = vpack.c.bf16 %v1040, %v1038
          %s1050 = smul.u32 %s41, 16
          %s1051 = smul.addr %s1050, 4
          %s1052 = scalar_lea.vmem %s6, %s1051
          %v1053 = vld [vmem:[%s1052] sm:$0xf]
          %v1054 = vld [vmem:[%s1052 + $0x4] sm:$0xf]
          %v1055 = vld [vmem:[%s1052 + $0x8] sm:$0xf]
          %v1056 = vld [vmem:[%s1052 + $0xc] sm:$0xf]
          %v1057 = vld [vmem:[%s1052 + $0x10] sm:$0xf]
          %v1058 = vld [vmem:[%s1052 + $0x14] sm:$0xf]
          %v1059 = vld [vmem:[%s1052 + $0x18] sm:$0xf]
          %v1060 = vld [vmem:[%s1052 + $0x1c] sm:$0xf]
          %v1061 = vld [vmem:[%s1052 + $0x20] sm:$0xf]
          %v1062 = vld [vmem:[%s1052 + $0x24] sm:$0xf]
          %v1063 = vld [vmem:[%s1052 + $0x28] sm:$0xf]
          %v1064 = vld [vmem:[%s1052 + $0x2c] sm:$0xf]
          %v1065 = vld [vmem:[%s1052 + $0x30] sm:$0xf]
          %v1066 = vld [vmem:[%s1052 + $0x34] sm:$0xf]
          %v1067 = vld [vmem:[%s1052 + $0x38] sm:$0xf]
          %v1068 = vld [vmem:[%s1052 + $0x3c] sm:$0xf]
          %s1069 = scalar_lea.vmem %s7, %s41
          %v1070 = vld [vmem:[%s1069] sm:$0x1]
          %v1072 = vperm.slane %v1070, 0
          %v1090 = vunpack.c.l.b16 %v1053
          %v1091 = vunpack.c.l.b16 %v1054
          %v1092 = vunpack.c.l.b16 %v1055
          %v1093 = vunpack.c.l.b16 %v1056
          %v1094 = vunpack.c.l.b16 %v1057
          %v1095 = vunpack.c.l.b16 %v1058
          %v1096 = vunpack.c.l.b16 %v1059
          %v1097 = vunpack.c.l.b16 %v1060
          %v1098 = vunpack.c.l.b16 %v1061
          %v1099 = vunpack.c.l.b16 %v1062
          %v1100 = vunpack.c.l.b16 %v1063
          %v1101 = vunpack.c.l.b16 %v1064
          %v1102 = vunpack.c.l.b16 %v1065
          %v1103 = vunpack.c.l.b16 %v1066
          %v1104 = vunpack.c.l.b16 %v1067
          %v1105 = vunpack.c.l.b16 %v1068
          %v1106 = vpack.c.b16 %v1091, %v1090
          %v1107 = vpack.c.b16 %v1093, %v1092
          %v1108 = vpack.c.b16 %v1095, %v1094
          %v1109 = vpack.c.b16 %v1097, %v1096
          %v1110 = vpack.c.b16 %v1099, %v1098
          %v1111 = vpack.c.b16 %v1101, %v1100
          %v1112 = vpack.c.b16 %v1103, %v1102
          %v1113 = vpack.c.b16 %v1105, %v1104
          %1122 = vmatpush.bf16.msra.mxu0 %v1113
          %1123 = vmatpush.bf16.msra.mxu0 %v1112
          %1124 = vmatpush.bf16.msra.mxu0 %v1111
          %1125 = vmatpush.bf16.msra.mxu0 %v1110
          %1126 = vmatpush.bf16.msra.mxu0 %v1109
          %1127 = vmatpush.bf16.msra.mxu0 %v1108
          %1128 = vmatpush.bf16.msra.mxu0 %v1107
          %1129 = vmatpush.bf16.msra.mxu0 %v1106
          %1130 = vmatmul.bf16.gmra.mxu0 %v1042
          %v1131 = vpop.f32.mrf.mxu0
          %v1132 = vadd.f32 %v1072, %v1131
          %v1133 = vpop.f32.mrf.mxu0
          %v1134 = vadd.f32 %v1072, %v1133
          %1135 = vmatmul.bf16.gmra.mxu0 %v1043
          %v1136 = vpop.f32.mrf.mxu0
          %v1137 = vadd.f32 %v1072, %v1136
          %v1138 = vpop.f32.mrf.mxu0
          %v1139 = vadd.f32 %v1072, %v1138
          %1140 = vmatmul.bf16.gmra.mxu0 %v1044
          %v1141 = vpop.f32.mrf.mxu0
          %v1142 = vadd.f32 %v1072, %v1141
          %v1143 = vpop.f32.mrf.mxu0
          %v1144 = vadd.f32 %v1072, %v1143
          %1145 = vmatmul.bf16.gmra.mxu0 %v1045
          %v1146 = vpop.f32.mrf.mxu0
          %v1147 = vadd.f32 %v1072, %v1146
          %v1148 = vpop.f32.mrf.mxu0
          %v1149 = vadd.f32 %v1072, %v1148
          %1150 = vmatmul.bf16.gmra.mxu0 %v1046
          %v1151 = vpop.f32.mrf.mxu0
          %v1152 = vadd.f32 %v1072, %v1151
          %v1153 = vpop.f32.mrf.mxu0
          %v1154 = vadd.f32 %v1072, %v1153
          %1155 = vmatmul.bf16.gmra.mxu0 %v1047
          %v1156 = vpop.f32.mrf.mxu0
          %v1157 = vadd.f32 %v1072, %v1156
          %v1158 = vpop.f32.mrf.mxu0
          %v1159 = vadd.f32 %v1072, %v1158
          %1160 = vmatmul.bf16.gmra.mxu0 %v1048
          %v1161 = vpop.f32.mrf.mxu0
          %v1162 = vadd.f32 %v1072, %v1161
          %v1163 = vpop.f32.mrf.mxu0
          %v1164 = vadd.f32 %v1072, %v1163
          %1165 = vmatmul.bf16.gmra.mxu0 %v1049
          %v1166 = vpop.f32.mrf.mxu0
          %v1167 = vadd.f32 %v1072, %v1166
          %v1168 = vpop.f32.mrf.mxu0
          %v1169 = vadd.f32 %v1072, %v1168
          %1170 = vdwg.mxu0
          %v1171 = vtanh.pop %v1132
          %v1172 = vtanh.pop %v1134
          %v1173 = vtanh.pop %v1137
          %v1174 = vtanh.pop %v1139
          %v1175 = vtanh.pop %v1142
          %v1176 = vtanh.pop %v1144
          %v1177 = vtanh.pop %v1147
          %v1178 = vtanh.pop %v1149
          %v1179 = vtanh.pop %v1152
          %v1180 = vtanh.pop %v1154
          %v1181 = vtanh.pop %v1157
          %v1182 = vtanh.pop %v1159
          %v1183 = vtanh.pop %v1162
          %v1184 = vtanh.pop %v1164
          %v1185 = vtanh.pop %v1167
          %v1186 = vtanh.pop %v1169
          %s1187 = scalar_lea.vmem %s8, %s41
          %v1188 = vld [vmem:[%s1187] sm:$0x1]
          %v1190 = vperm.slane %v1188, 0
          %v1192 = vmul.f32 %v1171, %v1190
          %v1193 = vmul.f32 %v1172, %v1190
          %v1194 = vmul.f32 %v1173, %v1190
          %v1195 = vmul.f32 %v1174, %v1190
          %v1196 = vmul.f32 %v1175, %v1190
          %v1197 = vmul.f32 %v1176, %v1190
          %v1198 = vmul.f32 %v1177, %v1190
          %v1199 = vmul.f32 %v1178, %v1190
          %v1200 = vmul.f32 %v1179, %v1190
          %v1201 = vmul.f32 %v1180, %v1190
          %v1202 = vmul.f32 %v1181, %v1190
          %v1203 = vmul.f32 %v1182, %v1190
          %v1204 = vmul.f32 %v1183, %v1190
          %v1205 = vmul.f32 %v1184, %v1190
          %v1206 = vmul.f32 %v1185, %v1190
          %v1207 = vmul.f32 %v1186, %v1190
          %1208 = vadd.xlane.f32.xlu0 %v1192
          %v1209 = vpop.xlane.xlu0 %1208
          %1210 = vadd.xlane.f32.xlu0 %v1193
          %v1211 = vpop.xlane.xlu0 %1210
          %1212 = vadd.xlane.f32.xlu0 %v1194
          %v1213 = vpop.xlane.xlu0 %1212
          %1214 = vadd.xlane.f32.xlu0 %v1195
          %v1215 = vpop.xlane.xlu0 %1214
          %1216 = vadd.xlane.f32.xlu0 %v1196
          %v1217 = vpop.xlane.xlu0 %1216
          %1218 = vadd.xlane.f32.xlu0 %v1197
          %v1219 = vpop.xlane.xlu0 %1218
          %1220 = vadd.xlane.f32.xlu0 %v1198
          %v1221 = vpop.xlane.xlu0 %1220
          %1222 = vadd.xlane.f32.xlu0 %v1199
          %v1223 = vpop.xlane.xlu0 %1222
          %1224 = vadd.xlane.f32.xlu0 %v1200
          %v1225 = vpop.xlane.xlu0 %1224
          %1226 = vadd.xlane.f32.xlu0 %v1201
          %v1227 = vpop.xlane.xlu0 %1226
          %1228 = vadd.xlane.f32.xlu0 %v1202
          %v1229 = vpop.xlane.xlu0 %1228
          %1230 = vadd.xlane.f32.xlu0 %v1203
          %v1231 = vpop.xlane.xlu0 %1230
          %1232 = vadd.xlane.f32.xlu0 %v1204
          %v1233 = vpop.xlane.xlu0 %1232
          %1234 = vadd.xlane.f32.xlu0 %v1205
          %v1235 = vpop.xlane.xlu0 %1234
          %1236 = vadd.xlane.f32.xlu0 %v1206
          %v1237 = vpop.xlane.xlu0 %1236
          %1238 = vadd.xlane.f32.xlu0 %v1207
          %v1239 = vpop.xlane.xlu0 %1238
          %v1240 = vld [vmem:[#allocation3] sm:$0xff]
          %v1241 = vld [vmem:[#allocation3 + $0x8] sm:$0xff]
          %v1242 = vld [vmem:[#allocation3 + $0x10] sm:$0xff]
          %v1243 = vld [vmem:[#allocation3 + $0x18] sm:$0xff]
          %v1244 = vld [vmem:[#allocation3 + $0x20] sm:$0xff]
          %v1245 = vld [vmem:[#allocation3 + $0x28] sm:$0xff]
          %v1246 = vld [vmem:[#allocation3 + $0x30] sm:$0xff]
          %v1247 = vld [vmem:[#allocation3 + $0x38] sm:$0xff]
          %v1248 = vld [vmem:[#allocation3 + $0x40] sm:$0xff]
          %v1249 = vld [vmem:[#allocation3 + $0x48] sm:$0xff]
          %v1250 = vld [vmem:[#allocation3 + $0x50] sm:$0xff]
          %v1251 = vld [vmem:[#allocation3 + $0x58] sm:$0xff]
          %v1252 = vld [vmem:[#allocation3 + $0x60] sm:$0xff]
          %v1253 = vld [vmem:[#allocation3 + $0x68] sm:$0xff]
          %v1254 = vld [vmem:[#allocation3 + $0x70] sm:$0xff]
          %v1255 = vld [vmem:[#allocation3 + $0x78] sm:$0xff]
          %v1256 = vmax.f32 %v1240, %v1209
          %v1257 = vmax.f32 %v1241, %v1211
          %v1258 = vmax.f32 %v1242, %v1213
          %v1259 = vmax.f32 %v1243, %v1215
          %v1260 = vmax.f32 %v1244, %v1217
          %v1261 = vmax.f32 %v1245, %v1219
          %v1262 = vmax.f32 %v1246, %v1221
          %v1263 = vmax.f32 %v1247, %v1223
          %v1264 = vmax.f32 %v1248, %v1225
          %v1265 = vmax.f32 %v1249, %v1227
          %v1266 = vmax.f32 %v1250, %v1229
          %v1267 = vmax.f32 %v1251, %v1231
          %v1268 = vmax.f32 %v1252, %v1233
          %v1269 = vmax.f32 %v1253, %v1235
          %v1270 = vmax.f32 %v1254, %v1237
          %v1271 = vmax.f32 %v1255, %v1239
          %v1272 = vsub.f32 %v1240, %v1256
          %v1273 = vsub.f32 %v1241, %v1257
          %v1274 = vsub.f32 %v1242, %v1258
          %v1275 = vsub.f32 %v1243, %v1259
          %v1276 = vsub.f32 %v1244, %v1260
          %v1277 = vsub.f32 %v1245, %v1261
          %v1278 = vsub.f32 %v1246, %v1262
          %v1279 = vsub.f32 %v1247, %v1263
          %v1280 = vsub.f32 %v1248, %v1264
          %v1281 = vsub.f32 %v1249, %v1265
          %v1282 = vsub.f32 %v1250, %v1266
          %v1283 = vsub.f32 %v1251, %v1267
          %v1284 = vsub.f32 %v1252, %v1268
          %v1285 = vsub.f32 %v1253, %v1269
          %v1286 = vsub.f32 %v1254, %v1270
          %v1287 = vsub.f32 %v1255, %v1271
          %v1288 = vmul.f32 %v1272, 1.442695
          %v1289 = vpow.pop %v1288
          %v1290 = vmul.f32 %v1273, 1.442695
          %v1291 = vpow.pop %v1290
          %v1292 = vmul.f32 %v1274, 1.442695
          %v1293 = vpow.pop %v1292
          %v1294 = vmul.f32 %v1275, 1.442695
          %v1295 = vpow.pop %v1294
          %v1296 = vmul.f32 %v1276, 1.442695
          %v1297 = vpow.pop %v1296
          %v1298 = vmul.f32 %v1277, 1.442695
          %v1299 = vpow.pop %v1298
          %v1300 = vmul.f32 %v1278, 1.442695
          %v1301 = vpow.pop %v1300
          %v1302 = vmul.f32 %v1279, 1.442695
          %v1303 = vpow.pop %v1302
          %v1304 = vmul.f32 %v1280, 1.442695
          %v1305 = vpow.pop %v1304
          %v1306 = vmul.f32 %v1281, 1.442695
          %v1307 = vpow.pop %v1306
          %v1308 = vmul.f32 %v1282, 1.442695
          %v1309 = vpow.pop %v1308
          %v1310 = vmul.f32 %v1283, 1.442695
          %v1311 = vpow.pop %v1310
          %v1312 = vmul.f32 %v1284, 1.442695
          %v1313 = vpow.pop %v1312
          %v1314 = vmul.f32 %v1285, 1.442695
          %v1315 = vpow.pop %v1314
          %v1316 = vmul.f32 %v1286, 1.442695
          %v1317 = vpow.pop %v1316
          %v1318 = vmul.f32 %v1287, 1.442695
          %v1319 = vpow.pop %v1318
          %v1320 = vsub.f32 %v1209, %v1256
          %v1321 = vsub.f32 %v1211, %v1257
          %v1322 = vsub.f32 %v1213, %v1258
          %v1323 = vsub.f32 %v1215, %v1259
          %v1324 = vsub.f32 %v1217, %v1260
          %v1325 = vsub.f32 %v1219, %v1261
          %v1326 = vsub.f32 %v1221, %v1262
          %v1327 = vsub.f32 %v1223, %v1263
          %v1328 = vsub.f32 %v1225, %v1264
          %v1329 = vsub.f32 %v1227, %v1265
          %v1330 = vsub.f32 %v1229, %v1266
          %v1331 = vsub.f32 %v1231, %v1267
          %v1332 = vsub.f32 %v1233, %v1268
          %v1333 = vsub.f32 %v1235, %v1269
          %v1334 = vsub.f32 %v1237, %v1270
          %v1335 = vsub.f32 %v1239, %v1271
          %v1336 = vmul.f32 %v1320, 1.442695
          %v1337 = vpow.pop %v1336
          %v1338 = vmul.f32 %v1321, 1.442695
          %v1339 = vpow.pop %v1338
          %v1340 = vmul.f32 %v1322, 1.442695
          %v1341 = vpow.pop %v1340
          %v1342 = vmul.f32 %v1323, 1.442695
          %v1343 = vpow.pop %v1342
          %v1344 = vmul.f32 %v1324, 1.442695
          %v1345 = vpow.pop %v1344
          %v1346 = vmul.f32 %v1325, 1.442695
          %v1347 = vpow.pop %v1346
          %v1348 = vmul.f32 %v1326, 1.442695
          %v1349 = vpow.pop %v1348
          %v1350 = vmul.f32 %v1327, 1.442695
          %v1351 = vpow.pop %v1350
          %v1352 = vmul.f32 %v1328, 1.442695
          %v1353 = vpow.pop %v1352
          %v1354 = vmul.f32 %v1329, 1.442695
          %v1355 = vpow.pop %v1354
          %v1356 = vmul.f32 %v1330, 1.442695
          %v1357 = vpow.pop %v1356
          %v1358 = vmul.f32 %v1331, 1.442695
          %v1359 = vpow.pop %v1358
          %v1360 = vmul.f32 %v1332, 1.442695
          %v1361 = vpow.pop %v1360
          %v1362 = vmul.f32 %v1333, 1.442695
          %v1363 = vpow.pop %v1362
          %v1364 = vmul.f32 %v1334, 1.442695
          %v1365 = vpow.pop %v1364
          %v1366 = vmul.f32 %v1335, 1.442695
          %v1367 = vpow.pop %v1366
          %v1368 = vld [vmem:[#allocation4] sm:$0xff]
          %v1369 = vld [vmem:[#allocation4 + $0x8] sm:$0xff]
          %v1370 = vld [vmem:[#allocation4 + $0x10] sm:$0xff]
          %v1371 = vld [vmem:[#allocation4 + $0x18] sm:$0xff]
          %v1372 = vld [vmem:[#allocation4 + $0x20] sm:$0xff]
          %v1373 = vld [vmem:[#allocation4 + $0x28] sm:$0xff]
          %v1374 = vld [vmem:[#allocation4 + $0x30] sm:$0xff]
          %v1375 = vld [vmem:[#allocation4 + $0x38] sm:$0xff]
          %v1376 = vld [vmem:[#allocation4 + $0x40] sm:$0xff]
          %v1377 = vld [vmem:[#allocation4 + $0x48] sm:$0xff]
          %v1378 = vld [vmem:[#allocation4 + $0x50] sm:$0xff]
          %v1379 = vld [vmem:[#allocation4 + $0x58] sm:$0xff]
          %v1380 = vld [vmem:[#allocation4 + $0x60] sm:$0xff]
          %v1381 = vld [vmem:[#allocation4 + $0x68] sm:$0xff]
          %v1382 = vld [vmem:[#allocation4 + $0x70] sm:$0xff]
          %v1383 = vld [vmem:[#allocation4 + $0x78] sm:$0xff]
          %v1384 = vmul.f32 %v1289, %v1368
          %v1385 = vmul.f32 %v1291, %v1369
          %v1386 = vmul.f32 %v1293, %v1370
          %v1387 = vmul.f32 %v1295, %v1371
          %v1388 = vmul.f32 %v1297, %v1372
          %v1389 = vmul.f32 %v1299, %v1373
          %v1390 = vmul.f32 %v1301, %v1374
          %v1391 = vmul.f32 %v1303, %v1375
          %v1392 = vmul.f32 %v1305, %v1376
          %v1393 = vmul.f32 %v1307, %v1377
          %v1394 = vmul.f32 %v1309, %v1378
          %v1395 = vmul.f32 %v1311, %v1379
          %v1396 = vmul.f32 %v1313, %v1380
          %v1397 = vmul.f32 %v1315, %v1381
          %v1398 = vmul.f32 %v1317, %v1382
          %v1399 = vmul.f32 %v1319, %v1383
          %v1400 = vadd.f32 %v1384, %v1337
          %v1401 = vadd.f32 %v1385, %v1339
          %v1402 = vadd.f32 %v1386, %v1341
          %v1403 = vadd.f32 %v1387, %v1343
          %v1404 = vadd.f32 %v1388, %v1345
          %v1405 = vadd.f32 %v1389, %v1347
          %v1406 = vadd.f32 %v1390, %v1349
          %v1407 = vadd.f32 %v1391, %v1351
          %v1408 = vadd.f32 %v1392, %v1353
          %v1409 = vadd.f32 %v1393, %v1355
          %v1410 = vadd.f32 %v1394, %v1357
          %v1411 = vadd.f32 %v1395, %v1359
          %v1412 = vadd.f32 %v1396, %v1361
          %v1413 = vadd.f32 %v1397, %v1363
          %v1414 = vadd.f32 %v1398, %v1365
          %v1415 = vadd.f32 %v1399, %v1367
          %vm1416 = vcmask 7168
          %1417 = vst.msk [vmem:[#allocation4] sm:$0xff] %vm1416, %v1400
          %1418 = vst.msk [vmem:[#allocation4 + $0x8] sm:$0xff] %vm1416, %v1401
          %1419 = vst.msk [vmem:[#allocation4 + $0x10] sm:$0xff] %vm1416, %v1402
          %1420 = vst.msk [vmem:[#allocation4 + $0x18] sm:$0xff] %vm1416, %v1403
          %1421 = vst.msk [vmem:[#allocation4 + $0x20] sm:$0xff] %vm1416, %v1404
          %1422 = vst.msk [vmem:[#allocation4 + $0x28] sm:$0xff] %vm1416, %v1405
          %1423 = vst.msk [vmem:[#allocation4 + $0x30] sm:$0xff] %vm1416, %v1406
          %1424 = vst.msk [vmem:[#allocation4 + $0x38] sm:$0xff] %vm1416, %v1407
          %1425 = vst.msk [vmem:[#allocation4 + $0x40] sm:$0xff] %vm1416, %v1408
          %1426 = vst.msk [vmem:[#allocation4 + $0x48] sm:$0xff] %vm1416, %v1409
          %1427 = vst.msk [vmem:[#allocation4 + $0x50] sm:$0xff] %vm1416, %v1410
          %1428 = vst.msk [vmem:[#allocation4 + $0x58] sm:$0xff] %vm1416, %v1411
          %1429 = vst.msk [vmem:[#allocation4 + $0x60] sm:$0xff] %vm1416, %v1412
          %1430 = vst.msk [vmem:[#allocation4 + $0x68] sm:$0xff] %vm1416, %v1413
          %1431 = vst.msk [vmem:[#allocation4 + $0x70] sm:$0xff] %vm1416, %v1414
          %1432 = vst.msk [vmem:[#allocation4 + $0x78] sm:$0xff] %vm1416, %v1415
          %v1433 = vld [vmem:[#allocation5] sm:$0xff]
          %v1434 = vld [vmem:[#allocation5 + $0x8] sm:$0xff]
          %v1435 = vld [vmem:[#allocation5 + $0x10] sm:$0xff]
          %v1436 = vld [vmem:[#allocation5 + $0x18] sm:$0xff]
          %v1437 = vld [vmem:[#allocation5 + $0x20] sm:$0xff]
          %v1438 = vld [vmem:[#allocation5 + $0x28] sm:$0xff]
          %v1439 = vld [vmem:[#allocation5 + $0x30] sm:$0xff]
          %v1440 = vld [vmem:[#allocation5 + $0x38] sm:$0xff]
          %v1441 = vld [vmem:[#allocation5 + $0x40] sm:$0xff]
          %v1442 = vld [vmem:[#allocation5 + $0x48] sm:$0xff]
          %v1443 = vld [vmem:[#allocation5 + $0x50] sm:$0xff]
          %v1444 = vld [vmem:[#allocation5 + $0x58] sm:$0xff]
          %v1445 = vld [vmem:[#allocation5 + $0x60] sm:$0xff]
          %v1446 = vld [vmem:[#allocation5 + $0x68] sm:$0xff]
          %v1447 = vld [vmem:[#allocation5 + $0x70] sm:$0xff]
          %v1448 = vld [vmem:[#allocation5 + $0x78] sm:$0xff]
          %1450 = vset.pattern.permute.xlu0 0
          %1451 = vperm.xlu0 %1450, %v1289
          %v1452 = vpop.permute.xlu0 %1451
          %1455 = vset.pattern.permute.xlu0 0
          %1456 = vperm.xlu0 %1455, %v1291
          %v1457 = vpop.permute.xlu0 %1456
          %1460 = vset.pattern.permute.xlu0 0
          %1461 = vperm.xlu0 %1460, %v1293
          %v1462 = vpop.permute.xlu0 %1461
          %1465 = vset.pattern.permute.xlu0 0
          %1466 = vperm.xlu0 %1465, %v1295
          %v1467 = vpop.permute.xlu0 %1466
          %1470 = vset.pattern.permute.xlu0 0
          %1471 = vperm.xlu0 %1470, %v1297
          %v1472 = vpop.permute.xlu0 %1471
          %1475 = vset.pattern.permute.xlu0 0
          %1476 = vperm.xlu0 %1475, %v1299
          %v1477 = vpop.permute.xlu0 %1476
          %1480 = vset.pattern.permute.xlu0 0
          %1481 = vperm.xlu0 %1480, %v1301
          %v1482 = vpop.permute.xlu0 %1481
          %1485 = vset.pattern.permute.xlu0 0
          %1486 = vperm.xlu0 %1485, %v1303
          %v1487 = vpop.permute.xlu0 %1486
          %1490 = vset.pattern.permute.xlu0 0
          %1491 = vperm.xlu0 %1490, %v1305
          %v1492 = vpop.permute.xlu0 %1491
          %1495 = vset.pattern.permute.xlu0 0
          %1496 = vperm.xlu0 %1495, %v1307
          %v1497 = vpop.permute.xlu0 %1496
          %1500 = vset.pattern.permute.xlu0 0
          %1501 = vperm.xlu0 %1500, %v1309
          %v1502 = vpop.permute.xlu0 %1501
          %1505 = vset.pattern.permute.xlu0 0
          %1506 = vperm.xlu0 %1505, %v1311
          %v1507 = vpop.permute.xlu0 %1506
          %1510 = vset.pattern.permute.xlu0 0
          %1511 = vperm.xlu0 %1510, %v1313
          %v1512 = vpop.permute.xlu0 %1511
          %1515 = vset.pattern.permute.xlu0 0
          %1516 = vperm.xlu0 %1515, %v1315
          %v1517 = vpop.permute.xlu0 %1516
          %1520 = vset.pattern.permute.xlu0 0
          %1521 = vperm.xlu0 %1520, %v1317
          %v1522 = vpop.permute.xlu0 %1521
          %1525 = vset.pattern.permute.xlu0 0
          %1526 = vperm.xlu0 %1525, %v1319
          %v1527 = vpop.permute.xlu0 %1526
          %v1529 = vmul.f32 %v1452, %v1433
          %v1530 = vmul.f32 %v1457, %v1434
          %v1531 = vmul.f32 %v1462, %v1435
          %v1532 = vmul.f32 %v1467, %v1436
          %v1533 = vmul.f32 %v1472, %v1437
          %v1534 = vmul.f32 %v1477, %v1438
          %v1535 = vmul.f32 %v1482, %v1439
          %v1536 = vmul.f32 %v1487, %v1440
          %v1537 = vmul.f32 %v1492, %v1441
          %v1538 = vmul.f32 %v1497, %v1442
          %v1539 = vmul.f32 %v1502, %v1443
          %v1540 = vmul.f32 %v1507, %v1444
          %v1541 = vmul.f32 %v1512, %v1445
          %v1542 = vmul.f32 %v1517, %v1446
          %v1543 = vmul.f32 %v1522, %v1447
          %v1544 = vmul.f32 %v1527, %v1448
          %1546 = vset.pattern.permute.xlu0 0
          %1547 = vperm.xlu0 %1546, %v1337
          %v1548 = vpop.permute.xlu0 %1547
          %1551 = vset.pattern.permute.xlu0 0
          %1552 = vperm.xlu0 %1551, %v1339
          %v1553 = vpop.permute.xlu0 %1552
          %1556 = vset.pattern.permute.xlu0 0
          %1557 = vperm.xlu0 %1556, %v1341
          %v1558 = vpop.permute.xlu0 %1557
          %1561 = vset.pattern.permute.xlu0 0
          %1562 = vperm.xlu0 %1561, %v1343
          %v1563 = vpop.permute.xlu0 %1562
          %1566 = vset.pattern.permute.xlu0 0
          %1567 = vperm.xlu0 %1566, %v1345
          %v1568 = vpop.permute.xlu0 %1567
          %1571 = vset.pattern.permute.xlu0 0
          %1572 = vperm.xlu0 %1571, %v1347
          %v1573 = vpop.permute.xlu0 %1572
          %1576 = vset.pattern.permute.xlu0 0
          %1577 = vperm.xlu0 %1576, %v1349
          %v1578 = vpop.permute.xlu0 %1577
          %1581 = vset.pattern.permute.xlu0 0
          %1582 = vperm.xlu0 %1581, %v1351
          %v1583 = vpop.permute.xlu0 %1582
          %1586 = vset.pattern.permute.xlu0 0
          %1587 = vperm.xlu0 %1586, %v1353
          %v1588 = vpop.permute.xlu0 %1587
          %1591 = vset.pattern.permute.xlu0 0
          %1592 = vperm.xlu0 %1591, %v1355
          %v1593 = vpop.permute.xlu0 %1592
          %1596 = vset.pattern.permute.xlu0 0
          %1597 = vperm.xlu0 %1596, %v1357
          %v1598 = vpop.permute.xlu0 %1597
          %1601 = vset.pattern.permute.xlu0 0
          %1602 = vperm.xlu0 %1601, %v1359
          %v1603 = vpop.permute.xlu0 %1602
          %1606 = vset.pattern.permute.xlu0 0
          %1607 = vperm.xlu0 %1606, %v1361
          %v1608 = vpop.permute.xlu0 %1607
          %1611 = vset.pattern.permute.xlu0 0
          %1612 = vperm.xlu0 %1611, %v1363
          %v1613 = vpop.permute.xlu0 %1612
          %1616 = vset.pattern.permute.xlu0 0
          %1617 = vperm.xlu0 %1616, %v1365
          %v1618 = vpop.permute.xlu0 %1617
          %1621 = vset.pattern.permute.xlu0 0
          %1622 = vperm.xlu0 %1621, %v1367
          %v1623 = vpop.permute.xlu0 %1622
          %v1625 = vmul.f32 %v1548, %v1003
          %v1626 = vmul.f32 %v1553, %v1005
          %v1627 = vmul.f32 %v1558, %v1008
          %v1628 = vmul.f32 %v1563, %v1010
          %v1629 = vmul.f32 %v1568, %v1013
          %v1630 = vmul.f32 %v1573, %v1015
          %v1631 = vmul.f32 %v1578, %v1018
          %v1632 = vmul.f32 %v1583, %v1020
          %v1633 = vmul.f32 %v1588, %v1023
          %v1634 = vmul.f32 %v1593, %v1025
          %v1635 = vmul.f32 %v1598, %v1028
          %v1636 = vmul.f32 %v1603, %v1030
          %v1637 = vmul.f32 %v1608, %v1033
          %v1638 = vmul.f32 %v1613, %v1035
          %v1639 = vmul.f32 %v1618, %v1038
          %v1640 = vmul.f32 %v1623, %v1040
          %v1641 = vadd.f32 %v1529, %v1625
          %v1642 = vadd.f32 %v1530, %v1626
          %v1643 = vadd.f32 %v1531, %v1627
          %v1644 = vadd.f32 %v1532, %v1628
          %v1645 = vadd.f32 %v1533, %v1629
          %v1646 = vadd.f32 %v1534, %v1630
          %v1647 = vadd.f32 %v1535, %v1631
          %v1648 = vadd.f32 %v1536, %v1632
          %v1649 = vadd.f32 %v1537, %v1633
          %v1650 = vadd.f32 %v1538, %v1634
          %v1651 = vadd.f32 %v1539, %v1635
          %v1652 = vadd.f32 %v1540, %v1636
          %v1653 = vadd.f32 %v1541, %v1637
          %v1654 = vadd.f32 %v1542, %v1638
          %v1655 = vadd.f32 %v1543, %v1639
          %v1656 = vadd.f32 %v1544, %v1640
          %1657 = vst [vmem:[#allocation5] sm:$0xff] %v1641
          %1658 = vst [vmem:[#allocation5 + $0x8] sm:$0xff] %v1642
          %1659 = vst [vmem:[#allocation5 + $0x10] sm:$0xff] %v1643
          %1660 = vst [vmem:[#allocation5 + $0x18] sm:$0xff] %v1644
          %1661 = vst [vmem:[#allocation5 + $0x20] sm:$0xff] %v1645
          %1662 = vst [vmem:[#allocation5 + $0x28] sm:$0xff] %v1646
          %1663 = vst [vmem:[#allocation5 + $0x30] sm:$0xff] %v1647
          %1664 = vst [vmem:[#allocation5 + $0x38] sm:$0xff] %v1648
          %1665 = vst [vmem:[#allocation5 + $0x40] sm:$0xff] %v1649
          %1666 = vst [vmem:[#allocation5 + $0x48] sm:$0xff] %v1650
          %1667 = vst [vmem:[#allocation5 + $0x50] sm:$0xff] %v1651
          %1668 = vst [vmem:[#allocation5 + $0x58] sm:$0xff] %v1652
          %1669 = vst [vmem:[#allocation5 + $0x60] sm:$0xff] %v1653
          %1670 = vst [vmem:[#allocation5 + $0x68] sm:$0xff] %v1654
          %1671 = vst [vmem:[#allocation5 + $0x70] sm:$0xff] %v1655
          %1672 = vst [vmem:[#allocation5 + $0x78] sm:$0xff] %v1656
          %1673 = vst.msk [vmem:[#allocation3] sm:$0xff] %vm1416, %v1256
          %1674 = vst.msk [vmem:[#allocation3 + $0x8] sm:$0xff] %vm1416, %v1257
          %1675 = vst.msk [vmem:[#allocation3 + $0x10] sm:$0xff] %vm1416, %v1258
          %1676 = vst.msk [vmem:[#allocation3 + $0x18] sm:$0xff] %vm1416, %v1259
          %1677 = vst.msk [vmem:[#allocation3 + $0x20] sm:$0xff] %vm1416, %v1260
          %1678 = vst.msk [vmem:[#allocation3 + $0x28] sm:$0xff] %vm1416, %v1261
          %1679 = vst.msk [vmem:[#allocation3 + $0x30] sm:$0xff] %vm1416, %v1262
          %1680 = vst.msk [vmem:[#allocation3 + $0x38] sm:$0xff] %vm1416, %v1263
          %1681 = vst.msk [vmem:[#allocation3 + $0x40] sm:$0xff] %vm1416, %v1264
          %1682 = vst.msk [vmem:[#allocation3 + $0x48] sm:$0xff] %vm1416, %v1265
          %1683 = vst.msk [vmem:[#allocation3 + $0x50] sm:$0xff] %vm1416, %v1266
          %1684 = vst.msk [vmem:[#allocation3 + $0x58] sm:$0xff] %vm1416, %v1267
          %1685 = vst.msk [vmem:[#allocation3 + $0x60] sm:$0xff] %vm1416, %v1268
          %1686 = vst.msk [vmem:[#allocation3 + $0x68] sm:$0xff] %vm1416, %v1269
          %1687 = vst.msk [vmem:[#allocation3 + $0x70] sm:$0xff] %vm1416, %v1270
          %1688 = vst.msk [vmem:[#allocation3 + $0x78] sm:$0xff] %vm1416, %v1271
          %s1689 = scalar_lea.vmem [#allocation6], %s855
          %1690 = vst.msk [vmem:[%s1689] sm:$0xff] %vm1416, %v1209
          %1691 = vst.msk [vmem:[%s1689 + $0x8] sm:$0xff] %vm1416, %v1211
          %1692 = vst.msk [vmem:[%s1689 + $0x10] sm:$0xff] %vm1416, %v1213
          %1693 = vst.msk [vmem:[%s1689 + $0x18] sm:$0xff] %vm1416, %v1215
          %1694 = vst.msk [vmem:[%s1689 + $0x20] sm:$0xff] %vm1416, %v1217
          %1695 = vst.msk [vmem:[%s1689 + $0x28] sm:$0xff] %vm1416, %v1219
          %1696 = vst.msk [vmem:[%s1689 + $0x30] sm:$0xff] %vm1416, %v1221
          %1697 = vst.msk [vmem:[%s1689 + $0x38] sm:$0xff] %vm1416, %v1223
          %1698 = vst.msk [vmem:[%s1689 + $0x40] sm:$0xff] %vm1416, %v1225
          %1699 = vst.msk [vmem:[%s1689 + $0x48] sm:$0xff] %vm1416, %v1227
          %1700 = vst.msk [vmem:[%s1689 + $0x50] sm:$0xff] %vm1416, %v1229
          %1701 = vst.msk [vmem:[%s1689 + $0x58] sm:$0xff] %vm1416, %v1231
          %1702 = vst.msk [vmem:[%s1689 + $0x60] sm:$0xff] %vm1416, %v1233
          %1703 = vst.msk [vmem:[%s1689 + $0x68] sm:$0xff] %vm1416, %v1235
          %1704 = vst.msk [vmem:[%s1689 + $0x70] sm:$0xff] %vm1416, %v1237
          %1705 = vst.msk [vmem:[%s1689 + $0x78] sm:$0xff] %vm1416, %v1239
        $region56: #{hetero_graph_conv.1} parent=47 // pred_fallthru
          _
        %p1706 = scmp.le.s32.totalorder %s850, 0
        // Predicated region
        $region57: #{hetero_graph_conv.1} parent=47 // pred_check
          %p1707 = pneg %p1706
        $region58: #{hetero_graph_conv.1} parent=47 // pred_check_branch
          %1709 = sbr.rel (%p1707) target = $region60
        $region59: #{hetero_graph_conv.1} parent=47 // pred_region
          %v1710 = vld [vmem:[#allocation3] sm:$0xff]
          %v1711 = vld [vmem:[#allocation3 + $0x8] sm:$0xff]
          %v1712 = vld [vmem:[#allocation3 + $0x10] sm:$0xff]
          %v1713 = vld [vmem:[#allocation3 + $0x18] sm:$0xff]
          %v1714 = vld [vmem:[#allocation3 + $0x20] sm:$0xff]
          %v1715 = vld [vmem:[#allocation3 + $0x28] sm:$0xff]
          %v1716 = vld [vmem:[#allocation3 + $0x30] sm:$0xff]
          %v1717 = vld [vmem:[#allocation3 + $0x38] sm:$0xff]
          %v1718 = vld [vmem:[#allocation3 + $0x40] sm:$0xff]
          %v1719 = vld [vmem:[#allocation3 + $0x48] sm:$0xff]
          %v1720 = vld [vmem:[#allocation3 + $0x50] sm:$0xff]
          %v1721 = vld [vmem:[#allocation3 + $0x58] sm:$0xff]
          %v1722 = vld [vmem:[#allocation3 + $0x60] sm:$0xff]
          %v1723 = vld [vmem:[#allocation3 + $0x68] sm:$0xff]
          %v1724 = vld [vmem:[#allocation3 + $0x70] sm:$0xff]
          %v1725 = vld [vmem:[#allocation3 + $0x78] sm:$0xff]
          %v1726 = vmax.f32 %v1710, 0.0
          %v1727 = vmax.f32 %v1711, 0.0
          %v1728 = vmax.f32 %v1712, 0.0
          %v1729 = vmax.f32 %v1713, 0.0
          %v1730 = vmax.f32 %v1714, 0.0
          %v1731 = vmax.f32 %v1715, 0.0
          %v1732 = vmax.f32 %v1716, 0.0
          %v1733 = vmax.f32 %v1717, 0.0
          %v1734 = vmax.f32 %v1718, 0.0
          %v1735 = vmax.f32 %v1719, 0.0
          %v1736 = vmax.f32 %v1720, 0.0
          %v1737 = vmax.f32 %v1721, 0.0
          %v1738 = vmax.f32 %v1722, 0.0
          %v1739 = vmax.f32 %v1723, 0.0
          %v1740 = vmax.f32 %v1724, 0.0
          %v1741 = vmax.f32 %v1725, 0.0
          %v1742 = vsub.f32 %v1710, %v1726
          %v1743 = vsub.f32 %v1711, %v1727
          %v1744 = vsub.f32 %v1712, %v1728
          %v1745 = vsub.f32 %v1713, %v1729
          %v1746 = vsub.f32 %v1714, %v1730
          %v1747 = vsub.f32 %v1715, %v1731
          %v1748 = vsub.f32 %v1716, %v1732
          %v1749 = vsub.f32 %v1717, %v1733
          %v1750 = vsub.f32 %v1718, %v1734
          %v1751 = vsub.f32 %v1719, %v1735
          %v1752 = vsub.f32 %v1720, %v1736
          %v1753 = vsub.f32 %v1721, %v1737
          %v1754 = vsub.f32 %v1722, %v1738
          %v1755 = vsub.f32 %v1723, %v1739
          %v1756 = vsub.f32 %v1724, %v1740
          %v1757 = vsub.f32 %v1725, %v1741
          %v1758 = vmul.f32 %v1742, 1.442695
          %v1759 = vpow.pop %v1758
          %v1760 = vmul.f32 %v1743, 1.442695
          %v1761 = vpow.pop %v1760
          %v1762 = vmul.f32 %v1744, 1.442695
          %v1763 = vpow.pop %v1762
          %v1764 = vmul.f32 %v1745, 1.442695
          %v1765 = vpow.pop %v1764
          %v1766 = vmul.f32 %v1746, 1.442695
          %v1767 = vpow.pop %v1766
          %v1768 = vmul.f32 %v1747, 1.442695
          %v1769 = vpow.pop %v1768
          %v1770 = vmul.f32 %v1748, 1.442695
          %v1771 = vpow.pop %v1770
          %v1772 = vmul.f32 %v1749, 1.442695
          %v1773 = vpow.pop %v1772
          %v1774 = vmul.f32 %v1750, 1.442695
          %v1775 = vpow.pop %v1774
          %v1776 = vmul.f32 %v1751, 1.442695
          %v1777 = vpow.pop %v1776
          %v1778 = vmul.f32 %v1752, 1.442695
          %v1779 = vpow.pop %v1778
          %v1780 = vmul.f32 %v1753, 1.442695
          %v1781 = vpow.pop %v1780
          %v1782 = vmul.f32 %v1754, 1.442695
          %v1783 = vpow.pop %v1782
          %v1784 = vmul.f32 %v1755, 1.442695
          %v1785 = vpow.pop %v1784
          %v1786 = vmul.f32 %v1756, 1.442695
          %v1787 = vpow.pop %v1786
          %v1788 = vmul.f32 %v1757, 1.442695
          %v1789 = vpow.pop %v1788
          %v1790 = vsub.f32 0.0, %v1726
          %v1791 = vsub.f32 0.0, %v1727
          %v1792 = vsub.f32 0.0, %v1728
          %v1793 = vsub.f32 0.0, %v1729
          %v1794 = vsub.f32 0.0, %v1730
          %v1795 = vsub.f32 0.0, %v1731
          %v1796 = vsub.f32 0.0, %v1732
          %v1797 = vsub.f32 0.0, %v1733
          %v1798 = vsub.f32 0.0, %v1734
          %v1799 = vsub.f32 0.0, %v1735
          %v1800 = vsub.f32 0.0, %v1736
          %v1801 = vsub.f32 0.0, %v1737
          %v1802 = vsub.f32 0.0, %v1738
          %v1803 = vsub.f32 0.0, %v1739
          %v1804 = vsub.f32 0.0, %v1740
          %v1805 = vsub.f32 0.0, %v1741
          %v1806 = vmul.f32 %v1790, 1.442695
          %v1807 = vpow.pop %v1806
          %v1808 = vmul.f32 %v1791, 1.442695
          %v1809 = vpow.pop %v1808
          %v1810 = vmul.f32 %v1792, 1.442695
          %v1811 = vpow.pop %v1810
          %v1812 = vmul.f32 %v1793, 1.442695
          %v1813 = vpow.pop %v1812
          %v1814 = vmul.f32 %v1794, 1.442695
          %v1815 = vpow.pop %v1814
          %v1816 = vmul.f32 %v1795, 1.442695
          %v1817 = vpow.pop %v1816
          %v1818 = vmul.f32 %v1796, 1.442695
          %v1819 = vpow.pop %v1818
          %v1820 = vmul.f32 %v1797, 1.442695
          %v1821 = vpow.pop %v1820
          %v1822 = vmul.f32 %v1798, 1.442695
          %v1823 = vpow.pop %v1822
          %v1824 = vmul.f32 %v1799, 1.442695
          %v1825 = vpow.pop %v1824
          %v1826 = vmul.f32 %v1800, 1.442695
          %v1827 = vpow.pop %v1826
          %v1828 = vmul.f32 %v1801, 1.442695
          %v1829 = vpow.pop %v1828
          %v1830 = vmul.f32 %v1802, 1.442695
          %v1831 = vpow.pop %v1830
          %v1832 = vmul.f32 %v1803, 1.442695
          %v1833 = vpow.pop %v1832
          %v1834 = vmul.f32 %v1804, 1.442695
          %v1835 = vpow.pop %v1834
          %v1836 = vmul.f32 %v1805, 1.442695
          %v1837 = vpow.pop %v1836
          %v1838 = vld [vmem:[#allocation4] sm:$0xff]
          %v1839 = vld [vmem:[#allocation4 + $0x8] sm:$0xff]
          %v1840 = vld [vmem:[#allocation4 + $0x10] sm:$0xff]
          %v1841 = vld [vmem:[#allocation4 + $0x18] sm:$0xff]
          %v1842 = vld [vmem:[#allocation4 + $0x20] sm:$0xff]
          %v1843 = vld [vmem:[#allocation4 + $0x28] sm:$0xff]
          %v1844 = vld [vmem:[#allocation4 + $0x30] sm:$0xff]
          %v1845 = vld [vmem:[#allocation4 + $0x38] sm:$0xff]
          %v1846 = vld [vmem:[#allocation4 + $0x40] sm:$0xff]
          %v1847 = vld [vmem:[#allocation4 + $0x48] sm:$0xff]
          %v1848 = vld [vmem:[#allocation4 + $0x50] sm:$0xff]
          %v1849 = vld [vmem:[#allocation4 + $0x58] sm:$0xff]
          %v1850 = vld [vmem:[#allocation4 + $0x60] sm:$0xff]
          %v1851 = vld [vmem:[#allocation4 + $0x68] sm:$0xff]
          %v1852 = vld [vmem:[#allocation4 + $0x70] sm:$0xff]
          %v1853 = vld [vmem:[#allocation4 + $0x78] sm:$0xff]
          %v1854 = vmul.f32 %v1759, %v1838
          %v1855 = vmul.f32 %v1761, %v1839
          %v1856 = vmul.f32 %v1763, %v1840
          %v1857 = vmul.f32 %v1765, %v1841
          %v1858 = vmul.f32 %v1767, %v1842
          %v1859 = vmul.f32 %v1769, %v1843
          %v1860 = vmul.f32 %v1771, %v1844
          %v1861 = vmul.f32 %v1773, %v1845
          %v1862 = vmul.f32 %v1775, %v1846
          %v1863 = vmul.f32 %v1777, %v1847
          %v1864 = vmul.f32 %v1779, %v1848
          %v1865 = vmul.f32 %v1781, %v1849
          %v1866 = vmul.f32 %v1783, %v1850
          %v1867 = vmul.f32 %v1785, %v1851
          %v1868 = vmul.f32 %v1787, %v1852
          %v1869 = vmul.f32 %v1789, %v1853
          %v1870 = vadd.f32 %v1854, %v1807
          %v1871 = vadd.f32 %v1855, %v1809
          %v1872 = vadd.f32 %v1856, %v1811
          %v1873 = vadd.f32 %v1857, %v1813
          %v1874 = vadd.f32 %v1858, %v1815
          %v1875 = vadd.f32 %v1859, %v1817
          %v1876 = vadd.f32 %v1860, %v1819
          %v1877 = vadd.f32 %v1861, %v1821
          %v1878 = vadd.f32 %v1862, %v1823
          %v1879 = vadd.f32 %v1863, %v1825
          %v1880 = vadd.f32 %v1864, %v1827
          %v1881 = vadd.f32 %v1865, %v1829
          %v1882 = vadd.f32 %v1866, %v1831
          %v1883 = vadd.f32 %v1867, %v1833
          %v1884 = vadd.f32 %v1868, %v1835
          %v1885 = vadd.f32 %v1869, %v1837
          %vm1886 = vcmask 7168
          %1887 = vst.msk [vmem:[#allocation4] sm:$0xff] %vm1886, %v1870
          %1888 = vst.msk [vmem:[#allocation4 + $0x8] sm:$0xff] %vm1886, %v1871
          %1889 = vst.msk [vmem:[#allocation4 + $0x10] sm:$0xff] %vm1886, %v1872
          %1890 = vst.msk [vmem:[#allocation4 + $0x18] sm:$0xff] %vm1886, %v1873
          %1891 = vst.msk [vmem:[#allocation4 + $0x20] sm:$0xff] %vm1886, %v1874
          %1892 = vst.msk [vmem:[#allocation4 + $0x28] sm:$0xff] %vm1886, %v1875
          %1893 = vst.msk [vmem:[#allocation4 + $0x30] sm:$0xff] %vm1886, %v1876
          %1894 = vst.msk [vmem:[#allocation4 + $0x38] sm:$0xff] %vm1886, %v1877
          %1895 = vst.msk [vmem:[#allocation4 + $0x40] sm:$0xff] %vm1886, %v1878
          %1896 = vst.msk [vmem:[#allocation4 + $0x48] sm:$0xff] %vm1886, %v1879
          %1897 = vst.msk [vmem:[#allocation4 + $0x50] sm:$0xff] %vm1886, %v1880
          %1898 = vst.msk [vmem:[#allocation4 + $0x58] sm:$0xff] %vm1886, %v1881
          %1899 = vst.msk [vmem:[#allocation4 + $0x60] sm:$0xff] %vm1886, %v1882
          %1900 = vst.msk [vmem:[#allocation4 + $0x68] sm:$0xff] %vm1886, %v1883
          %1901 = vst.msk [vmem:[#allocation4 + $0x70] sm:$0xff] %vm1886, %v1884
          %1902 = vst.msk [vmem:[#allocation4 + $0x78] sm:$0xff] %vm1886, %v1885
          %v1903 = vld [vmem:[#allocation5] sm:$0xff]
          %v1904 = vld [vmem:[#allocation5 + $0x8] sm:$0xff]
          %v1905 = vld [vmem:[#allocation5 + $0x10] sm:$0xff]
          %v1906 = vld [vmem:[#allocation5 + $0x18] sm:$0xff]
          %v1907 = vld [vmem:[#allocation5 + $0x20] sm:$0xff]
          %v1908 = vld [vmem:[#allocation5 + $0x28] sm:$0xff]
          %v1909 = vld [vmem:[#allocation5 + $0x30] sm:$0xff]
          %v1910 = vld [vmem:[#allocation5 + $0x38] sm:$0xff]
          %v1911 = vld [vmem:[#allocation5 + $0x40] sm:$0xff]
          %v1912 = vld [vmem:[#allocation5 + $0x48] sm:$0xff]
          %v1913 = vld [vmem:[#allocation5 + $0x50] sm:$0xff]
          %v1914 = vld [vmem:[#allocation5 + $0x58] sm:$0xff]
          %v1915 = vld [vmem:[#allocation5 + $0x60] sm:$0xff]
          %v1916 = vld [vmem:[#allocation5 + $0x68] sm:$0xff]
          %v1917 = vld [vmem:[#allocation5 + $0x70] sm:$0xff]
          %v1918 = vld [vmem:[#allocation5 + $0x78] sm:$0xff]
          %1920 = vset.pattern.permute.xlu0 0
          %1921 = vperm.xlu0 %1920, %v1759
          %v1922 = vpop.permute.xlu0 %1921
          %1925 = vset.pattern.permute.xlu0 0
          %1926 = vperm.xlu0 %1925, %v1761
          %v1927 = vpop.permute.xlu0 %1926
          %1930 = vset.pattern.permute.xlu0 0
          %1931 = vperm.xlu0 %1930, %v1763
          %v1932 = vpop.permute.xlu0 %1931
          %1935 = vset.pattern.permute.xlu0 0
          %1936 = vperm.xlu0 %1935, %v1765
          %v1937 = vpop.permute.xlu0 %1936
          %1940 = vset.pattern.permute.xlu0 0
          %1941 = vperm.xlu0 %1940, %v1767
          %v1942 = vpop.permute.xlu0 %1941
          %1945 = vset.pattern.permute.xlu0 0
          %1946 = vperm.xlu0 %1945, %v1769
          %v1947 = vpop.permute.xlu0 %1946
          %1950 = vset.pattern.permute.xlu0 0
          %1951 = vperm.xlu0 %1950, %v1771
          %v1952 = vpop.permute.xlu0 %1951
          %1955 = vset.pattern.permute.xlu0 0
          %1956 = vperm.xlu0 %1955, %v1773
          %v1957 = vpop.permute.xlu0 %1956
          %1960 = vset.pattern.permute.xlu0 0
          %1961 = vperm.xlu0 %1960, %v1775
          %v1962 = vpop.permute.xlu0 %1961
          %1965 = vset.pattern.permute.xlu0 0
          %1966 = vperm.xlu0 %1965, %v1777
          %v1967 = vpop.permute.xlu0 %1966
          %1970 = vset.pattern.permute.xlu0 0
          %1971 = vperm.xlu0 %1970, %v1779
          %v1972 = vpop.permute.xlu0 %1971
          %1975 = vset.pattern.permute.xlu0 0
          %1976 = vperm.xlu0 %1975, %v1781
          %v1977 = vpop.permute.xlu0 %1976
          %1980 = vset.pattern.permute.xlu0 0
          %1981 = vperm.xlu0 %1980, %v1783
          %v1982 = vpop.permute.xlu0 %1981
          %1985 = vset.pattern.permute.xlu0 0
          %1986 = vperm.xlu0 %1985, %v1785
          %v1987 = vpop.permute.xlu0 %1986
          %1990 = vset.pattern.permute.xlu0 0
          %1991 = vperm.xlu0 %1990, %v1787
          %v1992 = vpop.permute.xlu0 %1991
          %1995 = vset.pattern.permute.xlu0 0
          %1996 = vperm.xlu0 %1995, %v1789
          %v1997 = vpop.permute.xlu0 %1996
          %v1999 = vmul.f32 %v1922, %v1903
          %v2000 = vmul.f32 %v1927, %v1904
          %v2001 = vmul.f32 %v1932, %v1905
          %v2002 = vmul.f32 %v1937, %v1906
          %v2003 = vmul.f32 %v1942, %v1907
          %v2004 = vmul.f32 %v1947, %v1908
          %v2005 = vmul.f32 %v1952, %v1909
          %v2006 = vmul.f32 %v1957, %v1910
          %v2007 = vmul.f32 %v1962, %v1911
          %v2008 = vmul.f32 %v1967, %v1912
          %v2009 = vmul.f32 %v1972, %v1913
          %v2010 = vmul.f32 %v1977, %v1914
          %v2011 = vmul.f32 %v1982, %v1915
          %v2012 = vmul.f32 %v1987, %v1916
          %v2013 = vmul.f32 %v1992, %v1917
          %v2014 = vmul.f32 %v1997, %v1918
          %2015 = vst [vmem:[#allocation5] sm:$0xff] %v1999
          %2016 = vst [vmem:[#allocation5 + $0x8] sm:$0xff] %v2000
          %2017 = vst [vmem:[#allocation5 + $0x10] sm:$0xff] %v2001
          %2018 = vst [vmem:[#allocation5 + $0x18] sm:$0xff] %v2002
          %2019 = vst [vmem:[#allocation5 + $0x20] sm:$0xff] %v2003
          %2020 = vst [vmem:[#allocation5 + $0x28] sm:$0xff] %v2004
          %2021 = vst [vmem:[#allocation5 + $0x30] sm:$0xff] %v2005
          %2022 = vst [vmem:[#allocation5 + $0x38] sm:$0xff] %v2006
          %2023 = vst [vmem:[#allocation5 + $0x40] sm:$0xff] %v2007
          %2024 = vst [vmem:[#allocation5 + $0x48] sm:$0xff] %v2008
          %2025 = vst [vmem:[#allocation5 + $0x50] sm:$0xff] %v2009
          %2026 = vst [vmem:[#allocation5 + $0x58] sm:$0xff] %v2010
          %2027 = vst [vmem:[#allocation5 + $0x60] sm:$0xff] %v2011
          %2028 = vst [vmem:[#allocation5 + $0x68] sm:$0xff] %v2012
          %2029 = vst [vmem:[#allocation5 + $0x70] sm:$0xff] %v2013
          %2030 = vst [vmem:[#allocation5 + $0x78] sm:$0xff] %v2014
          %2031 = vst.msk [vmem:[#allocation3] sm:$0xff] %vm1886, %v1726
          %2032 = vst.msk [vmem:[#allocation3 + $0x8] sm:$0xff] %vm1886, %v1727
          %2033 = vst.msk [vmem:[#allocation3 + $0x10] sm:$0xff] %vm1886, %v1728
          %2034 = vst.msk [vmem:[#allocation3 + $0x18] sm:$0xff] %vm1886, %v1729
          %2035 = vst.msk [vmem:[#allocation3 + $0x20] sm:$0xff] %vm1886, %v1730
          %2036 = vst.msk [vmem:[#allocation3 + $0x28] sm:$0xff] %vm1886, %v1731
          %2037 = vst.msk [vmem:[#allocation3 + $0x30] sm:$0xff] %vm1886, %v1732
          %2038 = vst.msk [vmem:[#allocation3 + $0x38] sm:$0xff] %vm1886, %v1733
          %2039 = vst.msk [vmem:[#allocation3 + $0x40] sm:$0xff] %vm1886, %v1734
          %2040 = vst.msk [vmem:[#allocation3 + $0x48] sm:$0xff] %vm1886, %v1735
          %2041 = vst.msk [vmem:[#allocation3 + $0x50] sm:$0xff] %vm1886, %v1736
          %2042 = vst.msk [vmem:[#allocation3 + $0x58] sm:$0xff] %vm1886, %v1737
          %2043 = vst.msk [vmem:[#allocation3 + $0x60] sm:$0xff] %vm1886, %v1738
          %2044 = vst.msk [vmem:[#allocation3 + $0x68] sm:$0xff] %vm1886, %v1739
          %2045 = vst.msk [vmem:[#allocation3 + $0x70] sm:$0xff] %vm1886, %v1740
          %2046 = vst.msk [vmem:[#allocation3 + $0x78] sm:$0xff] %vm1886, %v1741
          %s2047 = smul.u32 %s41, 128
          %s2048 = scalar_lea.vmem [#allocation6], %s2047
          %2049 = vst.msk [vmem:[%s2048] sm:$0xff] %vm1886, 0.0
          %2050 = vst.msk [vmem:[%s2048 + $0x8] sm:$0xff] %vm1886, 0.0
          %2051 = vst.msk [vmem:[%s2048 + $0x10] sm:$0xff] %vm1886, 0.0
          %2052 = vst.msk [vmem:[%s2048 + $0x18] sm:$0xff] %vm1886, 0.0
          %2053 = vst.msk [vmem:[%s2048 + $0x20] sm:$0xff] %vm1886, 0.0
          %2054 = vst.msk [vmem:[%s2048 + $0x28] sm:$0xff] %vm1886, 0.0
          %2055 = vst.msk [vmem:[%s2048 + $0x30] sm:$0xff] %vm1886, 0.0
          %2056 = vst.msk [vmem:[%s2048 + $0x38] sm:$0xff] %vm1886, 0.0
          %2057 = vst.msk [vmem:[%s2048 + $0x40] sm:$0xff] %vm1886, 0.0
          %2058 = vst.msk [vmem:[%s2048 + $0x48] sm:$0xff] %vm1886, 0.0
          %2059 = vst.msk [vmem:[%s2048 + $0x50] sm:$0xff] %vm1886, 0.0
          %2060 = vst.msk [vmem:[%s2048 + $0x58] sm:$0xff] %vm1886, 0.0
          %2061 = vst.msk [vmem:[%s2048 + $0x60] sm:$0xff] %vm1886, 0.0
          %2062 = vst.msk [vmem:[%s2048 + $0x68] sm:$0xff] %vm1886, 0.0
          %2063 = vst.msk [vmem:[%s2048 + $0x70] sm:$0xff] %vm1886, 0.0
          %2064 = vst.msk [vmem:[%s2048 + $0x78] sm:$0xff] %vm1886, 0.0
        $region60: #{hetero_graph_conv.1} parent=47 // pred_fallthru
          _
        %p2065 = scmp.eq.s32.totalorder %s41, 2
        // Predicated region
        $region61: #{hetero_graph_conv.1} parent=47 // pred_check
          %p2066 = pneg %p2065
        $region62: #{hetero_graph_conv.1} parent=47 // pred_check_branch
          %2068 = sbr.rel (%p2066) target = $region64
        $region63: #{hetero_graph_conv.1} parent=47 // pred_region
          %v2069 = vld [vmem:[#allocation4] sm:$0xff]
          %v2070 = vld [vmem:[#allocation4 + $0x8] sm:$0xff]
          %v2071 = vld [vmem:[#allocation4 + $0x10] sm:$0xff]
          %v2072 = vld [vmem:[#allocation4 + $0x18] sm:$0xff]
          %v2073 = vld [vmem:[#allocation4 + $0x20] sm:$0xff]
          %v2074 = vld [vmem:[#allocation4 + $0x28] sm:$0xff]
          %v2075 = vld [vmem:[#allocation4 + $0x30] sm:$0xff]
          %v2076 = vld [vmem:[#allocation4 + $0x38] sm:$0xff]
          %v2077 = vld [vmem:[#allocation4 + $0x40] sm:$0xff]
          %v2078 = vld [vmem:[#allocation4 + $0x48] sm:$0xff]
          %v2079 = vld [vmem:[#allocation4 + $0x50] sm:$0xff]
          %v2080 = vld [vmem:[#allocation4 + $0x58] sm:$0xff]
          %v2081 = vld [vmem:[#allocation4 + $0x60] sm:$0xff]
          %v2082 = vld [vmem:[#allocation4 + $0x68] sm:$0xff]
          %v2083 = vld [vmem:[#allocation4 + $0x70] sm:$0xff]
          %v2084 = vld [vmem:[#allocation4 + $0x78] sm:$0xff]
          %v2085 = vrcp.pop %v2069
          %v2086 = vmul.f32 %v2069, %v2085
          %v2087 = vsub.f32 1.0, %v2086
          %v2088 = vmul.f32 %v2085, %v2087
          %v2089 = vadd.f32 %v2085, %v2088
          %vm2090 = vweird.f32 %v2069
          %vm2091 = vweird.f32 %v2085
          %vm2092 = vmor %vm2090, %vm2091
          %v2093 = vsel %vm2092, %v2085, %v2089
          %v2094 = vand.u32 2147483647, %v2069
          %vm2095 = vcmp.eq.f32.partialorder %v2094, 8.507059e+37
          %v2096 = vand.u32 %v2069, 2147483648
          %v2097 = vor.u32 1.1754944e-38, %v2096
          %v2098 = vsel %vm2095, %v2097, %v2093
          %v2099 = vmul.f32 1.0, %v2098
          %v2100 = vrcp.pop %v2070
          %v2101 = vmul.f32 %v2070, %v2100
          %v2102 = vsub.f32 1.0, %v2101
          %v2103 = vmul.f32 %v2100, %v2102
          %v2104 = vadd.f32 %v2100, %v2103
          %vm2105 = vweird.f32 %v2070
          %vm2106 = vweird.f32 %v2100
          %vm2107 = vmor %vm2105, %vm2106
          %v2108 = vsel %vm2107, %v2100, %v2104
          %v2109 = vand.u32 2147483647, %v2070
          %vm2110 = vcmp.eq.f32.partialorder %v2109, 8.507059e+37
          %v2111 = vand.u32 %v2070, 2147483648
          %v2112 = vor.u32 1.1754944e-38, %v2111
          %v2113 = vsel %vm2110, %v2112, %v2108
          %v2114 = vmul.f32 1.0, %v2113
          %v2115 = vrcp.pop %v2071
          %v2116 = vmul.f32 %v2071, %v2115
          %v2117 = vsub.f32 1.0, %v2116
          %v2118 = vmul.f32 %v2115, %v2117
          %v2119 = vadd.f32 %v2115, %v2118
          %vm2120 = vweird.f32 %v2071
          %vm2121 = vweird.f32 %v2115
          %vm2122 = vmor %vm2120, %vm2121
          %v2123 = vsel %vm2122, %v2115, %v2119
          %v2124 = vand.u32 2147483647, %v2071
          %vm2125 = vcmp.eq.f32.partialorder %v2124, 8.507059e+37
          %v2126 = vand.u32 %v2071, 2147483648
          %v2127 = vor.u32 1.1754944e-38, %v2126
          %v2128 = vsel %vm2125, %v2127, %v2123
          %v2129 = vmul.f32 1.0, %v2128
          %v2130 = vrcp.pop %v2072
          %v2131 = vmul.f32 %v2072, %v2130
          %v2132 = vsub.f32 1.0, %v2131
          %v2133 = vmul.f32 %v2130, %v2132
          %v2134 = vadd.f32 %v2130, %v2133
          %vm2135 = vweird.f32 %v2072
          %vm2136 = vweird.f32 %v2130
          %vm2137 = vmor %vm2135, %vm2136
          %v2138 = vsel %vm2137, %v2130, %v2134
          %v2139 = vand.u32 2147483647, %v2072
          %vm2140 = vcmp.eq.f32.partialorder %v2139, 8.507059e+37
          %v2141 = vand.u32 %v2072, 2147483648
          %v2142 = vor.u32 1.1754944e-38, %v2141
          %v2143 = vsel %vm2140, %v2142, %v2138
          %v2144 = vmul.f32 1.0, %v2143
          %v2145 = vrcp.pop %v2073
          %v2146 = vmul.f32 %v2073, %v2145
          %v2147 = vsub.f32 1.0, %v2146
          %v2148 = vmul.f32 %v2145, %v2147
          %v2149 = vadd.f32 %v2145, %v2148
          %vm2150 = vweird.f32 %v2073
          %vm2151 = vweird.f32 %v2145
          %vm2152 = vmor %vm2150, %vm2151
          %v2153 = vsel %vm2152, %v2145, %v2149
          %v2154 = vand.u32 2147483647, %v2073
          %vm2155 = vcmp.eq.f32.partialorder %v2154, 8.507059e+37
          %v2156 = vand.u32 %v2073, 2147483648
          %v2157 = vor.u32 1.1754944e-38, %v2156
          %v2158 = vsel %vm2155, %v2157, %v2153
          %v2159 = vmul.f32 1.0, %v2158
          %v2160 = vrcp.pop %v2074
          %v2161 = vmul.f32 %v2074, %v2160
          %v2162 = vsub.f32 1.0, %v2161
          %v2163 = vmul.f32 %v2160, %v2162
          %v2164 = vadd.f32 %v2160, %v2163
          %vm2165 = vweird.f32 %v2074
          %vm2166 = vweird.f32 %v2160
          %vm2167 = vmor %vm2165, %vm2166
          %v2168 = vsel %vm2167, %v2160, %v2164
          %v2169 = vand.u32 2147483647, %v2074
          %vm2170 = vcmp.eq.f32.partialorder %v2169, 8.507059e+37
          %v2171 = vand.u32 %v2074, 2147483648
          %v2172 = vor.u32 1.1754944e-38, %v2171
          %v2173 = vsel %vm2170, %v2172, %v2168
          %v2174 = vmul.f32 1.0, %v2173
          %v2175 = vrcp.pop %v2075
          %v2176 = vmul.f32 %v2075, %v2175
          %v2177 = vsub.f32 1.0, %v2176
          %v2178 = vmul.f32 %v2175, %v2177
          %v2179 = vadd.f32 %v2175, %v2178
          %vm2180 = vweird.f32 %v2075
          %vm2181 = vweird.f32 %v2175
          %vm2182 = vmor %vm2180, %vm2181
          %v2183 = vsel %vm2182, %v2175, %v2179
          %v2184 = vand.u32 2147483647, %v2075
          %vm2185 = vcmp.eq.f32.partialorder %v2184, 8.507059e+37
          %v2186 = vand.u32 %v2075, 2147483648
          %v2187 = vor.u32 1.1754944e-38, %v2186
          %v2188 = vsel %vm2185, %v2187, %v2183
          %v2189 = vmul.f32 1.0, %v2188
          %v2190 = vrcp.pop %v2076
          %v2191 = vmul.f32 %v2076, %v2190
          %v2192 = vsub.f32 1.0, %v2191
          %v2193 = vmul.f32 %v2190, %v2192
          %v2194 = vadd.f32 %v2190, %v2193
          %vm2195 = vweird.f32 %v2076
          %vm2196 = vweird.f32 %v2190
          %vm2197 = vmor %vm2195, %vm2196
          %v2198 = vsel %vm2197, %v2190, %v2194
          %v2199 = vand.u32 2147483647, %v2076
          %vm2200 = vcmp.eq.f32.partialorder %v2199, 8.507059e+37
          %v2201 = vand.u32 %v2076, 2147483648
          %v2202 = vor.u32 1.1754944e-38, %v2201
          %v2203 = vsel %vm2200, %v2202, %v2198
          %v2204 = vmul.f32 1.0, %v2203
          %v2205 = vrcp.pop %v2077
          %v2206 = vmul.f32 %v2077, %v2205
          %v2207 = vsub.f32 1.0, %v2206
          %v2208 = vmul.f32 %v2205, %v2207
          %v2209 = vadd.f32 %v2205, %v2208
          %vm2210 = vweird.f32 %v2077
          %vm2211 = vweird.f32 %v2205
          %vm2212 = vmor %vm2210, %vm2211
          %v2213 = vsel %vm2212, %v2205, %v2209
          %v2214 = vand.u32 2147483647, %v2077
          %vm2215 = vcmp.eq.f32.partialorder %v2214, 8.507059e+37
          %v2216 = vand.u32 %v2077, 2147483648
          %v2217 = vor.u32 1.1754944e-38, %v2216
          %v2218 = vsel %vm2215, %v2217, %v2213
          %v2219 = vmul.f32 1.0, %v2218
          %v2220 = vrcp.pop %v2078
          %v2221 = vmul.f32 %v2078, %v2220
          %v2222 = vsub.f32 1.0, %v2221
          %v2223 = vmul.f32 %v2220, %v2222
          %v2224 = vadd.f32 %v2220, %v2223
          %vm2225 = vweird.f32 %v2078
          %vm2226 = vweird.f32 %v2220
          %vm2227 = vmor %vm2225, %vm2226
          %v2228 = vsel %vm2227, %v2220, %v2224
          %v2229 = vand.u32 2147483647, %v2078
          %vm2230 = vcmp.eq.f32.partialorder %v2229, 8.507059e+37
          %v2231 = vand.u32 %v2078, 2147483648
          %v2232 = vor.u32 1.1754944e-38, %v2231
          %v2233 = vsel %vm2230, %v2232, %v2228
          %v2234 = vmul.f32 1.0, %v2233
          %v2235 = vrcp.pop %v2079
          %v2236 = vmul.f32 %v2079, %v2235
          %v2237 = vsub.f32 1.0, %v2236
          %v2238 = vmul.f32 %v2235, %v2237
          %v2239 = vadd.f32 %v2235, %v2238
          %vm2240 = vweird.f32 %v2079
          %vm2241 = vweird.f32 %v2235
          %vm2242 = vmor %vm2240, %vm2241
          %v2243 = vsel %vm2242, %v2235, %v2239
          %v2244 = vand.u32 2147483647, %v2079
          %vm2245 = vcmp.eq.f32.partialorder %v2244, 8.507059e+37
          %v2246 = vand.u32 %v2079, 2147483648
          %v2247 = vor.u32 1.1754944e-38, %v2246
          %v2248 = vsel %vm2245, %v2247, %v2243
          %v2249 = vmul.f32 1.0, %v2248
          %v2250 = vrcp.pop %v2080
          %v2251 = vmul.f32 %v2080, %v2250
          %v2252 = vsub.f32 1.0, %v2251
          %v2253 = vmul.f32 %v2250, %v2252
          %v2254 = vadd.f32 %v2250, %v2253
          %vm2255 = vweird.f32 %v2080
          %vm2256 = vweird.f32 %v2250
          %vm2257 = vmor %vm2255, %vm2256
          %v2258 = vsel %vm2257, %v2250, %v2254
          %v2259 = vand.u32 2147483647, %v2080
          %vm2260 = vcmp.eq.f32.partialorder %v2259, 8.507059e+37
          %v2261 = vand.u32 %v2080, 2147483648
          %v2262 = vor.u32 1.1754944e-38, %v2261
          %v2263 = vsel %vm2260, %v2262, %v2258
          %v2264 = vmul.f32 1.0, %v2263
          %v2265 = vrcp.pop %v2081
          %v2266 = vmul.f32 %v2081, %v2265
          %v2267 = vsub.f32 1.0, %v2266
          %v2268 = vmul.f32 %v2265, %v2267
          %v2269 = vadd.f32 %v2265, %v2268
          %vm2270 = vweird.f32 %v2081
          %vm2271 = vweird.f32 %v2265
          %vm2272 = vmor %vm2270, %vm2271
          %v2273 = vsel %vm2272, %v2265, %v2269
          %v2274 = vand.u32 2147483647, %v2081
          %vm2275 = vcmp.eq.f32.partialorder %v2274, 8.507059e+37
          %v2276 = vand.u32 %v2081, 2147483648
          %v2277 = vor.u32 1.1754944e-38, %v2276
          %v2278 = vsel %vm2275, %v2277, %v2273
          %v2279 = vmul.f32 1.0, %v2278
          %v2280 = vrcp.pop %v2082
          %v2281 = vmul.f32 %v2082, %v2280
          %v2282 = vsub.f32 1.0, %v2281
          %v2283 = vmul.f32 %v2280, %v2282
          %v2284 = vadd.f32 %v2280, %v2283
          %vm2285 = vweird.f32 %v2082
          %vm2286 = vweird.f32 %v2280
          %vm2287 = vmor %vm2285, %vm2286
          %v2288 = vsel %vm2287, %v2280, %v2284
          %v2289 = vand.u32 2147483647, %v2082
          %vm2290 = vcmp.eq.f32.partialorder %v2289, 8.507059e+37
          %v2291 = vand.u32 %v2082, 2147483648
          %v2292 = vor.u32 1.1754944e-38, %v2291
          %v2293 = vsel %vm2290, %v2292, %v2288
          %v2294 = vmul.f32 1.0, %v2293
          %v2295 = vrcp.pop %v2083
          %v2296 = vmul.f32 %v2083, %v2295
          %v2297 = vsub.f32 1.0, %v2296
          %v2298 = vmul.f32 %v2295, %v2297
          %v2299 = vadd.f32 %v2295, %v2298
          %vm2300 = vweird.f32 %v2083
          %vm2301 = vweird.f32 %v2295
          %vm2302 = vmor %vm2300, %vm2301
          %v2303 = vsel %vm2302, %v2295, %v2299
          %v2304 = vand.u32 2147483647, %v2083
          %vm2305 = vcmp.eq.f32.partialorder %v2304, 8.507059e+37
          %v2306 = vand.u32 %v2083, 2147483648
          %v2307 = vor.u32 1.1754944e-38, %v2306
          %v2308 = vsel %vm2305, %v2307, %v2303
          %v2309 = vmul.f32 1.0, %v2308
          %v2310 = vrcp.pop %v2084
          %v2311 = vmul.f32 %v2084, %v2310
          %v2312 = vsub.f32 1.0, %v2311
          %v2313 = vmul.f32 %v2310, %v2312
          %v2314 = vadd.f32 %v2310, %v2313
          %vm2315 = vweird.f32 %v2084
          %vm2316 = vweird.f32 %v2310
          %vm2317 = vmor %vm2315, %vm2316
          %v2318 = vsel %vm2317, %v2310, %v2314
          %v2319 = vand.u32 2147483647, %v2084
          %vm2320 = vcmp.eq.f32.partialorder %v2319, 8.507059e+37
          %v2321 = vand.u32 %v2084, 2147483648
          %v2322 = vor.u32 1.1754944e-38, %v2321
          %v2323 = vsel %vm2320, %v2322, %v2318
          %v2324 = vmul.f32 1.0, %v2323
          %v2325 = vld [vmem:[#allocation5] sm:$0xff]
          %v2326 = vld [vmem:[#allocation5 + $0x8] sm:$0xff]
          %v2327 = vld [vmem:[#allocation5 + $0x10] sm:$0xff]
          %v2328 = vld [vmem:[#allocation5 + $0x18] sm:$0xff]
          %v2329 = vld [vmem:[#allocation5 + $0x20] sm:$0xff]
          %v2330 = vld [vmem:[#allocation5 + $0x28] sm:$0xff]
          %v2331 = vld [vmem:[#allocation5 + $0x30] sm:$0xff]
          %v2332 = vld [vmem:[#allocation5 + $0x38] sm:$0xff]
          %v2333 = vld [vmem:[#allocation5 + $0x40] sm:$0xff]
          %v2334 = vld [vmem:[#allocation5 + $0x48] sm:$0xff]
          %v2335 = vld [vmem:[#allocation5 + $0x50] sm:$0xff]
          %v2336 = vld [vmem:[#allocation5 + $0x58] sm:$0xff]
          %v2337 = vld [vmem:[#allocation5 + $0x60] sm:$0xff]
          %v2338 = vld [vmem:[#allocation5 + $0x68] sm:$0xff]
          %v2339 = vld [vmem:[#allocation5 + $0x70] sm:$0xff]
          %v2340 = vld [vmem:[#allocation5 + $0x78] sm:$0xff]
          %2342 = vset.pattern.permute.xlu0 0
          %2343 = vperm.xlu0 %2342, %v2099
          %v2344 = vpop.permute.xlu0 %2343
          %2347 = vset.pattern.permute.xlu0 0
          %2348 = vperm.xlu0 %2347, %v2114
          %v2349 = vpop.permute.xlu0 %2348
          %2352 = vset.pattern.permute.xlu0 0
          %2353 = vperm.xlu0 %2352, %v2129
          %v2354 = vpop.permute.xlu0 %2353
          %2357 = vset.pattern.permute.xlu0 0
          %2358 = vperm.xlu0 %2357, %v2144
          %v2359 = vpop.permute.xlu0 %2358
          %2362 = vset.pattern.permute.xlu0 0
          %2363 = vperm.xlu0 %2362, %v2159
          %v2364 = vpop.permute.xlu0 %2363
          %2367 = vset.pattern.permute.xlu0 0
          %2368 = vperm.xlu0 %2367, %v2174
          %v2369 = vpop.permute.xlu0 %2368
          %2372 = vset.pattern.permute.xlu0 0
          %2373 = vperm.xlu0 %2372, %v2189
          %v2374 = vpop.permute.xlu0 %2373
          %2377 = vset.pattern.permute.xlu0 0
          %2378 = vperm.xlu0 %2377, %v2204
          %v2379 = vpop.permute.xlu0 %2378
          %2382 = vset.pattern.permute.xlu0 0
          %2383 = vperm.xlu0 %2382, %v2219
          %v2384 = vpop.permute.xlu0 %2383
          %2387 = vset.pattern.permute.xlu0 0
          %2388 = vperm.xlu0 %2387, %v2234
          %v2389 = vpop.permute.xlu0 %2388
          %2392 = vset.pattern.permute.xlu0 0
          %2393 = vperm.xlu0 %2392, %v2249
          %v2394 = vpop.permute.xlu0 %2393
          %2397 = vset.pattern.permute.xlu0 0
          %2398 = vperm.xlu0 %2397, %v2264
          %v2399 = vpop.permute.xlu0 %2398
          %2402 = vset.pattern.permute.xlu0 0
          %2403 = vperm.xlu0 %2402, %v2279
          %v2404 = vpop.permute.xlu0 %2403
          %2407 = vset.pattern.permute.xlu0 0
          %2408 = vperm.xlu0 %2407, %v2294
          %v2409 = vpop.permute.xlu0 %2408
          %2412 = vset.pattern.permute.xlu0 0
          %2413 = vperm.xlu0 %2412, %v2309
          %v2414 = vpop.permute.xlu0 %2413
          %2417 = vset.pattern.permute.xlu0 0
          %2418 = vperm.xlu0 %2417, %v2324
          %v2419 = vpop.permute.xlu0 %2418
          %v2421 = vmul.f32 %v2325, %v2344
          %v2422 = vmul.f32 %v2326, %v2349
          %v2423 = vmul.f32 %v2327, %v2354
          %v2424 = vmul.f32 %v2328, %v2359
          %v2425 = vmul.f32 %v2329, %v2364
          %v2426 = vmul.f32 %v2330, %v2369
          %v2427 = vmul.f32 %v2331, %v2374
          %v2428 = vmul.f32 %v2332, %v2379
          %v2429 = vmul.f32 %v2333, %v2384
          %v2430 = vmul.f32 %v2334, %v2389
          %v2431 = vmul.f32 %v2335, %v2394
          %v2432 = vmul.f32 %v2336, %v2399
          %v2433 = vmul.f32 %v2337, %v2404
          %v2434 = vmul.f32 %v2338, %v2409
          %v2435 = vmul.f32 %v2339, %v2414
          %v2436 = vmul.f32 %v2340, %v2419
          %2437 = vst [vmem:[#allocation10] sm:$0xff] %v2421
          %2438 = vst [vmem:[#allocation10 + $0x8] sm:$0xff] %v2422
          %2439 = vst [vmem:[#allocation10 + $0x10] sm:$0xff] %v2423
          %2440 = vst [vmem:[#allocation10 + $0x18] sm:$0xff] %v2424
          %2441 = vst [vmem:[#allocation10 + $0x20] sm:$0xff] %v2425
          %2442 = vst [vmem:[#allocation10 + $0x28] sm:$0xff] %v2426
          %2443 = vst [vmem:[#allocation10 + $0x30] sm:$0xff] %v2427
          %2444 = vst [vmem:[#allocation10 + $0x38] sm:$0xff] %v2428
          %2445 = vst [vmem:[#allocation10 + $0x40] sm:$0xff] %v2429
          %2446 = vst [vmem:[#allocation10 + $0x48] sm:$0xff] %v2430
          %2447 = vst [vmem:[#allocation10 + $0x50] sm:$0xff] %v2431
          %2448 = vst [vmem:[#allocation10 + $0x58] sm:$0xff] %v2432
          %2449 = vst [vmem:[#allocation10 + $0x60] sm:$0xff] %v2433
          %2450 = vst [vmem:[#allocation10 + $0x68] sm:$0xff] %v2434
          %2451 = vst [vmem:[#allocation10 + $0x70] sm:$0xff] %v2435
          %2452 = vst [vmem:[#allocation10 + $0x78] sm:$0xff] %v2436
          %v2453 = vld [vmem:[#allocation6] sm:$0xff]
          %v2454 = vld [vmem:[#allocation6 + $0x8] sm:$0xff]
          %v2455 = vld [vmem:[#allocation6 + $0x10] sm:$0xff]
          %v2456 = vld [vmem:[#allocation6 + $0x18] sm:$0xff]
          %v2457 = vld [vmem:[#allocation6 + $0x20] sm:$0xff]
          %v2458 = vld [vmem:[#allocation6 + $0x28] sm:$0xff]
          %v2459 = vld [vmem:[#allocation6 + $0x30] sm:$0xff]
          %v2460 = vld [vmem:[#allocation6 + $0x38] sm:$0xff]
          %v2461 = vld [vmem:[#allocation6 + $0x40] sm:$0xff]
          %v2462 = vld [vmem:[#allocation6 + $0x48] sm:$0xff]
          %v2463 = vld [vmem:[#allocation6 + $0x50] sm:$0xff]
          %v2464 = vld [vmem:[#allocation6 + $0x58] sm:$0xff]
          %v2465 = vld [vmem:[#allocation6 + $0x60] sm:$0xff]
          %v2466 = vld [vmem:[#allocation6 + $0x68] sm:$0xff]
          %v2467 = vld [vmem:[#allocation6 + $0x70] sm:$0xff]
          %v2468 = vld [vmem:[#allocation6 + $0x78] sm:$0xff]
          %v2469 = vld [vmem:[#allocation6 + $0x80] sm:$0xff]
          %v2470 = vld [vmem:[#allocation6 + $0x88] sm:$0xff]
          %v2471 = vld [vmem:[#allocation6 + $0x90] sm:$0xff]
          %v2472 = vld [vmem:[#allocation6 + $0x98] sm:$0xff]
          %v2473 = vld [vmem:[#allocation6 + $0xa0] sm:$0xff]
          %v2474 = vld [vmem:[#allocation6 + $0xa8] sm:$0xff]
          %v2475 = vld [vmem:[#allocation6 + $0xb0] sm:$0xff]
          %v2476 = vld [vmem:[#allocation6 + $0xb8] sm:$0xff]
          %v2477 = vld [vmem:[#allocation6 + $0xc0] sm:$0xff]
          %v2478 = vld [vmem:[#allocation6 + $0xc8] sm:$0xff]
          %v2479 = vld [vmem:[#allocation6 + $0xd0] sm:$0xff]
          %v2480 = vld [vmem:[#allocation6 + $0xd8] sm:$0xff]
          %v2481 = vld [vmem:[#allocation6 + $0xe0] sm:$0xff]
          %v2482 = vld [vmem:[#allocation6 + $0xe8] sm:$0xff]
          %v2483 = vld [vmem:[#allocation6 + $0xf0] sm:$0xff]
          %v2484 = vld [vmem:[#allocation6 + $0xf8] sm:$0xff]
          %v2485 = vld [vmem:[#allocation6 + $0x100] sm:$0xff]
          %v2486 = vld [vmem:[#allocation6 + $0x108] sm:$0xff]
          %v2487 = vld [vmem:[#allocation6 + $0x110] sm:$0xff]
          %v2488 = vld [vmem:[#allocation6 + $0x118] sm:$0xff]
          %v2489 = vld [vmem:[#allocation6 + $0x120] sm:$0xff]
          %v2490 = vld [vmem:[#allocation6 + $0x128] sm:$0xff]
          %v2491 = vld [vmem:[#allocation6 + $0x130] sm:$0xff]
          %v2492 = vld [vmem:[#allocation6 + $0x138] sm:$0xff]
          %v2493 = vld [vmem:[#allocation6 + $0x140] sm:$0xff]
          %v2494 = vld [vmem:[#allocation6 + $0x148] sm:$0xff]
          %v2495 = vld [vmem:[#allocation6 + $0x150] sm:$0xff]
          %v2496 = vld [vmem:[#allocation6 + $0x158] sm:$0xff]
          %v2497 = vld [vmem:[#allocation6 + $0x160] sm:$0xff]
          %v2498 = vld [vmem:[#allocation6 + $0x168] sm:$0xff]
          %v2499 = vld [vmem:[#allocation6 + $0x170] sm:$0xff]
          %v2500 = vld [vmem:[#allocation6 + $0x178] sm:$0xff]
          %v2501 = vld [vmem:[#allocation3] sm:$0xff]
          %v2502 = vld [vmem:[#allocation3 + $0x8] sm:$0xff]
          %v2503 = vld [vmem:[#allocation3 + $0x10] sm:$0xff]
          %v2504 = vld [vmem:[#allocation3 + $0x18] sm:$0xff]
          %v2505 = vld [vmem:[#allocation3 + $0x20] sm:$0xff]
          %v2506 = vld [vmem:[#allocation3 + $0x28] sm:$0xff]
          %v2507 = vld [vmem:[#allocation3 + $0x30] sm:$0xff]
          %v2508 = vld [vmem:[#allocation3 + $0x38] sm:$0xff]
          %v2509 = vld [vmem:[#allocation3 + $0x40] sm:$0xff]
          %v2510 = vld [vmem:[#allocation3 + $0x48] sm:$0xff]
          %v2511 = vld [vmem:[#allocation3 + $0x50] sm:$0xff]
          %v2512 = vld [vmem:[#allocation3 + $0x58] sm:$0xff]
          %v2513 = vld [vmem:[#allocation3 + $0x60] sm:$0xff]
          %v2514 = vld [vmem:[#allocation3 + $0x68] sm:$0xff]
          %v2515 = vld [vmem:[#allocation3 + $0x70] sm:$0xff]
          %v2516 = vld [vmem:[#allocation3 + $0x78] sm:$0xff]
          %v2517 = vsub.f32 %v2453, %v2501
          %v2518 = vsub.f32 %v2454, %v2502
          %v2519 = vsub.f32 %v2455, %v2503
          %v2520 = vsub.f32 %v2456, %v2504
          %v2521 = vsub.f32 %v2457, %v2505
          %v2522 = vsub.f32 %v2458, %v2506
          %v2523 = vsub.f32 %v2459, %v2507
          %v2524 = vsub.f32 %v2460, %v2508
          %v2525 = vsub.f32 %v2461, %v2509
          %v2526 = vsub.f32 %v2462, %v2510
          %v2527 = vsub.f32 %v2463, %v2511
          %v2528 = vsub.f32 %v2464, %v2512
          %v2529 = vsub.f32 %v2465, %v2513
          %v2530 = vsub.f32 %v2466, %v2514
          %v2531 = vsub.f32 %v2467, %v2515
          %v2532 = vsub.f32 %v2468, %v2516
          %v2533 = vsub.f32 %v2469, %v2501
          %v2534 = vsub.f32 %v2470, %v2502
          %v2535 = vsub.f32 %v2471, %v2503
          %v2536 = vsub.f32 %v2472, %v2504
          %v2537 = vsub.f32 %v2473, %v2505
          %v2538 = vsub.f32 %v2474, %v2506
          %v2539 = vsub.f32 %v2475, %v2507
          %v2540 = vsub.f32 %v2476, %v2508
          %v2541 = vsub.f32 %v2477, %v2509
          %v2542 = vsub.f32 %v2478, %v2510
          %v2543 = vsub.f32 %v2479, %v2511
          %v2544 = vsub.f32 %v2480, %v2512
          %v2545 = vsub.f32 %v2481, %v2513
          %v2546 = vsub.f32 %v2482, %v2514
          %v2547 = vsub.f32 %v2483, %v2515
          %v2548 = vsub.f32 %v2484, %v2516
          %v2549 = vsub.f32 %v2485, %v2501
          %v2550 = vsub.f32 %v2486, %v2502
          %v2551 = vsub.f32 %v2487, %v2503
          %v2552 = vsub.f32 %v2488, %v2504
          %v2553 = vsub.f32 %v2489, %v2505
          %v2554 = vsub.f32 %v2490, %v2506
          %v2555 = vsub.f32 %v2491, %v2507
          %v2556 = vsub.f32 %v2492, %v2508
          %v2557 = vsub.f32 %v2493, %v2509
          %v2558 = vsub.f32 %v2494, %v2510
          %v2559 = vsub.f32 %v2495, %v2511
          %v2560 = vsub.f32 %v2496, %v2512
          %v2561 = vsub.f32 %v2497, %v2513
          %v2562 = vsub.f32 %v2498, %v2514
          %v2563 = vsub.f32 %v2499, %v2515
          %v2564 = vsub.f32 %v2500, %v2516
          %v2565 = vmul.f32 %v2517, 1.442695
          %v2566 = vpow.pop %v2565
          %v2567 = vmul.f32 %v2518, 1.442695
          %v2568 = vpow.pop %v2567
          %v2569 = vmul.f32 %v2519, 1.442695
          %v2570 = vpow.pop %v2569
          %v2571 = vmul.f32 %v2520, 1.442695
          %v2572 = vpow.pop %v2571
          %v2573 = vmul.f32 %v2521, 1.442695
          %v2574 = vpow.pop %v2573
          %v2575 = vmul.f32 %v2522, 1.442695
          %v2576 = vpow.pop %v2575
          %v2577 = vmul.f32 %v2523, 1.442695
          %v2578 = vpow.pop %v2577
          %v2579 = vmul.f32 %v2524, 1.442695
          %v2580 = vpow.pop %v2579
          %v2581 = vmul.f32 %v2525, 1.442695
          %v2582 = vpow.pop %v2581
          %v2583 = vmul.f32 %v2526, 1.442695
          %v2584 = vpow.pop %v2583
          %v2585 = vmul.f32 %v2527, 1.442695
          %v2586 = vpow.pop %v2585
          %v2587 = vmul.f32 %v2528, 1.442695
          %v2588 = vpow.pop %v2587
          %v2589 = vmul.f32 %v2529, 1.442695
          %v2590 = vpow.pop %v2589
          %v2591 = vmul.f32 %v2530, 1.442695
          %v2592 = vpow.pop %v2591
          %v2593 = vmul.f32 %v2531, 1.442695
          %v2594 = vpow.pop %v2593
          %v2595 = vmul.f32 %v2532, 1.442695
          %v2596 = vpow.pop %v2595
          %v2597 = vmul.f32 %v2533, 1.442695
          %v2598 = vpow.pop %v2597
          %v2599 = vmul.f32 %v2534, 1.442695
          %v2600 = vpow.pop %v2599
          %v2601 = vmul.f32 %v2535, 1.442695
          %v2602 = vpow.pop %v2601
          %v2603 = vmul.f32 %v2536, 1.442695
          %v2604 = vpow.pop %v2603
          %v2605 = vmul.f32 %v2537, 1.442695
          %v2606 = vpow.pop %v2605
          %v2607 = vmul.f32 %v2538, 1.442695
          %v2608 = vpow.pop %v2607
          %v2609 = vmul.f32 %v2539, 1.442695
          %v2610 = vpow.pop %v2609
          %v2611 = vmul.f32 %v2540, 1.442695
          %v2612 = vpow.pop %v2611
          %v2613 = vmul.f32 %v2541, 1.442695
          %v2614 = vpow.pop %v2613
          %v2615 = vmul.f32 %v2542, 1.442695
          %v2616 = vpow.pop %v2615
          %v2617 = vmul.f32 %v2543, 1.442695
          %v2618 = vpow.pop %v2617
          %v2619 = vmul.f32 %v2544, 1.442695
          %v2620 = vpow.pop %v2619
          %v2621 = vmul.f32 %v2545, 1.442695
          %v2622 = vpow.pop %v2621
          %v2623 = vmul.f32 %v2546, 1.442695
          %v2624 = vpow.pop %v2623
          %v2625 = vmul.f32 %v2547, 1.442695
          %v2626 = vpow.pop %v2625
          %v2627 = vmul.f32 %v2548, 1.442695
          %v2628 = vpow.pop %v2627
          %v2629 = vmul.f32 %v2549, 1.442695
          %v2630 = vpow.pop %v2629
          %v2631 = vmul.f32 %v2550, 1.442695
          %v2632 = vpow.pop %v2631
          %v2633 = vmul.f32 %v2551, 1.442695
          %v2634 = vpow.pop %v2633
          %v2635 = vmul.f32 %v2552, 1.442695
          %v2636 = vpow.pop %v2635
          %v2637 = vmul.f32 %v2553, 1.442695
          %v2638 = vpow.pop %v2637
          %v2639 = vmul.f32 %v2554, 1.442695
          %v2640 = vpow.pop %v2639
          %v2641 = vmul.f32 %v2555, 1.442695
          %v2642 = vpow.pop %v2641
          %v2643 = vmul.f32 %v2556, 1.442695
          %v2644 = vpow.pop %v2643
          %v2645 = vmul.f32 %v2557, 1.442695
          %v2646 = vpow.pop %v2645
          %v2647 = vmul.f32 %v2558, 1.442695
          %v2648 = vpow.pop %v2647
          %v2649 = vmul.f32 %v2559, 1.442695
          %v2650 = vpow.pop %v2649
          %v2651 = vmul.f32 %v2560, 1.442695
          %v2652 = vpow.pop %v2651
          %v2653 = vmul.f32 %v2561, 1.442695
          %v2654 = vpow.pop %v2653
          %v2655 = vmul.f32 %v2562, 1.442695
          %v2656 = vpow.pop %v2655
          %v2657 = vmul.f32 %v2563, 1.442695
          %v2658 = vpow.pop %v2657
          %v2659 = vmul.f32 %v2564, 1.442695
          %v2660 = vpow.pop %v2659
          %v2661 = vmul.f32 %v2566, %v2099
          %v2662 = vmul.f32 %v2568, %v2114
          %v2663 = vmul.f32 %v2570, %v2129
          %v2664 = vmul.f32 %v2572, %v2144
          %v2665 = vmul.f32 %v2574, %v2159
          %v2666 = vmul.f32 %v2576, %v2174
          %v2667 = vmul.f32 %v2578, %v2189
          %v2668 = vmul.f32 %v2580, %v2204
          %v2669 = vmul.f32 %v2582, %v2219
          %v2670 = vmul.f32 %v2584, %v2234
          %v2671 = vmul.f32 %v2586, %v2249
          %v2672 = vmul.f32 %v2588, %v2264
          %v2673 = vmul.f32 %v2590, %v2279
          %v2674 = vmul.f32 %v2592, %v2294
          %v2675 = vmul.f32 %v2594, %v2309
          %v2676 = vmul.f32 %v2596, %v2324
          %v2677 = vmul.f32 %v2598, %v2099
          %v2678 = vmul.f32 %v2600, %v2114
          %v2679 = vmul.f32 %v2602, %v2129
          %v2680 = vmul.f32 %v2604, %v2144
          %v2681 = vmul.f32 %v2606, %v2159
          %v2682 = vmul.f32 %v2608, %v2174
          %v2683 = vmul.f32 %v2610, %v2189
          %v2684 = vmul.f32 %v2612, %v2204
          %v2685 = vmul.f32 %v2614, %v2219
          %v2686 = vmul.f32 %v2616, %v2234
          %v2687 = vmul.f32 %v2618, %v2249
          %v2688 = vmul.f32 %v2620, %v2264
          %v2689 = vmul.f32 %v2622, %v2279
          %v2690 = vmul.f32 %v2624, %v2294
          %v2691 = vmul.f32 %v2626, %v2309
          %v2692 = vmul.f32 %v2628, %v2324
          %v2693 = vmul.f32 %v2630, %v2099
          %v2694 = vmul.f32 %v2632, %v2114
          %v2695 = vmul.f32 %v2634, %v2129
          %v2696 = vmul.f32 %v2636, %v2144
          %v2697 = vmul.f32 %v2638, %v2159
          %v2698 = vmul.f32 %v2640, %v2174
          %v2699 = vmul.f32 %v2642, %v2189
          %v2700 = vmul.f32 %v2644, %v2204
          %v2701 = vmul.f32 %v2646, %v2219
          %v2702 = vmul.f32 %v2648, %v2234
          %v2703 = vmul.f32 %v2650, %v2249
          %v2704 = vmul.f32 %v2652, %v2264
          %v2705 = vmul.f32 %v2654, %v2279
          %v2706 = vmul.f32 %v2656, %v2294
          %v2707 = vmul.f32 %v2658, %v2309
          %v2708 = vmul.f32 %v2660, %v2324
          %vm2709 = vcmask 7168
          %2710 = vst.msk [vmem:[%s360] sm:$0xff] %vm2709, %v2661
          %2711 = vst.msk [vmem:[%s360 + $0x8] sm:$0xff] %vm2709, %v2662
          %2712 = vst.msk [vmem:[%s360 + $0x10] sm:$0xff] %vm2709, %v2663
          %2713 = vst.msk [vmem:[%s360 + $0x18] sm:$0xff] %vm2709, %v2664
          %2714 = vst.msk [vmem:[%s360 + $0x20] sm:$0xff] %vm2709, %v2665
          %2715 = vst.msk [vmem:[%s360 + $0x28] sm:$0xff] %vm2709, %v2666
          %2716 = vst.msk [vmem:[%s360 + $0x30] sm:$0xff] %vm2709, %v2667
          %2717 = vst.msk [vmem:[%s360 + $0x38] sm:$0xff] %vm2709, %v2668
          %2718 = vst.msk [vmem:[%s360 + $0x40] sm:$0xff] %vm2709, %v2669
          %2719 = vst.msk [vmem:[%s360 + $0x48] sm:$0xff] %vm2709, %v2670
          %2720 = vst.msk [vmem:[%s360 + $0x50] sm:$0xff] %vm2709, %v2671
          %2721 = vst.msk [vmem:[%s360 + $0x58] sm:$0xff] %vm2709, %v2672
          %2722 = vst.msk [vmem:[%s360 + $0x60] sm:$0xff] %vm2709, %v2673
          %2723 = vst.msk [vmem:[%s360 + $0x68] sm:$0xff] %vm2709, %v2674
          %2724 = vst.msk [vmem:[%s360 + $0x70] sm:$0xff] %vm2709, %v2675
          %2725 = vst.msk [vmem:[%s360 + $0x78] sm:$0xff] %vm2709, %v2676
          %2726 = vst.msk [vmem:[%s360 + $0x80] sm:$0xff] %vm2709, %v2677
          %2727 = vst.msk [vmem:[%s360 + $0x88] sm:$0xff] %vm2709, %v2678
          %2728 = vst.msk [vmem:[%s360 + $0x90] sm:$0xff] %vm2709, %v2679
          %2729 = vst.msk [vmem:[%s360 + $0x98] sm:$0xff] %vm2709, %v2680
          %2730 = vst.msk [vmem:[%s360 + $0xa0] sm:$0xff] %vm2709, %v2681
          %2731 = vst.msk [vmem:[%s360 + $0xa8] sm:$0xff] %vm2709, %v2682
          %2732 = vst.msk [vmem:[%s360 + $0xb0] sm:$0xff] %vm2709, %v2683
          %2733 = vst.msk [vmem:[%s360 + $0xb8] sm:$0xff] %vm2709, %v2684
          %2734 = vst.msk [vmem:[%s360 + $0xc0] sm:$0xff] %vm2709, %v2685
          %2735 = vst.msk [vmem:[%s360 + $0xc8] sm:$0xff] %vm2709, %v2686
          %2736 = vst.msk [vmem:[%s360 + $0xd0] sm:$0xff] %vm2709, %v2687
          %2737 = vst.msk [vmem:[%s360 + $0xd8] sm:$0xff] %vm2709, %v2688
          %2738 = vst.msk [vmem:[%s360 + $0xe0] sm:$0xff] %vm2709, %v2689
          %2739 = vst.msk [vmem:[%s360 + $0xe8] sm:$0xff] %vm2709, %v2690
          %2740 = vst.msk [vmem:[%s360 + $0xf0] sm:$0xff] %vm2709, %v2691
          %2741 = vst.msk [vmem:[%s360 + $0xf8] sm:$0xff] %vm2709, %v2692
          %2742 = vst.msk [vmem:[%s360 + $0x100] sm:$0xff] %vm2709, %v2693
          %2743 = vst.msk [vmem:[%s360 + $0x108] sm:$0xff] %vm2709, %v2694
          %2744 = vst.msk [vmem:[%s360 + $0x110] sm:$0xff] %vm2709, %v2695
          %2745 = vst.msk [vmem:[%s360 + $0x118] sm:$0xff] %vm2709, %v2696
          %2746 = vst.msk [vmem:[%s360 + $0x120] sm:$0xff] %vm2709, %v2697
          %2747 = vst.msk [vmem:[%s360 + $0x128] sm:$0xff] %vm2709, %v2698
          %2748 = vst.msk [vmem:[%s360 + $0x130] sm:$0xff] %vm2709, %v2699
          %2749 = vst.msk [vmem:[%s360 + $0x138] sm:$0xff] %vm2709, %v2700
          %2750 = vst.msk [vmem:[%s360 + $0x140] sm:$0xff] %vm2709, %v2701
          %2751 = vst.msk [vmem:[%s360 + $0x148] sm:$0xff] %vm2709, %v2702
          %2752 = vst.msk [vmem:[%s360 + $0x150] sm:$0xff] %vm2709, %v2703
          %2753 = vst.msk [vmem:[%s360 + $0x158] sm:$0xff] %vm2709, %v2704
          %2754 = vst.msk [vmem:[%s360 + $0x160] sm:$0xff] %vm2709, %v2705
          %2755 = vst.msk [vmem:[%s360 + $0x168] sm:$0xff] %vm2709, %v2706
          %2756 = vst.msk [vmem:[%s360 + $0x170] sm:$0xff] %vm2709, %v2707
          %2757 = vst.msk [vmem:[%s360 + $0x178] sm:$0xff] %vm2709, %v2708
        $region64: #{hetero_graph_conv.1} parent=47 // pred_fallthru
          _
        %s2758 = smul.u32 16, %s40
        %p2759 = scmp.lt.s32.totalorder %s2758, 15
        %s2760 = scalar_select %p2759, %s2758, 15
        %s2761 = smul.addr %s2760, 8
        %s2762 = scalar_lea.vmem %s10, %s2761
        // Predicated region
        $region65: #{hetero_graph_conv.1} parent=47 // pred_check
          %p2763 = pneg %p222
        $region66: #{hetero_graph_conv.1} parent=47 // pred_check_branch
          %2765 = sbr.rel (%p2763) target = $region68
        $region67: #{hetero_graph_conv.1} parent=47 // pred_region
          %s2766 = smul.u32 16, %s40
          %2768 = vsyncadd [#allocation11], 0
          %s2769 = smul.addr %s2766, 8
          %s2770 = scalar_lea.hbm %s9, %s2769
          %s2771 = sshll.u32 [#allocation10], 4
          %s2772 = int_to_ptr.vmem [resolvable:$true] %s2771
          %s2773 = sshll.u32 %s2770, 4
          %s2774 = int_to_ptr.hbm [resolvable:$true] %s2773
          %2779 = dma.vmem_to_hbm [thread:$0]  %s2772, 2048, %s2774, [#allocation11], 128, 128, 8
        $region68: #{hetero_graph_conv.1} parent=47 // pred_fallthru
          _
        // Predicated region
        $region69: #{hetero_graph_conv.1} parent=47 // pred_check
          %p2780 = pneg %p248
        $region70: #{hetero_graph_conv.1} parent=47 // pred_check_branch
          %2782 = sbr.rel (%p2780) target = $region72
        $region71: #{hetero_graph_conv.1} parent=47 // pred_region
          %s2783 = smul.u32 16, %s40
        $region72: #{hetero_graph_conv.1} parent=47 // pred_fallthru
          _
        // Predicated region
        $region73: #{hetero_graph_conv.1} parent=47 // pred_check
          %p2784 = pneg %p222
        $region74: #{hetero_graph_conv.1} parent=47 // pred_check_branch
          %2786 = sbr.rel (%p2784) target = $region76
        $region75: #{hetero_graph_conv.1} parent=47 // pred_region
          %2788 = dma.done [#allocation11], 2048
        $region76: #{hetero_graph_conv.1} parent=47 // pred_fallthru
          _
        // Predicated region
        $region77: #{hetero_graph_conv.1} parent=47 // pred_check
          %p2789 = pneg %p248
        $region78: #{hetero_graph_conv.1} parent=47 // pred_check_branch
          %2791 = sbr.rel (%p2789) target = $region80
        $region79: #{hetero_graph_conv.1} parent=47 // pred_region
          %s2792 = smul.u32 16, %s40
          %p2793 = scmp.lt.s32.totalorder %s2792, 15
          %s2794 = scalar_select %p2793, %s2792, 15
          %s2795 = smul.addr %s2794, 8
          %s2796 = scalar_lea.vmem %s10, %s2795
        $region80: #{hetero_graph_conv.1} parent=47 // pred_fallthru
          _
      $region48: #{hetero_graph_conv.1} parent=5 // pred_fallthru
        _
      %p2797 = scmp.le.s32.totalorder 2, %s31
      // Predicated region
      $region81: #{hetero_graph_conv.1} parent=5 // pred_check
        %p2798 = pneg %p2797
      $region82: #{hetero_graph_conv.1} parent=5 // pred_check_branch
        %2800 = sbr.rel (%p2798) target = $region84
      $region83: #{hetero_graph_conv.1} parent=5 // pred_region
        %s2801 = ssub.s32 %s31, 2
      $region84: #{hetero_graph_conv.1} parent=5 // pred_fallthru
        _
    $region6: #{hetero_graph_conv.1} parent=1 // loop_footer
      %s35 = sadd.s32 1, %s31
    $region7: #{hetero_graph_conv.1} parent=1 // loop_footer_branch
      %30 = sbr.rel target = $region3
    $region8: #{hetero_graph_conv.1} parent=1 // loop_exit
      _
    %2802 = vsyncpa [#allocation11], 1
    %s2803 = scalar_lea.sflag [#allocation11], 1
    %2804 = vsyncpa %s2803, 1

</llo_original>
